<compile_context>
chip_gen: v6e
topology: v6e:2x2x1
jax: 0.10.0
libtpu: 0.0.40
codegen_flags: <defaults>
</compile_context>

<pallas_src>
import jax
import jax.numpy as jnp
from jax.experimental import pallas as pl
from jax.experimental.pallas import tpu as pltpu

N_CLASSES = 20
N_PAD = 128          # lane-dense output width


def cnn_kernel(x_ref, w1_ref, b1_ref, w2_ref, b2_ref,
               wf1_ref, bf1_ref, wf2_ref, bf2_ref, out_ref):
    x = x_ref[...]            # (TB, L)
    w1 = w1_ref[...]          # (3, 32)        conv1 weight (k, out), in_ch=1 squeezed
    b1 = b1_ref[...]          # (1, 32)
    w2 = w2_ref[...]          # (96, 64)       conv2 weight, im2col layout (k*in, out)
    b2 = b2_ref[...]          # (1, 64)
    wf1 = wf1_ref[...]        # (64, 128)      fc1 weight transposed (in, out)
    bf1 = bf1_ref[...]        # (1, 128)
    wf2 = wf2_ref[...]        # (128, 128)     fc2 weight transposed, zero-padded cols
    bf2 = bf2_ref[...]        # (1, 128)       fc2 bias, -1e30 in padded cols

    TB, L = x.shape
    K = 3
    L1 = L - K + 1            # conv1 output length
    P1 = L1 // 2              # pool1 output length
    L2 = P1 - K + 1           # conv2 output length
    P2 = L2 // 2              # pool2 output length (== 1 for this model)

    # ---- conv1 + relu: pure VPU, fully unrolled over the (tiny, static) time axis
    # w1 row views hoisted once (JAX does not CSE broadcast_in_dim).
    w1k = [w1[k:k + 1, :] for k in range(K)]            # each (1, 32)
    h1 = []
    for t in range(L1):
        a = x[:, t:t + 1] * w1k[0] + b1                 # fold bias into the k=0 term
        a = a + x[:, t + 1:t + 2] * w1k[1]
        a = a + x[:, t + 2:t + 3] * w1k[2]
        h1.append(jnp.maximum(a, 0.0))                  # (TB, 32)

    # ---- maxpool1 (k=2, s=2): pairwise max of existing tiles (no reshape/retile)
    p1 = [jnp.maximum(h1[2 * j], h1[2 * j + 1]) for j in range(P1)]

    # ---- conv2 + relu: single fused im2col matmul over all output positions ----
    cols = jnp.concatenate(
        [jnp.concatenate([p1[t + k] for k in range(K)], axis=1)   # (TB, 96)
         for t in range(L2)],
        axis=0)                                                   # (L2*TB, 96)
    zc = jnp.dot(cols, w2, preferred_element_type=jnp.float32)    # (L2*TB, 64)
    h2 = [jnp.maximum(zc[t * TB:(t + 1) * TB, :] + b2, 0.0) for t in range(L2)]

    # ---- maxpool2 (k=2, s=2) ----
    p2 = [jnp.maximum(h2[2 * j], h2[2 * j + 1]) for j in range(P2)]

    # ---- flatten: P2 == 1 for every L this model supports (fc1 expects 64 inputs),
    # so (TB, 64) matches torch's channel-major flatten of (B, 64, 1) exactly.
    flat = p2[0]                                                  # (TB, 64)

    # ---- fc1 + relu ----
    z1 = jnp.dot(flat, wf1, preferred_element_type=jnp.float32) + bf1
    z1 = jnp.maximum(z1, 0.0)                                     # (TB, 128)

    # ---- fc2 (lane-dense, 128 padded classes) + log_softmax ----
    z2 = jnp.dot(z1, wf2, preferred_element_type=jnp.float32) + bf2   # (TB, 128)
    m = jnp.max(z2, axis=1, keepdims=True)
    s = z2 - m
    lse = jnp.log(jnp.sum(jnp.exp(s), axis=1, keepdims=True))
    out_ref[...] = s - lse


def cnn_forward(x, params, *, tb=256):
    B, L = x.shape

    # Batch tile: multiple of 8 sublanes; pad B up to a whole number of tiles.
    TB = tb if B >= tb else ((B + 7) // 8) * 8
    Bp = pl.cdiv(B, TB) * TB
    if Bp != B:
        x = jnp.pad(x, ((0, Bp - B), (0, 0)))
    grid = (Bp // TB,)

    # Weight repacking (pure layout, done once in the wrapper):
    #   conv2 (k, in, out) -> im2col (k*in, out); fc2 padded to 128 lane-dense
    #   outputs with -1e30 bias on the padded classes so log_softmax is unchanged.
    w2 = params["w2"].reshape(3 * 32, 64)
    wf2 = jnp.zeros((128, N_PAD), jnp.float32).at[:, :N_CLASSES].set(params["wf2"])
    bf2 = jnp.full((1, N_PAD), -1e30, jnp.float32).at[:, :N_CLASSES].set(params["bf2"])

    def resident(shape):
        return pl.BlockSpec(shape, lambda i: (0, 0))

    out = pl.pallas_call(
        cnn_kernel,
        out_shape=jax.ShapeDtypeStruct((Bp, N_PAD), jnp.float32),
        grid_spec=pltpu.PrefetchScalarGridSpec(
            num_scalar_prefetch=0,
            grid=grid,
            in_specs=[
                pl.BlockSpec((TB, L), lambda i: (i, 0)),   # x: batch-tiled
                resident((3, 32)),                         # conv1 w
                resident((1, 32)),                         # conv1 b
                resident((96, 64)),                        # conv2 w (im2col)
                resident((1, 64)),                         # conv2 b
                resident((64, 128)),                       # fc1 w
                resident((1, 128)),                        # fc1 b
                resident((128, N_PAD)),                    # fc2 w (lane-padded)
                resident((1, N_PAD)),                      # fc2 b (lane-padded)
            ],
            out_specs=pl.BlockSpec((TB, N_PAD), lambda i: (i, 0)),
        ),
        compiler_params=pltpu.CompilerParams(
            dimension_semantics=("parallel",)),
    )(x, params["w1"], params["b1"], w2, params["b2"],
      params["wf1"], params["bf1"], wf2, bf2)

    return out[:B, :N_CLASSES]


def cnn_reference(x, params):
    """Pure-JAX reference matching the PyTorch forward (for correctness check)."""
    B, L = x.shape
    K = 3
    w1, b1 = params["w1"], params["b1"][0]
    L1 = L - K + 1
    h1 = jnp.zeros((B, L1, 32), jnp.float32)
    for k in range(K):
        h1 = h1 + x[:, k:k + L1, None] * w1[k][None, None, :]
    h1 = jax.nn.relu(h1 + b1)
    P1 = L1 // 2
    h1p = jnp.max(h1[:, :2 * P1].reshape(B, P1, 2, 32), axis=2)

    w2, b2 = params["w2"], params["b2"][0]
    L2 = P1 - K + 1
    h2 = jnp.zeros((B, L2, 64), jnp.float32)
    for k in range(K):
        h2 = h2 + jnp.einsum("btc,cd->btd", h1p[:, k:k + L2], w2[k])
    h2 = jax.nn.relu(h2 + b2)
    P2 = L2 // 2
    h2p = jnp.max(h2[:, :2 * P2].reshape(B, P2, 2, 64), axis=2)

    flat = jnp.transpose(h2p, (0, 2, 1)).reshape(B, -1)      # torch channel-major flatten
    z1 = jax.nn.relu(flat @ params["wf1"] + params["bf1"][0])
    z2 = z1 @ params["wf2"] + params["bf2"][0]
    return jax.nn.log_softmax(z2, axis=1)


def init_params(key):
    # Deterministic synthetic init (shapes match the nn.Module), already permuted
    # into the kernel's layouts (see layout comment above).
    ks = jax.random.split(key, 8)
    scale = 0.1
    return {
        # conv1: torch weight (32, 1, 3) -> (k=3, out=32)
        "w1": scale * jax.random.normal(ks[0], (3, 32), jnp.float32),
        "b1": scale * jax.random.normal(ks[1], (1, 32), jnp.float32),
        # conv2: torch weight (64, 32, 3) -> (k=3, in=32, out=64)
        "w2": scale * jax.random.normal(ks[2], (3, 32, 64), jnp.float32),
        "b2": scale * jax.random.normal(ks[3], (1, 64), jnp.float32),
        # fc1: torch weight (128, 64) -> (in=64, out=128)
        "wf1": scale * jax.random.normal(ks[4], (64, 128), jnp.float32),
        "bf1": scale * jax.random.normal(ks[5], (1, 128), jnp.float32),
        # fc2: torch weight (20, 128) -> (in=128, out=20)
        "wf2": scale * jax.random.normal(ks[6], (128, 20), jnp.float32),
        "bf2": scale * jax.random.normal(ks[7], (1, 20), jnp.float32),
    }


if __name__ == "__main__":
    key = jax.random.PRNGKey(0)
    k_x, k_p = jax.random.split(key)

    # L=10 so the feature length collapses to 1 after the two conv+pool stages,
    # matching nn.Linear(64, 128): ((10-2)//2 - 2)//2 = 1.
    # B=500 is deliberately not a tile multiple to exercise the padding path;
    # TB=128 gives a 4-step batch grid (pipelined, "parallel" for v7x megacore).
    B, L = 500, 10
    x = jax.random.normal(k_x, (B, L), jnp.float32)
    params = init_params(k_p)

    out = jax.block_until_ready(cnn_forward(x, params, tb=128))

    assert out.shape == (B, N_CLASSES), out.shape
    assert bool(jnp.all(jnp.isfinite(out)))
    # log_softmax rows should exponentiate-and-sum to 1 (padded lanes contribute 0).
    assert bool(jnp.allclose(jnp.sum(jnp.exp(out), axis=1), 1.0, atol=1e-4))
    # Match the pure-JAX reference of the PyTorch forward.
    ref = cnn_reference(x, params)
    assert bool(jnp.allclose(out, ref, atol=1e-4, rtol=1e-4)), float(
        jnp.max(jnp.abs(out - ref)))
    print("KERNEL_OK")
</pallas_src>

<mosaic_0001>
module attributes {stable_mosaic.version = 11 : i64} {
  func.func @cnn_kernel(%arg0: i32, %arg1: memref<128x10xf32, #tpu.memory_space<vmem>>, %arg2: memref<3x32xf32, #tpu.memory_space<vmem>>, %arg3: memref<1x32xf32, #tpu.memory_space<vmem>>, %arg4: memref<96x64xf32, #tpu.memory_space<vmem>>, %arg5: memref<1x64xf32, #tpu.memory_space<vmem>>, %arg6: memref<64x128xf32, #tpu.memory_space<vmem>>, %arg7: memref<1x128xf32, #tpu.memory_space<vmem>>, %arg8: memref<128x128xf32, #tpu.memory_space<vmem>>, %arg9: memref<1x128xf32, #tpu.memory_space<vmem>>, %arg10: memref<128x128xf32, #tpu.memory_space<vmem>>) attributes {dimension_semantics = [#tpu.dimension_semantics<parallel>], iteration_bounds = array<i64: 4>, scalar_prefetch = 0 : i64, scratch_operands = 0 : i64, tpu.core_type = #tpu.core_type<tc>, window_params = [{transform_indices = @transform_0, window_bounds = array<i64: 128, 10>}, {pipeline_mode = #tpu.pipeline_mode<synchronous>, transform_indices = @transform_1, window_bounds = array<i64: 3, 32>}, {pipeline_mode = #tpu.pipeline_mode<synchronous>, transform_indices = @transform_2, window_bounds = array<i64: 1, 32>}, {pipeline_mode = #tpu.pipeline_mode<synchronous>, transform_indices = @transform_3, window_bounds = array<i64: 96, 64>}, {pipeline_mode = #tpu.pipeline_mode<synchronous>, transform_indices = @transform_4, window_bounds = array<i64: 1, 64>}, {pipeline_mode = #tpu.pipeline_mode<synchronous>, transform_indices = @transform_5, window_bounds = array<i64: 64, 128>}, {pipeline_mode = #tpu.pipeline_mode<synchronous>, transform_indices = @transform_6, window_bounds = array<i64: 1, 128>}, {pipeline_mode = #tpu.pipeline_mode<synchronous>, transform_indices = @transform_7, window_bounds = array<i64: 128, 128>}, {pipeline_mode = #tpu.pipeline_mode<synchronous>, transform_indices = @transform_8, window_bounds = array<i64: 1, 128>}, {transform_indices = @transform_9, window_bounds = array<i64: 128, 128>}]} {
    %c0 = arith.constant 0 : index
    %c0_0 = arith.constant 0 : index
    %0 = vector.load %arg1[%c0, %c0_0] : memref<128x10xf32, #tpu.memory_space<vmem>>, vector<128x10xf32>
    %c0_1 = arith.constant 0 : index
    %c0_2 = arith.constant 0 : index
    %1 = vector.load %arg2[%c0_1, %c0_2] : memref<3x32xf32, #tpu.memory_space<vmem>>, vector<3x32xf32>
    %c0_3 = arith.constant 0 : index
    %c0_4 = arith.constant 0 : index
    %2 = vector.load %arg3[%c0_3, %c0_4] : memref<1x32xf32, #tpu.memory_space<vmem>>, vector<1x32xf32>
    %c0_5 = arith.constant 0 : index
    %c0_6 = arith.constant 0 : index
    %3 = vector.load %arg4[%c0_5, %c0_6] : memref<96x64xf32, #tpu.memory_space<vmem>>, vector<96x64xf32>
    %c0_7 = arith.constant 0 : index
    %c0_8 = arith.constant 0 : index
    %4 = vector.load %arg5[%c0_7, %c0_8] : memref<1x64xf32, #tpu.memory_space<vmem>>, vector<1x64xf32>
    %c0_9 = arith.constant 0 : index
    %c0_10 = arith.constant 0 : index
    %5 = vector.load %arg6[%c0_9, %c0_10] : memref<64x128xf32, #tpu.memory_space<vmem>>, vector<64x128xf32>
    %c0_11 = arith.constant 0 : index
    %c0_12 = arith.constant 0 : index
    %6 = vector.load %arg7[%c0_11, %c0_12] : memref<1x128xf32, #tpu.memory_space<vmem>>, vector<1x128xf32>
    %c0_13 = arith.constant 0 : index
    %c0_14 = arith.constant 0 : index
    %7 = vector.load %arg8[%c0_13, %c0_14] : memref<128x128xf32, #tpu.memory_space<vmem>>, vector<128x128xf32>
    %c0_15 = arith.constant 0 : index
    %c0_16 = arith.constant 0 : index
    %8 = vector.load %arg9[%c0_15, %c0_16] : memref<1x128xf32, #tpu.memory_space<vmem>>, vector<1x128xf32>
    %9 = vector.extract_strided_slice %1 {offsets = [0, 0], sizes = [1, 32], strides = [1, 1]} : vector<3x32xf32> to vector<1x32xf32>
    %10 = vector.extract_strided_slice %1 {offsets = [1, 0], sizes = [1, 32], strides = [1, 1]} : vector<3x32xf32> to vector<1x32xf32>
    %11 = vector.extract_strided_slice %1 {offsets = [2, 0], sizes = [1, 32], strides = [1, 1]} : vector<3x32xf32> to vector<1x32xf32>
    %12 = vector.extract_strided_slice %0 {offsets = [0, 0], sizes = [128, 1], strides = [1, 1]} : vector<128x10xf32> to vector<128x1xf32>
    %13 = vector.broadcast %12 : vector<128x1xf32> to vector<128x32xf32>
    %14 = vector.broadcast %9 : vector<1x32xf32> to vector<128x32xf32>
    %15 = arith.mulf %13, %14 : vector<128x32xf32>
    %16 = vector.broadcast %2 : vector<1x32xf32> to vector<128x32xf32>
    %17 = arith.addf %15, %16 : vector<128x32xf32>
    %18 = vector.extract_strided_slice %0 {offsets = [0, 1], sizes = [128, 1], strides = [1, 1]} : vector<128x10xf32> to vector<128x1xf32>
    %19 = vector.broadcast %18 : vector<128x1xf32> to vector<128x32xf32>
    %20 = vector.broadcast %10 : vector<1x32xf32> to vector<128x32xf32>
    %21 = arith.mulf %19, %20 : vector<128x32xf32>
    %22 = arith.addf %17, %21 : vector<128x32xf32>
    %23 = vector.extract_strided_slice %0 {offsets = [0, 2], sizes = [128, 1], strides = [1, 1]} : vector<128x10xf32> to vector<128x1xf32>
    %24 = vector.broadcast %23 : vector<128x1xf32> to vector<128x32xf32>
    %25 = vector.broadcast %11 : vector<1x32xf32> to vector<128x32xf32>
    %26 = arith.mulf %24, %25 : vector<128x32xf32>
    %27 = arith.addf %22, %26 : vector<128x32xf32>
    %cst = arith.constant 0.000000e+00 : f32
    %28 = vector.broadcast %cst : f32 to vector<128x32xf32>
    %29 = arith.maximumf %27, %28 : vector<128x32xf32>
    %30 = vector.extract_strided_slice %0 {offsets = [0, 1], sizes = [128, 1], strides = [1, 1]} : vector<128x10xf32> to vector<128x1xf32>
    %31 = vector.broadcast %30 : vector<128x1xf32> to vector<128x32xf32>
    %32 = vector.broadcast %9 : vector<1x32xf32> to vector<128x32xf32>
    %33 = arith.mulf %31, %32 : vector<128x32xf32>
    %34 = vector.broadcast %2 : vector<1x32xf32> to vector<128x32xf32>
    %35 = arith.addf %33, %34 : vector<128x32xf32>
    %36 = vector.extract_strided_slice %0 {offsets = [0, 2], sizes = [128, 1], strides = [1, 1]} : vector<128x10xf32> to vector<128x1xf32>
    %37 = vector.broadcast %36 : vector<128x1xf32> to vector<128x32xf32>
    %38 = vector.broadcast %10 : vector<1x32xf32> to vector<128x32xf32>
    %39 = arith.mulf %37, %38 : vector<128x32xf32>
    %40 = arith.addf %35, %39 : vector<128x32xf32>
    %41 = vector.extract_strided_slice %0 {offsets = [0, 3], sizes = [128, 1], strides = [1, 1]} : vector<128x10xf32> to vector<128x1xf32>
    %42 = vector.broadcast %41 : vector<128x1xf32> to vector<128x32xf32>
    %43 = vector.broadcast %11 : vector<1x32xf32> to vector<128x32xf32>
    %44 = arith.mulf %42, %43 : vector<128x32xf32>
    %45 = arith.addf %40, %44 : vector<128x32xf32>
    %cst_17 = arith.constant 0.000000e+00 : f32
    %46 = vector.broadcast %cst_17 : f32 to vector<128x32xf32>
    %47 = arith.maximumf %45, %46 : vector<128x32xf32>
    %48 = vector.extract_strided_slice %0 {offsets = [0, 2], sizes = [128, 1], strides = [1, 1]} : vector<128x10xf32> to vector<128x1xf32>
    %49 = vector.broadcast %48 : vector<128x1xf32> to vector<128x32xf32>
    %50 = vector.broadcast %9 : vector<1x32xf32> to vector<128x32xf32>
    %51 = arith.mulf %49, %50 : vector<128x32xf32>
    %52 = vector.broadcast %2 : vector<1x32xf32> to vector<128x32xf32>
    %53 = arith.addf %51, %52 : vector<128x32xf32>
    %54 = vector.extract_strided_slice %0 {offsets = [0, 3], sizes = [128, 1], strides = [1, 1]} : vector<128x10xf32> to vector<128x1xf32>
    %55 = vector.broadcast %54 : vector<128x1xf32> to vector<128x32xf32>
    %56 = vector.broadcast %10 : vector<1x32xf32> to vector<128x32xf32>
    %57 = arith.mulf %55, %56 : vector<128x32xf32>
    %58 = arith.addf %53, %57 : vector<128x32xf32>
    %59 = vector.extract_strided_slice %0 {offsets = [0, 4], sizes = [128, 1], strides = [1, 1]} : vector<128x10xf32> to vector<128x1xf32>
    %60 = vector.broadcast %59 : vector<128x1xf32> to vector<128x32xf32>
    %61 = vector.broadcast %11 : vector<1x32xf32> to vector<128x32xf32>
    %62 = arith.mulf %60, %61 : vector<128x32xf32>
    %63 = arith.addf %58, %62 : vector<128x32xf32>
    %cst_18 = arith.constant 0.000000e+00 : f32
    %64 = vector.broadcast %cst_18 : f32 to vector<128x32xf32>
    %65 = arith.maximumf %63, %64 : vector<128x32xf32>
    %66 = vector.extract_strided_slice %0 {offsets = [0, 3], sizes = [128, 1], strides = [1, 1]} : vector<128x10xf32> to vector<128x1xf32>
    %67 = vector.broadcast %66 : vector<128x1xf32> to vector<128x32xf32>
    %68 = vector.broadcast %9 : vector<1x32xf32> to vector<128x32xf32>
    %69 = arith.mulf %67, %68 : vector<128x32xf32>
    %70 = vector.broadcast %2 : vector<1x32xf32> to vector<128x32xf32>
    %71 = arith.addf %69, %70 : vector<128x32xf32>
    %72 = vector.extract_strided_slice %0 {offsets = [0, 4], sizes = [128, 1], strides = [1, 1]} : vector<128x10xf32> to vector<128x1xf32>
    %73 = vector.broadcast %72 : vector<128x1xf32> to vector<128x32xf32>
    %74 = vector.broadcast %10 : vector<1x32xf32> to vector<128x32xf32>
    %75 = arith.mulf %73, %74 : vector<128x32xf32>
    %76 = arith.addf %71, %75 : vector<128x32xf32>
    %77 = vector.extract_strided_slice %0 {offsets = [0, 5], sizes = [128, 1], strides = [1, 1]} : vector<128x10xf32> to vector<128x1xf32>
    %78 = vector.broadcast %77 : vector<128x1xf32> to vector<128x32xf32>
    %79 = vector.broadcast %11 : vector<1x32xf32> to vector<128x32xf32>
    %80 = arith.mulf %78, %79 : vector<128x32xf32>
    %81 = arith.addf %76, %80 : vector<128x32xf32>
    %cst_19 = arith.constant 0.000000e+00 : f32
    %82 = vector.broadcast %cst_19 : f32 to vector<128x32xf32>
    %83 = arith.maximumf %81, %82 : vector<128x32xf32>
    %84 = vector.extract_strided_slice %0 {offsets = [0, 4], sizes = [128, 1], strides = [1, 1]} : vector<128x10xf32> to vector<128x1xf32>
    %85 = vector.broadcast %84 : vector<128x1xf32> to vector<128x32xf32>
    %86 = vector.broadcast %9 : vector<1x32xf32> to vector<128x32xf32>
    %87 = arith.mulf %85, %86 : vector<128x32xf32>
    %88 = vector.broadcast %2 : vector<1x32xf32> to vector<128x32xf32>
    %89 = arith.addf %87, %88 : vector<128x32xf32>
    %90 = vector.extract_strided_slice %0 {offsets = [0, 5], sizes = [128, 1], strides = [1, 1]} : vector<128x10xf32> to vector<128x1xf32>
    %91 = vector.broadcast %90 : vector<128x1xf32> to vector<128x32xf32>
    %92 = vector.broadcast %10 : vector<1x32xf32> to vector<128x32xf32>
    %93 = arith.mulf %91, %92 : vector<128x32xf32>
    %94 = arith.addf %89, %93 : vector<128x32xf32>
    %95 = vector.extract_strided_slice %0 {offsets = [0, 6], sizes = [128, 1], strides = [1, 1]} : vector<128x10xf32> to vector<128x1xf32>
    %96 = vector.broadcast %95 : vector<128x1xf32> to vector<128x32xf32>
    %97 = vector.broadcast %11 : vector<1x32xf32> to vector<128x32xf32>
    %98 = arith.mulf %96, %97 : vector<128x32xf32>
    %99 = arith.addf %94, %98 : vector<128x32xf32>
    %cst_20 = arith.constant 0.000000e+00 : f32
    %100 = vector.broadcast %cst_20 : f32 to vector<128x32xf32>
    %101 = arith.maximumf %99, %100 : vector<128x32xf32>
    %102 = vector.extract_strided_slice %0 {offsets = [0, 5], sizes = [128, 1], strides = [1, 1]} : vector<128x10xf32> to vector<128x1xf32>
    %103 = vector.broadcast %102 : vector<128x1xf32> to vector<128x32xf32>
    %104 = vector.broadcast %9 : vector<1x32xf32> to vector<128x32xf32>
    %105 = arith.mulf %103, %104 : vector<128x32xf32>
    %106 = vector.broadcast %2 : vector<1x32xf32> to vector<128x32xf32>
    %107 = arith.addf %105, %106 : vector<128x32xf32>
    %108 = vector.extract_strided_slice %0 {offsets = [0, 6], sizes = [128, 1], strides = [1, 1]} : vector<128x10xf32> to vector<128x1xf32>
    %109 = vector.broadcast %108 : vector<128x1xf32> to vector<128x32xf32>
    %110 = vector.broadcast %10 : vector<1x32xf32> to vector<128x32xf32>
    %111 = arith.mulf %109, %110 : vector<128x32xf32>
    %112 = arith.addf %107, %111 : vector<128x32xf32>
    %113 = vector.extract_strided_slice %0 {offsets = [0, 7], sizes = [128, 1], strides = [1, 1]} : vector<128x10xf32> to vector<128x1xf32>
    %114 = vector.broadcast %113 : vector<128x1xf32> to vector<128x32xf32>
    %115 = vector.broadcast %11 : vector<1x32xf32> to vector<128x32xf32>
    %116 = arith.mulf %114, %115 : vector<128x32xf32>
    %117 = arith.addf %112, %116 : vector<128x32xf32>
    %cst_21 = arith.constant 0.000000e+00 : f32
    %118 = vector.broadcast %cst_21 : f32 to vector<128x32xf32>
    %119 = arith.maximumf %117, %118 : vector<128x32xf32>
    %120 = vector.extract_strided_slice %0 {offsets = [0, 6], sizes = [128, 1], strides = [1, 1]} : vector<128x10xf32> to vector<128x1xf32>
    %121 = vector.broadcast %120 : vector<128x1xf32> to vector<128x32xf32>
    %122 = vector.broadcast %9 : vector<1x32xf32> to vector<128x32xf32>
    %123 = arith.mulf %121, %122 : vector<128x32xf32>
    %124 = vector.broadcast %2 : vector<1x32xf32> to vector<128x32xf32>
    %125 = arith.addf %123, %124 : vector<128x32xf32>
    %126 = vector.extract_strided_slice %0 {offsets = [0, 7], sizes = [128, 1], strides = [1, 1]} : vector<128x10xf32> to vector<128x1xf32>
    %127 = vector.broadcast %126 : vector<128x1xf32> to vector<128x32xf32>
    %128 = vector.broadcast %10 : vector<1x32xf32> to vector<128x32xf32>
    %129 = arith.mulf %127, %128 : vector<128x32xf32>
    %130 = arith.addf %125, %129 : vector<128x32xf32>
    %131 = vector.extract_strided_slice %0 {offsets = [0, 8], sizes = [128, 1], strides = [1, 1]} : vector<128x10xf32> to vector<128x1xf32>
    %132 = vector.broadcast %131 : vector<128x1xf32> to vector<128x32xf32>
    %133 = vector.broadcast %11 : vector<1x32xf32> to vector<128x32xf32>
    %134 = arith.mulf %132, %133 : vector<128x32xf32>
    %135 = arith.addf %130, %134 : vector<128x32xf32>
    %cst_22 = arith.constant 0.000000e+00 : f32
    %136 = vector.broadcast %cst_22 : f32 to vector<128x32xf32>
    %137 = arith.maximumf %135, %136 : vector<128x32xf32>
    %138 = vector.extract_strided_slice %0 {offsets = [0, 7], sizes = [128, 1], strides = [1, 1]} : vector<128x10xf32> to vector<128x1xf32>
    %139 = vector.broadcast %138 : vector<128x1xf32> to vector<128x32xf32>
    %140 = vector.broadcast %9 : vector<1x32xf32> to vector<128x32xf32>
    %141 = arith.mulf %139, %140 : vector<128x32xf32>
    %142 = vector.broadcast %2 : vector<1x32xf32> to vector<128x32xf32>
    %143 = arith.addf %141, %142 : vector<128x32xf32>
    %144 = vector.extract_strided_slice %0 {offsets = [0, 8], sizes = [128, 1], strides = [1, 1]} : vector<128x10xf32> to vector<128x1xf32>
    %145 = vector.broadcast %144 : vector<128x1xf32> to vector<128x32xf32>
    %146 = vector.broadcast %10 : vector<1x32xf32> to vector<128x32xf32>
    %147 = arith.mulf %145, %146 : vector<128x32xf32>
    %148 = arith.addf %143, %147 : vector<128x32xf32>
    %149 = vector.extract_strided_slice %0 {offsets = [0, 9], sizes = [128, 1], strides = [1, 1]} : vector<128x10xf32> to vector<128x1xf32>
    %150 = vector.broadcast %149 : vector<128x1xf32> to vector<128x32xf32>
    %151 = vector.broadcast %11 : vector<1x32xf32> to vector<128x32xf32>
    %152 = arith.mulf %150, %151 : vector<128x32xf32>
    %153 = arith.addf %148, %152 : vector<128x32xf32>
    %cst_23 = arith.constant 0.000000e+00 : f32
    %154 = vector.broadcast %cst_23 : f32 to vector<128x32xf32>
    %155 = arith.maximumf %153, %154 : vector<128x32xf32>
    %156 = arith.maximumf %29, %47 : vector<128x32xf32>
    %157 = arith.maximumf %65, %83 : vector<128x32xf32>
    %158 = arith.maximumf %101, %119 : vector<128x32xf32>
    %159 = arith.maximumf %137, %155 : vector<128x32xf32>
    %160 = tpu.concatenate %156, %157, %158 in 1 : vector<128x32xf32>, vector<128x32xf32>, vector<128x32xf32> -> vector<128x96xf32>
    %161 = tpu.concatenate %157, %158, %159 in 1 : vector<128x32xf32>, vector<128x32xf32>, vector<128x32xf32> -> vector<128x96xf32>
    %162 = tpu.concatenate %160, %161 in 0 : vector<128x96xf32>, vector<128x96xf32> -> vector<256x96xf32>
    %cst_24 = arith.constant dense<0.000000e+00> : vector<256x64xf32>
    %163 = tpu.matmul %162, %3, %cst_24 {dimension_numbers = #tpu.dot_dimension_numbers<[1], [0], [0], [1], [0, 0, 1, 1], [], []>} : vector<256x96xf32>, vector<96x64xf32>, vector<256x64xf32> -> vector<256x64xf32>
    %164 = vector.extract_strided_slice %163 {offsets = [0, 0], sizes = [128, 64], strides = [1, 1]} : vector<256x64xf32> to vector<128x64xf32>
    %165 = vector.broadcast %4 : vector<1x64xf32> to vector<128x64xf32>
    %166 = arith.addf %164, %165 : vector<128x64xf32>
    %cst_25 = arith.constant 0.000000e+00 : f32
    %167 = vector.broadcast %cst_25 : f32 to vector<128x64xf32>
    %168 = arith.maximumf %166, %167 : vector<128x64xf32>
    %169 = vector.extract_strided_slice %163 {offsets = [128, 0], sizes = [128, 64], strides = [1, 1]} : vector<256x64xf32> to vector<128x64xf32>
    %170 = vector.broadcast %4 : vector<1x64xf32> to vector<128x64xf32>
    %171 = arith.addf %169, %170 : vector<128x64xf32>
    %cst_26 = arith.constant 0.000000e+00 : f32
    %172 = vector.broadcast %cst_26 : f32 to vector<128x64xf32>
    %173 = arith.maximumf %171, %172 : vector<128x64xf32>
    %174 = arith.maximumf %168, %173 : vector<128x64xf32>
    %cst_27 = arith.constant dense<0.000000e+00> : vector<128x128xf32>
    %175 = tpu.matmul %174, %5, %cst_27 {dimension_numbers = #tpu.dot_dimension_numbers<[1], [0], [0], [1], [0, 0, 1, 1], [], []>} : vector<128x64xf32>, vector<64x128xf32>, vector<128x128xf32> -> vector<128x128xf32>
    %176 = vector.broadcast %6 : vector<1x128xf32> to vector<128x128xf32>
    %177 = arith.addf %175, %176 : vector<128x128xf32>
    %cst_28 = arith.constant 0.000000e+00 : f32
    %178 = vector.broadcast %cst_28 : f32 to vector<128x128xf32>
    %179 = arith.maximumf %177, %178 : vector<128x128xf32>
    %cst_29 = arith.constant dense<0.000000e+00> : vector<128x128xf32>
    %180 = tpu.matmul %179, %7, %cst_29 {dimension_numbers = #tpu.dot_dimension_numbers<[1], [0], [0], [1], [0, 0, 1, 1], [], []>} : vector<128x128xf32>, vector<128x128xf32>, vector<128x128xf32> -> vector<128x128xf32>
    %181 = vector.broadcast %8 : vector<1x128xf32> to vector<128x128xf32>
    %182 = arith.addf %180, %181 : vector<128x128xf32>
    %cst_30 = arith.constant dense<0xFF800000> : vector<128xf32>
    %183 = vector.multi_reduction <maximumf>, %182, %cst_30 [1] : vector<128x128xf32> to vector<128xf32>
    %184 = vector.shape_cast %183 : vector<128xf32> to vector<128x1xf32>
    %185 = vector.broadcast %184 : vector<128x1xf32> to vector<128x128xf32>
    %186 = arith.subf %182, %185 : vector<128x128xf32>
    %187 = math.exp %186 : vector<128x128xf32>
    %cst_31 = arith.constant dense<0.000000e+00> : vector<128xf32>
    %188 = vector.multi_reduction <add>, %187, %cst_31 [1] : vector<128x128xf32> to vector<128xf32>
    %189 = vector.shape_cast %188 : vector<128xf32> to vector<128x1xf32>
    %190 = math.log %189 : vector<128x1xf32>
    %191 = vector.broadcast %190 : vector<128x1xf32> to vector<128x128xf32>
    %192 = arith.subf %186, %191 : vector<128x128xf32>
    %c0_32 = arith.constant 0 : index
    %c0_33 = arith.constant 0 : index
    %193 = vector.load %arg10[%c0_32, %c0_33] : memref<128x128xf32, #tpu.memory_space<vmem>>, vector<128x128xf32>
    tpu.vector_store %arg10[%c0_32, %c0_33], %192 {strides = array<i32>} : memref<128x128xf32, #tpu.memory_space<vmem>>, vector<128x128xf32>,
    return
  }
  func.func @transform_0(%arg0: i32) -> (i32, i32) {
    %c0_i32 = arith.constant 0 : i32
    %c0_i32_0 = arith.constant 0 : i32
    return %arg0, %c0_i32 : i32, i32
  }
  func.func @transform_1(%arg0: i32) -> (i32, i32) {
    %c0_i32 = arith.constant 0 : i32
    %c0_i32_0 = arith.constant 0 : i32
    %c0_i32_1 = arith.constant 0 : i32
    return %c0_i32, %c0_i32_0 : i32, i32
  }
  func.func @transform_2(%arg0: i32) -> (i32, i32) {
    %c0_i32 = arith.constant 0 : i32
    %c0_i32_0 = arith.constant 0 : i32
    %c0_i32_1 = arith.constant 0 : i32
    return %c0_i32, %c0_i32_0 : i32, i32
  }
  func.func @transform_3(%arg0: i32) -> (i32, i32) {
    %c0_i32 = arith.constant 0 : i32
    %c0_i32_0 = arith.constant 0 : i32
    %c0_i32_1 = arith.constant 0 : i32
    return %c0_i32, %c0_i32_0 : i32, i32
  }
  func.func @transform_4(%arg0: i32) -> (i32, i32) {
    %c0_i32 = arith.constant 0 : i32
    %c0_i32_0 = arith.constant 0 : i32
    %c0_i32_1 = arith.constant 0 : i32
    return %c0_i32, %c0_i32_0 : i32, i32
  }
  func.func @transform_5(%arg0: i32) -> (i32, i32) {
    %c0_i32 = arith.constant 0 : i32
    %c0_i32_0 = arith.constant 0 : i32
    %c0_i32_1 = arith.constant 0 : i32
    return %c0_i32, %c0_i32_0 : i32, i32
  }
  func.func @transform_6(%arg0: i32) -> (i32, i32) {
    %c0_i32 = arith.constant 0 : i32
    %c0_i32_0 = arith.constant 0 : i32
    %c0_i32_1 = arith.constant 0 : i32
    return %c0_i32, %c0_i32_0 : i32, i32
  }
  func.func @transform_7(%arg0: i32) -> (i32, i32) {
    %c0_i32 = arith.constant 0 : i32
    %c0_i32_0 = arith.constant 0 : i32
    %c0_i32_1 = arith.constant 0 : i32
    return %c0_i32, %c0_i32_0 : i32, i32
  }
  func.func @transform_8(%arg0: i32) -> (i32, i32) {
    %c0_i32 = arith.constant 0 : i32
    %c0_i32_0 = arith.constant 0 : i32
    %c0_i32_1 = arith.constant 0 : i32
    return %c0_i32, %c0_i32_0 : i32, i32
  }
  func.func @transform_9(%arg0: i32) -> (i32, i32) {
    %c0_i32 = arith.constant 0 : i32
    %c0_i32_0 = arith.constant 0 : i32
    return %arg0, %c0_i32 : i32, i32
  }
}

</mosaic_0001>

<llo_original>
// kernel: tpu_custom_call.1
$region0: #{tpu_custom_call.1}
  #allocation0 [shape = 'u32[]', space=smem, size = 0x4, offset = 0x4, fixed_abs, tag = 'smem constant byte address 0x4 - core index']
  #allocation1 [shape = 'u32[144,128]{1,0:T(1,128)}', space=vmem, size = 0x12000, scoped, tag = 'internal scratch']
  %s0 = inlined_call_operand.vmem [shape: f32[512,10], index: 0, kind: input, shape index: {}]
  %s1 = inlined_call_operand.vmem [shape: f32[3,32], index: 1, kind: input, shape index: {}]
  %s2 = inlined_call_operand.vmem [shape: f32[1,32], index: 2, kind: input, shape index: {}]
  %s3 = inlined_call_operand.vmem [shape: f32[96,64], index: 3, kind: input, shape index: {}]
  %s4 = inlined_call_operand.vmem [shape: f32[1,64], index: 4, kind: input, shape index: {}]
  %s5 = inlined_call_operand.vmem [shape: f32[64,128], index: 5, kind: input, shape index: {}]
  %s6 = inlined_call_operand.vmem [shape: f32[1,128], index: 6, kind: input, shape index: {}]
  %s7 = inlined_call_operand.vmem [shape: f32[128,128], index: 7, kind: input, shape index: {}]
  %s8 = inlined_call_operand.vmem [shape: f32[1,128], index: 8, kind: input, shape index: {}]
  %s9 = inlined_call_operand.hbm [shape: f32[512,128], index: 9, kind: output, shape index: {}]
  %s10 = sld [smem:[#allocation0]]
  $region69: #{tpu_custom_call.1} parent=0
    _
  %s12 = ssub.s32 1, %s10
  %s13 = scalar_select 0, %s12, %s10
  $region1: #{tpu_custom_call.1} parent=0
    #allocation2 [shape = 'u8[131072]{0}', space=vmem, size = 0x20000, scoped, tag = 'output window, operand 0']
    #allocation3 [shape = 's32[2]{0}', space=sflag, size = 0x8, scoped, tag = 'scoped memory for tpu_custom_call.1']
    %14 = vsyncpa [#allocation3], 0
    %s15 = scalar_lea.sflag [#allocation3], 1
    %16 = vsyncpa %s15, 0
    loop: start=0, step=1, limit=6
    $region2: #{tpu_custom_call.1} parent=1 // loop_pre_header
      _
    $region3: #{tpu_custom_call.1} parent=1 // loop_header
      %s18 = sphi 0, %s22
      %p19 = scmp.ge.s32.totalorder %s18, 6
      %s28 = sphi 0, %s30
      %s31 = sphi 0, %s28
      %s32 = sphi 0, %s31
      %s48 = sphi 0, %s32
      %s52 = sphi 0, %s52
      %s54 = sphi 0, %s52
      %s55 = sphi 0, %s54
      %s69 = sphi 0, %s55
      %s73 = sphi 0, %s73
      %s75 = sphi 0, %s73
      %s76 = sphi 0, %s75
      %s90 = sphi 0, %s76
      %s94 = sphi 0, %s94
      %s96 = sphi 0, %s94
      %s97 = sphi 0, %s96
      %s111 = sphi 0, %s97
      %s115 = sphi 0, %s115
      %s117 = sphi 0, %s115
      %s118 = sphi 0, %s117
      %s132 = sphi 0, %s118
      %s136 = sphi 0, %s136
      %s138 = sphi 0, %s136
      %s139 = sphi 0, %s138
      %s153 = sphi 0, %s139
      %s157 = sphi 0, %s157
      %s159 = sphi 0, %s157
      %s160 = sphi 0, %s159
      %s174 = sphi 0, %s160
      %s178 = sphi 0, %s178
      %s180 = sphi 0, %s178
      %s181 = sphi 0, %s180
      %s195 = sphi 0, %s181
      %s199 = sphi 0, %s199
      %s201 = sphi 0, %s199
      %s202 = sphi 0, %s201
      %s216 = sphi 0, %s202
      %s222 = sphi 0, %s224
      %s225 = sphi 0, %s222
      %s226 = sphi 0, %s225
      %s242 = sphi 0, %s226
    $region4: #{tpu_custom_call.1} parent=1 // loop_header_branch
      %21 = sbr.rel (%p19) target = $region8
    $region5: #{tpu_custom_call.1} parent=1 // loop_body
      %s23 = ssub.s32 %s18, 1
      %s24 = ssub.s32 %s18, 2
      %s25 = sadd.s32 %s18, 1
      %s26 = ssub.s32 %s18, %s25
      %p27 = scmp.eq.s32.totalorder %s26, 0
      %s29 = sadd.s32 %s28, 1
      %s30 = scalar_select %p27, %s28, %s29
      %p33 = pneg %p27
      %p34 = scmp.eq.s32.totalorder %s18, 3
      %p35 = por %p33, %p34
      %p36 = scmp.ne.s32.totalorder %s28, %s31
      %p37 = scmp.eq.s32.totalorder %s18, 0
      %p38 = por %p36, %p37
      %p39 = scmp.ne.s32.totalorder %s28, %s31
      %p40 = scmp.eq.s32.totalorder %s23, 3
      %p41 = por %p39, %p40
      %p42 = scmp.ne.s32.totalorder %s31, %s32
      %p43 = scmp.eq.s32.totalorder %s23, 0
      %p44 = por %p42, %p43
      %p45 = scmp.ne.s32.totalorder %s31, %s32
      %p46 = scmp.eq.s32.totalorder %s24, 3
      %p47 = por %p45, %p46
      %p49 = scmp.ne.s32.totalorder %s32, %s48
      %p50 = scmp.eq.s32.totalorder %s24, 0
      %p51 = por %p49, %p50
      %s53 = sadd.s32 %s52, 1
      %p56 = scmp.eq.s32.totalorder %s18, 3
      %p57 = scmp.ne.s32.totalorder %s52, %s54
      %p58 = scmp.eq.s32.totalorder %s18, 0
      %p59 = por %p57, %p58
      %p60 = scmp.ne.s32.totalorder %s52, %s54
      %p61 = scmp.eq.s32.totalorder %s23, 3
      %p62 = por %p60, %p61
      %p63 = scmp.ne.s32.totalorder %s54, %s55
      %p64 = scmp.eq.s32.totalorder %s23, 0
      %p65 = por %p63, %p64
      %p66 = scmp.ne.s32.totalorder %s54, %s55
      %p67 = scmp.eq.s32.totalorder %s24, 3
      %p68 = por %p66, %p67
      %p70 = scmp.ne.s32.totalorder %s55, %s69
      %p71 = scmp.eq.s32.totalorder %s24, 0
      %p72 = por %p70, %p71
      %s74 = sadd.s32 %s73, 1
      %p77 = scmp.eq.s32.totalorder %s18, 3
      %p78 = scmp.ne.s32.totalorder %s73, %s75
      %p79 = scmp.eq.s32.totalorder %s18, 0
      %p80 = por %p78, %p79
      %p81 = scmp.ne.s32.totalorder %s73, %s75
      %p82 = scmp.eq.s32.totalorder %s23, 3
      %p83 = por %p81, %p82
      %p84 = scmp.ne.s32.totalorder %s75, %s76
      %p85 = scmp.eq.s32.totalorder %s23, 0
      %p86 = por %p84, %p85
      %p87 = scmp.ne.s32.totalorder %s75, %s76
      %p88 = scmp.eq.s32.totalorder %s24, 3
      %p89 = por %p87, %p88
      %p91 = scmp.ne.s32.totalorder %s76, %s90
      %p92 = scmp.eq.s32.totalorder %s24, 0
      %p93 = por %p91, %p92
      %s95 = sadd.s32 %s94, 1
      %p98 = scmp.eq.s32.totalorder %s18, 3
      %p99 = scmp.ne.s32.totalorder %s94, %s96
      %p100 = scmp.eq.s32.totalorder %s18, 0
      %p101 = por %p99, %p100
      %p102 = scmp.ne.s32.totalorder %s94, %s96
      %p103 = scmp.eq.s32.totalorder %s23, 3
      %p104 = por %p102, %p103
      %p105 = scmp.ne.s32.totalorder %s96, %s97
      %p106 = scmp.eq.s32.totalorder %s23, 0
      %p107 = por %p105, %p106
      %p108 = scmp.ne.s32.totalorder %s96, %s97
      %p109 = scmp.eq.s32.totalorder %s24, 3
      %p110 = por %p108, %p109
      %p112 = scmp.ne.s32.totalorder %s97, %s111
      %p113 = scmp.eq.s32.totalorder %s24, 0
      %p114 = por %p112, %p113
      %s116 = sadd.s32 %s115, 1
      %p119 = scmp.eq.s32.totalorder %s18, 3
      %p120 = scmp.ne.s32.totalorder %s115, %s117
      %p121 = scmp.eq.s32.totalorder %s18, 0
      %p122 = por %p120, %p121
      %p123 = scmp.ne.s32.totalorder %s115, %s117
      %p124 = scmp.eq.s32.totalorder %s23, 3
      %p125 = por %p123, %p124
      %p126 = scmp.ne.s32.totalorder %s117, %s118
      %p127 = scmp.eq.s32.totalorder %s23, 0
      %p128 = por %p126, %p127
      %p129 = scmp.ne.s32.totalorder %s117, %s118
      %p130 = scmp.eq.s32.totalorder %s24, 3
      %p131 = por %p129, %p130
      %p133 = scmp.ne.s32.totalorder %s118, %s132
      %p134 = scmp.eq.s32.totalorder %s24, 0
      %p135 = por %p133, %p134
      %s137 = sadd.s32 %s136, 1
      %p140 = scmp.eq.s32.totalorder %s18, 3
      %p141 = scmp.ne.s32.totalorder %s136, %s138
      %p142 = scmp.eq.s32.totalorder %s18, 0
      %p143 = por %p141, %p142
      %p144 = scmp.ne.s32.totalorder %s136, %s138
      %p145 = scmp.eq.s32.totalorder %s23, 3
      %p146 = por %p144, %p145
      %p147 = scmp.ne.s32.totalorder %s138, %s139
      %p148 = scmp.eq.s32.totalorder %s23, 0
      %p149 = por %p147, %p148
      %p150 = scmp.ne.s32.totalorder %s138, %s139
      %p151 = scmp.eq.s32.totalorder %s24, 3
      %p152 = por %p150, %p151
      %p154 = scmp.ne.s32.totalorder %s139, %s153
      %p155 = scmp.eq.s32.totalorder %s24, 0
      %p156 = por %p154, %p155
      %s158 = sadd.s32 %s157, 1
      %p161 = scmp.eq.s32.totalorder %s18, 3
      %p162 = scmp.ne.s32.totalorder %s157, %s159
      %p163 = scmp.eq.s32.totalorder %s18, 0
      %p164 = por %p162, %p163
      %p165 = scmp.ne.s32.totalorder %s157, %s159
      %p166 = scmp.eq.s32.totalorder %s23, 3
      %p167 = por %p165, %p166
      %p168 = scmp.ne.s32.totalorder %s159, %s160
      %p169 = scmp.eq.s32.totalorder %s23, 0
      %p170 = por %p168, %p169
      %p171 = scmp.ne.s32.totalorder %s159, %s160
      %p172 = scmp.eq.s32.totalorder %s24, 3
      %p173 = por %p171, %p172
      %p175 = scmp.ne.s32.totalorder %s160, %s174
      %p176 = scmp.eq.s32.totalorder %s24, 0
      %p177 = por %p175, %p176
      %s179 = sadd.s32 %s178, 1
      %p182 = scmp.eq.s32.totalorder %s18, 3
      %p183 = scmp.ne.s32.totalorder %s178, %s180
      %p184 = scmp.eq.s32.totalorder %s18, 0
      %p185 = por %p183, %p184
      %p186 = scmp.ne.s32.totalorder %s178, %s180
      %p187 = scmp.eq.s32.totalorder %s23, 3
      %p188 = por %p186, %p187
      %p189 = scmp.ne.s32.totalorder %s180, %s181
      %p190 = scmp.eq.s32.totalorder %s23, 0
      %p191 = por %p189, %p190
      %p192 = scmp.ne.s32.totalorder %s180, %s181
      %p193 = scmp.eq.s32.totalorder %s24, 3
      %p194 = por %p192, %p193
      %p196 = scmp.ne.s32.totalorder %s181, %s195
      %p197 = scmp.eq.s32.totalorder %s24, 0
      %p198 = por %p196, %p197
      %s200 = sadd.s32 %s199, 1
      %p203 = scmp.eq.s32.totalorder %s18, 3
      %p204 = scmp.ne.s32.totalorder %s199, %s201
      %p205 = scmp.eq.s32.totalorder %s18, 0
      %p206 = por %p204, %p205
      %p207 = scmp.ne.s32.totalorder %s199, %s201
      %p208 = scmp.eq.s32.totalorder %s23, 3
      %p209 = por %p207, %p208
      %p210 = scmp.ne.s32.totalorder %s201, %s202
      %p211 = scmp.eq.s32.totalorder %s23, 0
      %p212 = por %p210, %p211
      %p213 = scmp.ne.s32.totalorder %s201, %s202
      %p214 = scmp.eq.s32.totalorder %s24, 3
      %p215 = por %p213, %p214
      %p217 = scmp.ne.s32.totalorder %s202, %s216
      %p218 = scmp.eq.s32.totalorder %s24, 0
      %p219 = por %p217, %p218
      %s220 = ssub.s32 %s18, %s25
      %p221 = scmp.eq.s32.totalorder %s220, 0
      %s223 = sadd.s32 %s222, 1
      %s224 = scalar_select %p221, %s222, %s223
      %p227 = pneg %p221
      %p228 = scmp.eq.s32.totalorder %s18, 3
      %p229 = por %p227, %p228
      %p230 = scmp.ne.s32.totalorder %s222, %s225
      %p231 = scmp.eq.s32.totalorder %s18, 0
      %p232 = por %p230, %p231
      %p233 = scmp.ne.s32.totalorder %s222, %s225
      %p234 = scmp.eq.s32.totalorder %s23, 3
      %p235 = por %p233, %p234
      %p236 = scmp.ne.s32.totalorder %s225, %s226
      %p237 = scmp.eq.s32.totalorder %s23, 0
      %p238 = por %p236, %p237
      %p239 = scmp.ne.s32.totalorder %s225, %s226
      %p240 = scmp.eq.s32.totalorder %s24, 3
      %p241 = por %p239, %p240
      %p243 = scmp.ne.s32.totalorder %s226, %s242
      %p244 = scmp.eq.s32.totalorder %s24, 0
      %p245 = por %p243, %p244
      %p246 = scmp.le.s32.totalorder 1, %s18
      %p247 = scmp.lt.s32.totalorder %s18, 5
      %p248 = pnand %p246, %p247
      %p249 = pneg %p248
      // Predicated region
      $region9: #{tpu_custom_call.1} parent=5 // pred_check
        _
      $region10: #{tpu_custom_call.1} parent=5 // pred_check_branch
        %251 = sbr.rel (%p248) target = $region12
      $region11: #{tpu_custom_call.1} parent=5 // pred_region
        %s252 = ssub.s32 %s18, 1
        // Predicated region
        $region13: #{tpu_custom_call.1} parent=11 // pred_check
          %p253 = pneg %p65
        $region14: #{tpu_custom_call.1} parent=11 // pred_check_branch
          %255 = sbr.rel (%p253) target = $region16
        $region15: #{tpu_custom_call.1} parent=11 // pred_region
          _
        $region16: #{tpu_custom_call.1} parent=11 // pred_fallthru
          _
        // Predicated region
        $region17: #{tpu_custom_call.1} parent=11 // pred_check
          %p256 = pneg %p86
        $region18: #{tpu_custom_call.1} parent=11 // pred_check_branch
          %258 = sbr.rel (%p256) target = $region20
        $region19: #{tpu_custom_call.1} parent=11 // pred_region
          _
        $region20: #{tpu_custom_call.1} parent=11 // pred_fallthru
          _
        // Predicated region
        $region21: #{tpu_custom_call.1} parent=11 // pred_check
          %p259 = pneg %p107
        $region22: #{tpu_custom_call.1} parent=11 // pred_check_branch
          %261 = sbr.rel (%p259) target = $region24
        $region23: #{tpu_custom_call.1} parent=11 // pred_region
          _
        $region24: #{tpu_custom_call.1} parent=11 // pred_fallthru
          _
        // Predicated region
        $region25: #{tpu_custom_call.1} parent=11 // pred_check
          %p262 = pneg %p128
        $region26: #{tpu_custom_call.1} parent=11 // pred_check_branch
          %264 = sbr.rel (%p262) target = $region28
        $region27: #{tpu_custom_call.1} parent=11 // pred_region
          _
        $region28: #{tpu_custom_call.1} parent=11 // pred_fallthru
          _
        // Predicated region
        $region29: #{tpu_custom_call.1} parent=11 // pred_check
          %p265 = pneg %p149
        $region30: #{tpu_custom_call.1} parent=11 // pred_check_branch
          %267 = sbr.rel (%p265) target = $region32
        $region31: #{tpu_custom_call.1} parent=11 // pred_region
          _
        $region32: #{tpu_custom_call.1} parent=11 // pred_fallthru
          _
        // Predicated region
        $region33: #{tpu_custom_call.1} parent=11 // pred_check
          %p268 = pneg %p170
        $region34: #{tpu_custom_call.1} parent=11 // pred_check_branch
          %270 = sbr.rel (%p268) target = $region36
        $region35: #{tpu_custom_call.1} parent=11 // pred_region
          _
        $region36: #{tpu_custom_call.1} parent=11 // pred_fallthru
          _
        // Predicated region
        $region37: #{tpu_custom_call.1} parent=11 // pred_check
          %p271 = pneg %p191
        $region38: #{tpu_custom_call.1} parent=11 // pred_check_branch
          %273 = sbr.rel (%p271) target = $region40
        $region39: #{tpu_custom_call.1} parent=11 // pred_region
          _
        $region40: #{tpu_custom_call.1} parent=11 // pred_fallthru
          _
        // Predicated region
        $region41: #{tpu_custom_call.1} parent=11 // pred_check
          %p274 = pneg %p212
        $region42: #{tpu_custom_call.1} parent=11 // pred_check_branch
          %276 = sbr.rel (%p274) target = $region44
        $region43: #{tpu_custom_call.1} parent=11 // pred_region
          _
        $region44: #{tpu_custom_call.1} parent=11 // pred_fallthru
          _
      $region12: #{tpu_custom_call.1} parent=5 // pred_fallthru
        _
      %p277 = scmp.lt.s32.totalorder %s18, 4
      // Predicated region
      $region45: #{tpu_custom_call.1} parent=5 // pred_check
        %p278 = pneg %p277
      $region46: #{tpu_custom_call.1} parent=5 // pred_check_branch
        %280 = sbr.rel (%p278) target = $region48
      $region47: #{tpu_custom_call.1} parent=5 // pred_region
        // Predicated region
        $region49: #{tpu_custom_call.1} parent=47 // pred_check
          %p281 = pneg %p38
        $region50: #{tpu_custom_call.1} parent=47 // pred_check_branch
          %283 = sbr.rel (%p281) target = $region52
        $region51: #{tpu_custom_call.1} parent=47 // pred_region
          %s284 = smul.u32 16, %s18
          %p285 = scmp.lt.s32.totalorder %s284, 63
          %s286 = scalar_select %p285, %s284, 63
          %s287 = smul.addr %s286, 8
          %s288 = scalar_lea.vmem %s0, %s287
          %s289 = smul.u32 16, %s18
        $region52: #{tpu_custom_call.1} parent=47 // pred_fallthru
          _
      $region48: #{tpu_custom_call.1} parent=5 // pred_fallthru
        _
      %p290 = scmp.le.s32.totalorder 1, %s18
      %p291 = scmp.lt.s32.totalorder %s18, 5
      %p292 = pnand %p290, %p291
      %p293 = pneg %p292
      // Predicated region
      $region53: #{tpu_custom_call.1} parent=5 // pred_check
        _
      $region54: #{tpu_custom_call.1} parent=5 // pred_check_branch
        %295 = sbr.rel (%p292) target = $region56
      $region55: #{tpu_custom_call.1} parent=5 // pred_region
        %s296 = ssub.s32 %s18, 1
        %s297 = smul.u32 16, %s23
        %p298 = scmp.lt.s32.totalorder %s297, 63
        %s299 = scalar_select %p298, %s297, 63
        %s300 = smul.addr %s299, 8
        %s301 = scalar_lea.vmem %s0, %s300
        %p302 = pneg %p44
        %p303 = pneg %p41
        %p304 = pneg %p65
        %p305 = pneg %p62
        %p306 = pneg %p86
        %p307 = pneg %p83
        %p308 = pneg %p107
        %p309 = pneg %p104
        %p310 = pneg %p128
        %p311 = pneg %p125
        %p312 = pneg %p149
        %p313 = pneg %p146
        %p314 = pneg %p170
        %p315 = pneg %p167
        %p316 = pneg %p191
        %p317 = pneg %p188
        %p318 = pneg %p212
        %p319 = pneg %p209
        %p320 = pneg %p238
        %p321 = pneg %p235
        %s322 = sand.u32 %s225, 1
        %s323 = scalar_lea.sflag [#allocation3], %s322
        %s324 = sand.u32 %s225, 1
        %s325 = smul.addr %s324, 128
        %s326 = scalar_lea.vmem [#allocation2], %s325
        %s327 = smul.u32 16, %s23
        %p328 = scmp.lt.s32.totalorder %s327, 63
        %s329 = scalar_select %p328, %s327, 63
        %s330 = smul.addr %s329, 8
        %s331 = scalar_lea.vmem %s0, %s330
        %s332 = smul.u32 16, %s23
        %s333 = smul.u32 16, %s23
        %v334 = vld [vmem:[%s331] sm:$0xff]
        %v335 = vld [vmem:[%s331 + $0x8] sm:$0xff]
        %v336 = vld [vmem:[%s331 + $0x10] sm:$0xff]
        %v337 = vld [vmem:[%s331 + $0x18] sm:$0xff]
        %v338 = vld [vmem:[%s331 + $0x20] sm:$0xff]
        %v339 = vld [vmem:[%s331 + $0x28] sm:$0xff]
        %v340 = vld [vmem:[%s331 + $0x30] sm:$0xff]
        %v341 = vld [vmem:[%s331 + $0x38] sm:$0xff]
        %v342 = vld [vmem:[%s331 + $0x40] sm:$0xff]
        %v343 = vld [vmem:[%s331 + $0x48] sm:$0xff]
        %v344 = vld [vmem:[%s331 + $0x50] sm:$0xff]
        %v345 = vld [vmem:[%s331 + $0x58] sm:$0xff]
        %v346 = vld [vmem:[%s331 + $0x60] sm:$0xff]
        %v347 = vld [vmem:[%s331 + $0x68] sm:$0xff]
        %v348 = vld [vmem:[%s331 + $0x70] sm:$0xff]
        %v349 = vld [vmem:[%s331 + $0x78] sm:$0xff]
        %v350 = vld [vmem:[%s1] sm:$0x7]
        %v351 = vld [vmem:[%s2] sm:$0x1]
        %v352 = vld [vmem:[%s3] sm:$0xff]
        %v353 = vld [vmem:[%s3 + $0x8] sm:$0xff]
        %v354 = vld [vmem:[%s3 + $0x10] sm:$0xff]
        %v355 = vld [vmem:[%s3 + $0x18] sm:$0xff]
        %v356 = vld [vmem:[%s3 + $0x20] sm:$0xff]
        %v357 = vld [vmem:[%s3 + $0x28] sm:$0xff]
        %v358 = vld [vmem:[%s3 + $0x30] sm:$0xff]
        %v359 = vld [vmem:[%s3 + $0x38] sm:$0xff]
        %v360 = vld [vmem:[%s3 + $0x40] sm:$0xff]
        %v361 = vld [vmem:[%s3 + $0x48] sm:$0xff]
        %v362 = vld [vmem:[%s3 + $0x50] sm:$0xff]
        %v363 = vld [vmem:[%s3 + $0x58] sm:$0xff]
        %v364 = vld [vmem:[%s4] sm:$0x1]
        %v365 = vld [vmem:[%s5] sm:$0xff]
        %v366 = vld [vmem:[%s5 + $0x8] sm:$0xff]
        %v367 = vld [vmem:[%s5 + $0x10] sm:$0xff]
        %v368 = vld [vmem:[%s5 + $0x18] sm:$0xff]
        %v369 = vld [vmem:[%s5 + $0x20] sm:$0xff]
        %v370 = vld [vmem:[%s5 + $0x28] sm:$0xff]
        %v371 = vld [vmem:[%s5 + $0x30] sm:$0xff]
        %v372 = vld [vmem:[%s5 + $0x38] sm:$0xff]
        %v373 = vld [vmem:[%s6] sm:$0x1]
        %v374 = vld [vmem:[%s7] sm:$0xff]
        %v375 = vld [vmem:[%s7 + $0x8] sm:$0xff]
        %v376 = vld [vmem:[%s7 + $0x10] sm:$0xff]
        %v377 = vld [vmem:[%s7 + $0x18] sm:$0xff]
        %v378 = vld [vmem:[%s7 + $0x20] sm:$0xff]
        %v379 = vld [vmem:[%s7 + $0x28] sm:$0xff]
        %v380 = vld [vmem:[%s7 + $0x30] sm:$0xff]
        %v381 = vld [vmem:[%s7 + $0x38] sm:$0xff]
        %v382 = vld [vmem:[%s7 + $0x40] sm:$0xff]
        %v383 = vld [vmem:[%s7 + $0x48] sm:$0xff]
        %v384 = vld [vmem:[%s7 + $0x50] sm:$0xff]
        %v385 = vld [vmem:[%s7 + $0x58] sm:$0xff]
        %v386 = vld [vmem:[%s7 + $0x60] sm:$0xff]
        %v387 = vld [vmem:[%s7 + $0x68] sm:$0xff]
        %v388 = vld [vmem:[%s7 + $0x70] sm:$0xff]
        %v389 = vld [vmem:[%s7 + $0x78] sm:$0xff]
        %v390 = vld [vmem:[%s8] sm:$0x1]
        %392 = vset.pattern.permute.xlu0 0
        %393 = vperm.xlu0 %392, %v334
        %v394 = vpop.permute.xlu0 %393
        %397 = vset.pattern.permute.xlu0 0
        %398 = vperm.xlu0 %397, %v335
        %v399 = vpop.permute.xlu0 %398
        %402 = vset.pattern.permute.xlu0 0
        %403 = vperm.xlu0 %402, %v336
        %v404 = vpop.permute.xlu0 %403
        %407 = vset.pattern.permute.xlu0 0
        %408 = vperm.xlu0 %407, %v337
        %v409 = vpop.permute.xlu0 %408
        %412 = vset.pattern.permute.xlu0 0
        %413 = vperm.xlu0 %412, %v338
        %v414 = vpop.permute.xlu0 %413
        %417 = vset.pattern.permute.xlu0 0
        %418 = vperm.xlu0 %417, %v339
        %v419 = vpop.permute.xlu0 %418
        %422 = vset.pattern.permute.xlu0 0
        %423 = vperm.xlu0 %422, %v340
        %v424 = vpop.permute.xlu0 %423
        %427 = vset.pattern.permute.xlu0 0
        %428 = vperm.xlu0 %427, %v341
        %v429 = vpop.permute.xlu0 %428
        %432 = vset.pattern.permute.xlu0 0
        %433 = vperm.xlu0 %432, %v342
        %v434 = vpop.permute.xlu0 %433
        %437 = vset.pattern.permute.xlu0 0
        %438 = vperm.xlu0 %437, %v343
        %v439 = vpop.permute.xlu0 %438
        %442 = vset.pattern.permute.xlu0 0
        %443 = vperm.xlu0 %442, %v344
        %v444 = vpop.permute.xlu0 %443
        %447 = vset.pattern.permute.xlu0 0
        %448 = vperm.xlu0 %447, %v345
        %v449 = vpop.permute.xlu0 %448
        %452 = vset.pattern.permute.xlu0 0
        %453 = vperm.xlu0 %452, %v346
        %v454 = vpop.permute.xlu0 %453
        %457 = vset.pattern.permute.xlu0 0
        %458 = vperm.xlu0 %457, %v347
        %v459 = vpop.permute.xlu0 %458
        %462 = vset.pattern.permute.xlu0 0
        %463 = vperm.xlu0 %462, %v348
        %v464 = vpop.permute.xlu0 %463
        %467 = vset.pattern.permute.xlu0 0
        %468 = vperm.xlu0 %467, %v349
        %v469 = vpop.permute.xlu0 %468
        %v471 = vlaneseq
        %v472 = vshrl.u32 %v471, 7
        %v473 = vsub.s32 0, %v472
        %v474 = vrot.slane %v350, %v473
        %v475 = vmul.f32 %v394, %v474
        %v476 = vmul.f32 %v399, %v474
        %v477 = vmul.f32 %v404, %v474
        %v478 = vmul.f32 %v409, %v474
        %v479 = vmul.f32 %v414, %v474
        %v480 = vmul.f32 %v419, %v474
        %v481 = vmul.f32 %v424, %v474
        %v482 = vmul.f32 %v429, %v474
        %v483 = vmul.f32 %v434, %v474
        %v484 = vmul.f32 %v439, %v474
        %v485 = vmul.f32 %v444, %v474
        %v486 = vmul.f32 %v449, %v474
        %v487 = vmul.f32 %v454, %v474
        %v488 = vmul.f32 %v459, %v474
        %v489 = vmul.f32 %v464, %v474
        %v490 = vmul.f32 %v469, %v474
        %v492 = vlaneseq
        %v493 = vshrl.u32 %v492, 7
        %v494 = vsub.s32 0, %v493
        %v495 = vrot.slane %v351, %v494
        %v497 = vadd.f32 %v475, %v495
        %v498 = vadd.f32 %v476, %v495
        %v499 = vadd.f32 %v477, %v495
        %v500 = vadd.f32 %v478, %v495
        %v501 = vadd.f32 %v479, %v495
        %v502 = vadd.f32 %v480, %v495
        %v503 = vadd.f32 %v481, %v495
        %v504 = vadd.f32 %v482, %v495
        %v505 = vadd.f32 %v483, %v495
        %v506 = vadd.f32 %v484, %v495
        %v507 = vadd.f32 %v485, %v495
        %v508 = vadd.f32 %v486, %v495
        %v509 = vadd.f32 %v487, %v495
        %v510 = vadd.f32 %v488, %v495
        %v511 = vadd.f32 %v489, %v495
        %v512 = vadd.f32 %v490, %v495
        %513 = vset.pattern.permute.xlu0 1
        %514 = vperm.xlu0 %513, %v334
        %v515 = vpop.permute.xlu0 %514
        %517 = vset.pattern.permute.xlu0 1
        %518 = vperm.xlu0 %517, %v335
        %v519 = vpop.permute.xlu0 %518
        %521 = vset.pattern.permute.xlu0 1
        %522 = vperm.xlu0 %521, %v336
        %v523 = vpop.permute.xlu0 %522
        %525 = vset.pattern.permute.xlu0 1
        %526 = vperm.xlu0 %525, %v337
        %v527 = vpop.permute.xlu0 %526
        %529 = vset.pattern.permute.xlu0 1
        %530 = vperm.xlu0 %529, %v338
        %v531 = vpop.permute.xlu0 %530
        %533 = vset.pattern.permute.xlu0 1
        %534 = vperm.xlu0 %533, %v339
        %v535 = vpop.permute.xlu0 %534
        %537 = vset.pattern.permute.xlu0 1
        %538 = vperm.xlu0 %537, %v340
        %v539 = vpop.permute.xlu0 %538
        %541 = vset.pattern.permute.xlu0 1
        %542 = vperm.xlu0 %541, %v341
        %v543 = vpop.permute.xlu0 %542
        %545 = vset.pattern.permute.xlu0 1
        %546 = vperm.xlu0 %545, %v342
        %v547 = vpop.permute.xlu0 %546
        %549 = vset.pattern.permute.xlu0 1
        %550 = vperm.xlu0 %549, %v343
        %v551 = vpop.permute.xlu0 %550
        %553 = vset.pattern.permute.xlu0 1
        %554 = vperm.xlu0 %553, %v344
        %v555 = vpop.permute.xlu0 %554
        %557 = vset.pattern.permute.xlu0 1
        %558 = vperm.xlu0 %557, %v345
        %v559 = vpop.permute.xlu0 %558
        %561 = vset.pattern.permute.xlu0 1
        %562 = vperm.xlu0 %561, %v346
        %v563 = vpop.permute.xlu0 %562
        %565 = vset.pattern.permute.xlu0 1
        %566 = vperm.xlu0 %565, %v347
        %v567 = vpop.permute.xlu0 %566
        %569 = vset.pattern.permute.xlu0 1
        %570 = vperm.xlu0 %569, %v348
        %v571 = vpop.permute.xlu0 %570
        %573 = vset.pattern.permute.xlu0 1
        %574 = vperm.xlu0 %573, %v349
        %v575 = vpop.permute.xlu0 %574
        %v577 = vlaneseq
        %v578 = vshrl.u32 %v577, 7
        %v579 = vsub.s32 1, %v578
        %v580 = vrot.slane %v350, %v579
        %v581 = vmul.f32 %v515, %v580
        %v582 = vmul.f32 %v519, %v580
        %v583 = vmul.f32 %v523, %v580
        %v584 = vmul.f32 %v527, %v580
        %v585 = vmul.f32 %v531, %v580
        %v586 = vmul.f32 %v535, %v580
        %v587 = vmul.f32 %v539, %v580
        %v588 = vmul.f32 %v543, %v580
        %v589 = vmul.f32 %v547, %v580
        %v590 = vmul.f32 %v551, %v580
        %v591 = vmul.f32 %v555, %v580
        %v592 = vmul.f32 %v559, %v580
        %v593 = vmul.f32 %v563, %v580
        %v594 = vmul.f32 %v567, %v580
        %v595 = vmul.f32 %v571, %v580
        %v596 = vmul.f32 %v575, %v580
        %v597 = vadd.f32 %v497, %v581
        %v598 = vadd.f32 %v498, %v582
        %v599 = vadd.f32 %v499, %v583
        %v600 = vadd.f32 %v500, %v584
        %v601 = vadd.f32 %v501, %v585
        %v602 = vadd.f32 %v502, %v586
        %v603 = vadd.f32 %v503, %v587
        %v604 = vadd.f32 %v504, %v588
        %v605 = vadd.f32 %v505, %v589
        %v606 = vadd.f32 %v506, %v590
        %v607 = vadd.f32 %v507, %v591
        %v608 = vadd.f32 %v508, %v592
        %v609 = vadd.f32 %v509, %v593
        %v610 = vadd.f32 %v510, %v594
        %v611 = vadd.f32 %v511, %v595
        %v612 = vadd.f32 %v512, %v596
        %613 = vset.pattern.permute.xlu0 2
        %614 = vperm.xlu0 %613, %v334
        %v615 = vpop.permute.xlu0 %614
        %617 = vset.pattern.permute.xlu0 2
        %618 = vperm.xlu0 %617, %v335
        %v619 = vpop.permute.xlu0 %618
        %621 = vset.pattern.permute.xlu0 2
        %622 = vperm.xlu0 %621, %v336
        %v623 = vpop.permute.xlu0 %622
        %625 = vset.pattern.permute.xlu0 2
        %626 = vperm.xlu0 %625, %v337
        %v627 = vpop.permute.xlu0 %626
        %629 = vset.pattern.permute.xlu0 2
        %630 = vperm.xlu0 %629, %v338
        %v631 = vpop.permute.xlu0 %630
        %633 = vset.pattern.permute.xlu0 2
        %634 = vperm.xlu0 %633, %v339
        %v635 = vpop.permute.xlu0 %634
        %637 = vset.pattern.permute.xlu0 2
        %638 = vperm.xlu0 %637, %v340
        %v639 = vpop.permute.xlu0 %638
        %641 = vset.pattern.permute.xlu0 2
        %642 = vperm.xlu0 %641, %v341
        %v643 = vpop.permute.xlu0 %642
        %645 = vset.pattern.permute.xlu0 2
        %646 = vperm.xlu0 %645, %v342
        %v647 = vpop.permute.xlu0 %646
        %649 = vset.pattern.permute.xlu0 2
        %650 = vperm.xlu0 %649, %v343
        %v651 = vpop.permute.xlu0 %650
        %653 = vset.pattern.permute.xlu0 2
        %654 = vperm.xlu0 %653, %v344
        %v655 = vpop.permute.xlu0 %654
        %657 = vset.pattern.permute.xlu0 2
        %658 = vperm.xlu0 %657, %v345
        %v659 = vpop.permute.xlu0 %658
        %661 = vset.pattern.permute.xlu0 2
        %662 = vperm.xlu0 %661, %v346
        %v663 = vpop.permute.xlu0 %662
        %665 = vset.pattern.permute.xlu0 2
        %666 = vperm.xlu0 %665, %v347
        %v667 = vpop.permute.xlu0 %666
        %669 = vset.pattern.permute.xlu0 2
        %670 = vperm.xlu0 %669, %v348
        %v671 = vpop.permute.xlu0 %670
        %673 = vset.pattern.permute.xlu0 2
        %674 = vperm.xlu0 %673, %v349
        %v675 = vpop.permute.xlu0 %674
        %v677 = vlaneseq
        %v678 = vshrl.u32 %v677, 7
        %v679 = vsub.s32 2, %v678
        %v680 = vrot.slane %v350, %v679
        %v681 = vmul.f32 %v615, %v680
        %v682 = vmul.f32 %v619, %v680
        %v683 = vmul.f32 %v623, %v680
        %v684 = vmul.f32 %v627, %v680
        %v685 = vmul.f32 %v631, %v680
        %v686 = vmul.f32 %v635, %v680
        %v687 = vmul.f32 %v639, %v680
        %v688 = vmul.f32 %v643, %v680
        %v689 = vmul.f32 %v647, %v680
        %v690 = vmul.f32 %v651, %v680
        %v691 = vmul.f32 %v655, %v680
        %v692 = vmul.f32 %v659, %v680
        %v693 = vmul.f32 %v663, %v680
        %v694 = vmul.f32 %v667, %v680
        %v695 = vmul.f32 %v671, %v680
        %v696 = vmul.f32 %v675, %v680
        %v697 = vadd.f32 %v597, %v681
        %v698 = vadd.f32 %v598, %v682
        %v699 = vadd.f32 %v599, %v683
        %v700 = vadd.f32 %v600, %v684
        %v701 = vadd.f32 %v601, %v685
        %v702 = vadd.f32 %v602, %v686
        %v703 = vadd.f32 %v603, %v687
        %v704 = vadd.f32 %v604, %v688
        %v705 = vadd.f32 %v605, %v689
        %v706 = vadd.f32 %v606, %v690
        %v707 = vadd.f32 %v607, %v691
        %v708 = vadd.f32 %v608, %v692
        %v709 = vadd.f32 %v609, %v693
        %v710 = vadd.f32 %v610, %v694
        %v711 = vadd.f32 %v611, %v695
        %v712 = vadd.f32 %v612, %v696
        %v713 = vmax.f32 %v697, 0.0
        %v714 = vmax.f32 %v698, 0.0
        %v715 = vmax.f32 %v699, 0.0
        %v716 = vmax.f32 %v700, 0.0
        %v717 = vmax.f32 %v701, 0.0
        %v718 = vmax.f32 %v702, 0.0
        %v719 = vmax.f32 %v703, 0.0
        %v720 = vmax.f32 %v704, 0.0
        %v721 = vmax.f32 %v705, 0.0
        %v722 = vmax.f32 %v706, 0.0
        %v723 = vmax.f32 %v707, 0.0
        %v724 = vmax.f32 %v708, 0.0
        %v725 = vmax.f32 %v709, 0.0
        %v726 = vmax.f32 %v710, 0.0
        %v727 = vmax.f32 %v711, 0.0
        %v728 = vmax.f32 %v712, 0.0
        %v729 = vmul.f32 %v515, %v474
        %v730 = vmul.f32 %v519, %v474
        %v731 = vmul.f32 %v523, %v474
        %v732 = vmul.f32 %v527, %v474
        %v733 = vmul.f32 %v531, %v474
        %v734 = vmul.f32 %v535, %v474
        %v735 = vmul.f32 %v539, %v474
        %v736 = vmul.f32 %v543, %v474
        %v737 = vmul.f32 %v547, %v474
        %v738 = vmul.f32 %v551, %v474
        %v739 = vmul.f32 %v555, %v474
        %v740 = vmul.f32 %v559, %v474
        %v741 = vmul.f32 %v563, %v474
        %v742 = vmul.f32 %v567, %v474
        %v743 = vmul.f32 %v571, %v474
        %v744 = vmul.f32 %v575, %v474
        %v745 = vadd.f32 %v729, %v495
        %v746 = vadd.f32 %v730, %v495
        %v747 = vadd.f32 %v731, %v495
        %v748 = vadd.f32 %v732, %v495
        %v749 = vadd.f32 %v733, %v495
        %v750 = vadd.f32 %v734, %v495
        %v751 = vadd.f32 %v735, %v495
        %v752 = vadd.f32 %v736, %v495
        %v753 = vadd.f32 %v737, %v495
        %v754 = vadd.f32 %v738, %v495
        %v755 = vadd.f32 %v739, %v495
        %v756 = vadd.f32 %v740, %v495
        %v757 = vadd.f32 %v741, %v495
        %v758 = vadd.f32 %v742, %v495
        %v759 = vadd.f32 %v743, %v495
        %v760 = vadd.f32 %v744, %v495
        %v761 = vmul.f32 %v615, %v580
        %v762 = vmul.f32 %v619, %v580
        %v763 = vmul.f32 %v623, %v580
        %v764 = vmul.f32 %v627, %v580
        %v765 = vmul.f32 %v631, %v580
        %v766 = vmul.f32 %v635, %v580
        %v767 = vmul.f32 %v639, %v580
        %v768 = vmul.f32 %v643, %v580
        %v769 = vmul.f32 %v647, %v580
        %v770 = vmul.f32 %v651, %v580
        %v771 = vmul.f32 %v655, %v580
        %v772 = vmul.f32 %v659, %v580
        %v773 = vmul.f32 %v663, %v580
        %v774 = vmul.f32 %v667, %v580
        %v775 = vmul.f32 %v671, %v580
        %v776 = vmul.f32 %v675, %v580
        %v777 = vadd.f32 %v745, %v761
        %v778 = vadd.f32 %v746, %v762
        %v779 = vadd.f32 %v747, %v763
        %v780 = vadd.f32 %v748, %v764
        %v781 = vadd.f32 %v749, %v765
        %v782 = vadd.f32 %v750, %v766
        %v783 = vadd.f32 %v751, %v767
        %v784 = vadd.f32 %v752, %v768
        %v785 = vadd.f32 %v753, %v769
        %v786 = vadd.f32 %v754, %v770
        %v787 = vadd.f32 %v755, %v771
        %v788 = vadd.f32 %v756, %v772
        %v789 = vadd.f32 %v757, %v773
        %v790 = vadd.f32 %v758, %v774
        %v791 = vadd.f32 %v759, %v775
        %v792 = vadd.f32 %v760, %v776
        %793 = vset.pattern.permute.xlu0 3
        %794 = vperm.xlu0 %793, %v334
        %v795 = vpop.permute.xlu0 %794
        %797 = vset.pattern.permute.xlu0 3
        %798 = vperm.xlu0 %797, %v335
        %v799 = vpop.permute.xlu0 %798
        %801 = vset.pattern.permute.xlu0 3
        %802 = vperm.xlu0 %801, %v336
        %v803 = vpop.permute.xlu0 %802
        %805 = vset.pattern.permute.xlu0 3
        %806 = vperm.xlu0 %805, %v337
        %v807 = vpop.permute.xlu0 %806
        %809 = vset.pattern.permute.xlu0 3
        %810 = vperm.xlu0 %809, %v338
        %v811 = vpop.permute.xlu0 %810
        %813 = vset.pattern.permute.xlu0 3
        %814 = vperm.xlu0 %813, %v339
        %v815 = vpop.permute.xlu0 %814
        %817 = vset.pattern.permute.xlu0 3
        %818 = vperm.xlu0 %817, %v340
        %v819 = vpop.permute.xlu0 %818
        %821 = vset.pattern.permute.xlu0 3
        %822 = vperm.xlu0 %821, %v341
        %v823 = vpop.permute.xlu0 %822
        %825 = vset.pattern.permute.xlu0 3
        %826 = vperm.xlu0 %825, %v342
        %v827 = vpop.permute.xlu0 %826
        %829 = vset.pattern.permute.xlu0 3
        %830 = vperm.xlu0 %829, %v343
        %v831 = vpop.permute.xlu0 %830
        %833 = vset.pattern.permute.xlu0 3
        %834 = vperm.xlu0 %833, %v344
        %v835 = vpop.permute.xlu0 %834
        %837 = vset.pattern.permute.xlu0 3
        %838 = vperm.xlu0 %837, %v345
        %v839 = vpop.permute.xlu0 %838
        %841 = vset.pattern.permute.xlu0 3
        %842 = vperm.xlu0 %841, %v346
        %v843 = vpop.permute.xlu0 %842
        %845 = vset.pattern.permute.xlu0 3
        %846 = vperm.xlu0 %845, %v347
        %v847 = vpop.permute.xlu0 %846
        %849 = vset.pattern.permute.xlu0 3
        %850 = vperm.xlu0 %849, %v348
        %v851 = vpop.permute.xlu0 %850
        %853 = vset.pattern.permute.xlu0 3
        %854 = vperm.xlu0 %853, %v349
        %v855 = vpop.permute.xlu0 %854
        %v857 = vmul.f32 %v795, %v680
        %v858 = vmul.f32 %v799, %v680
        %v859 = vmul.f32 %v803, %v680
        %v860 = vmul.f32 %v807, %v680
        %v861 = vmul.f32 %v811, %v680
        %v862 = vmul.f32 %v815, %v680
        %v863 = vmul.f32 %v819, %v680
        %v864 = vmul.f32 %v823, %v680
        %v865 = vmul.f32 %v827, %v680
        %v866 = vmul.f32 %v831, %v680
        %v867 = vmul.f32 %v835, %v680
        %v868 = vmul.f32 %v839, %v680
        %v869 = vmul.f32 %v843, %v680
        %v870 = vmul.f32 %v847, %v680
        %v871 = vmul.f32 %v851, %v680
        %v872 = vmul.f32 %v855, %v680
        %v873 = vadd.f32 %v777, %v857
        %v874 = vadd.f32 %v778, %v858
        %v875 = vadd.f32 %v779, %v859
        %v876 = vadd.f32 %v780, %v860
        %v877 = vadd.f32 %v781, %v861
        %v878 = vadd.f32 %v782, %v862
        %v879 = vadd.f32 %v783, %v863
        %v880 = vadd.f32 %v784, %v864
        %v881 = vadd.f32 %v785, %v865
        %v882 = vadd.f32 %v786, %v866
        %v883 = vadd.f32 %v787, %v867
        %v884 = vadd.f32 %v788, %v868
        %v885 = vadd.f32 %v789, %v869
        %v886 = vadd.f32 %v790, %v870
        %v887 = vadd.f32 %v791, %v871
        %v888 = vadd.f32 %v792, %v872
        %v889 = vmax.f32 %v873, 0.0
        %v890 = vmax.f32 %v874, 0.0
        %v891 = vmax.f32 %v875, 0.0
        %v892 = vmax.f32 %v876, 0.0
        %v893 = vmax.f32 %v877, 0.0
        %v894 = vmax.f32 %v878, 0.0
        %v895 = vmax.f32 %v879, 0.0
        %v896 = vmax.f32 %v880, 0.0
        %v897 = vmax.f32 %v881, 0.0
        %v898 = vmax.f32 %v882, 0.0
        %v899 = vmax.f32 %v883, 0.0
        %v900 = vmax.f32 %v884, 0.0
        %v901 = vmax.f32 %v885, 0.0
        %v902 = vmax.f32 %v886, 0.0
        %v903 = vmax.f32 %v887, 0.0
        %v904 = vmax.f32 %v888, 0.0
        %v905 = vmul.f32 %v615, %v474
        %v906 = vmul.f32 %v619, %v474
        %v907 = vmul.f32 %v623, %v474
        %v908 = vmul.f32 %v627, %v474
        %v909 = vmul.f32 %v631, %v474
        %v910 = vmul.f32 %v635, %v474
        %v911 = vmul.f32 %v639, %v474
        %v912 = vmul.f32 %v643, %v474
        %v913 = vmul.f32 %v647, %v474
        %v914 = vmul.f32 %v651, %v474
        %v915 = vmul.f32 %v655, %v474
        %v916 = vmul.f32 %v659, %v474
        %v917 = vmul.f32 %v663, %v474
        %v918 = vmul.f32 %v667, %v474
        %v919 = vmul.f32 %v671, %v474
        %v920 = vmul.f32 %v675, %v474
        %v921 = vadd.f32 %v905, %v495
        %v922 = vadd.f32 %v906, %v495
        %v923 = vadd.f32 %v907, %v495
        %v924 = vadd.f32 %v908, %v495
        %v925 = vadd.f32 %v909, %v495
        %v926 = vadd.f32 %v910, %v495
        %v927 = vadd.f32 %v911, %v495
        %v928 = vadd.f32 %v912, %v495
        %v929 = vadd.f32 %v913, %v495
        %v930 = vadd.f32 %v914, %v495
        %v931 = vadd.f32 %v915, %v495
        %v932 = vadd.f32 %v916, %v495
        %v933 = vadd.f32 %v917, %v495
        %v934 = vadd.f32 %v918, %v495
        %v935 = vadd.f32 %v919, %v495
        %v936 = vadd.f32 %v920, %v495
        %v937 = vmul.f32 %v795, %v580
        %v938 = vmul.f32 %v799, %v580
        %v939 = vmul.f32 %v803, %v580
        %v940 = vmul.f32 %v807, %v580
        %v941 = vmul.f32 %v811, %v580
        %v942 = vmul.f32 %v815, %v580
        %v943 = vmul.f32 %v819, %v580
        %v944 = vmul.f32 %v823, %v580
        %v945 = vmul.f32 %v827, %v580
        %v946 = vmul.f32 %v831, %v580
        %v947 = vmul.f32 %v835, %v580
        %v948 = vmul.f32 %v839, %v580
        %v949 = vmul.f32 %v843, %v580
        %v950 = vmul.f32 %v847, %v580
        %v951 = vmul.f32 %v851, %v580
        %v952 = vmul.f32 %v855, %v580
        %v953 = vadd.f32 %v921, %v937
        %v954 = vadd.f32 %v922, %v938
        %v955 = vadd.f32 %v923, %v939
        %v956 = vadd.f32 %v924, %v940
        %v957 = vadd.f32 %v925, %v941
        %v958 = vadd.f32 %v926, %v942
        %v959 = vadd.f32 %v927, %v943
        %v960 = vadd.f32 %v928, %v944
        %v961 = vadd.f32 %v929, %v945
        %v962 = vadd.f32 %v930, %v946
        %v963 = vadd.f32 %v931, %v947
        %v964 = vadd.f32 %v932, %v948
        %v965 = vadd.f32 %v933, %v949
        %v966 = vadd.f32 %v934, %v950
        %v967 = vadd.f32 %v935, %v951
        %v968 = vadd.f32 %v936, %v952
        %969 = vset.pattern.permute.xlu0 4
        %970 = vperm.xlu0 %969, %v334
        %v971 = vpop.permute.xlu0 %970
        %973 = vset.pattern.permute.xlu0 4
        %974 = vperm.xlu0 %973, %v335
        %v975 = vpop.permute.xlu0 %974
        %977 = vset.pattern.permute.xlu0 4
        %978 = vperm.xlu0 %977, %v336
        %v979 = vpop.permute.xlu0 %978
        %981 = vset.pattern.permute.xlu0 4
        %982 = vperm.xlu0 %981, %v337
        %v983 = vpop.permute.xlu0 %982
        %985 = vset.pattern.permute.xlu0 4
        %986 = vperm.xlu0 %985, %v338
        %v987 = vpop.permute.xlu0 %986
        %989 = vset.pattern.permute.xlu0 4
        %990 = vperm.xlu0 %989, %v339
        %v991 = vpop.permute.xlu0 %990
        %993 = vset.pattern.permute.xlu0 4
        %994 = vperm.xlu0 %993, %v340
        %v995 = vpop.permute.xlu0 %994
        %997 = vset.pattern.permute.xlu0 4
        %998 = vperm.xlu0 %997, %v341
        %v999 = vpop.permute.xlu0 %998
        %1001 = vset.pattern.permute.xlu0 4
        %1002 = vperm.xlu0 %1001, %v342
        %v1003 = vpop.permute.xlu0 %1002
        %1005 = vset.pattern.permute.xlu0 4
        %1006 = vperm.xlu0 %1005, %v343
        %v1007 = vpop.permute.xlu0 %1006
        %1009 = vset.pattern.permute.xlu0 4
        %1010 = vperm.xlu0 %1009, %v344
        %v1011 = vpop.permute.xlu0 %1010
        %1013 = vset.pattern.permute.xlu0 4
        %1014 = vperm.xlu0 %1013, %v345
        %v1015 = vpop.permute.xlu0 %1014
        %1017 = vset.pattern.permute.xlu0 4
        %1018 = vperm.xlu0 %1017, %v346
        %v1019 = vpop.permute.xlu0 %1018
        %1021 = vset.pattern.permute.xlu0 4
        %1022 = vperm.xlu0 %1021, %v347
        %v1023 = vpop.permute.xlu0 %1022
        %1025 = vset.pattern.permute.xlu0 4
        %1026 = vperm.xlu0 %1025, %v348
        %v1027 = vpop.permute.xlu0 %1026
        %1029 = vset.pattern.permute.xlu0 4
        %1030 = vperm.xlu0 %1029, %v349
        %v1031 = vpop.permute.xlu0 %1030
        %v1033 = vmul.f32 %v971, %v680
        %v1034 = vmul.f32 %v975, %v680
        %v1035 = vmul.f32 %v979, %v680
        %v1036 = vmul.f32 %v983, %v680
        %v1037 = vmul.f32 %v987, %v680
        %v1038 = vmul.f32 %v991, %v680
        %v1039 = vmul.f32 %v995, %v680
        %v1040 = vmul.f32 %v999, %v680
        %v1041 = vmul.f32 %v1003, %v680
        %v1042 = vmul.f32 %v1007, %v680
        %v1043 = vmul.f32 %v1011, %v680
        %v1044 = vmul.f32 %v1015, %v680
        %v1045 = vmul.f32 %v1019, %v680
        %v1046 = vmul.f32 %v1023, %v680
        %v1047 = vmul.f32 %v1027, %v680
        %v1048 = vmul.f32 %v1031, %v680
        %v1049 = vadd.f32 %v953, %v1033
        %v1050 = vadd.f32 %v954, %v1034
        %v1051 = vadd.f32 %v955, %v1035
        %v1052 = vadd.f32 %v956, %v1036
        %v1053 = vadd.f32 %v957, %v1037
        %v1054 = vadd.f32 %v958, %v1038
        %v1055 = vadd.f32 %v959, %v1039
        %v1056 = vadd.f32 %v960, %v1040
        %v1057 = vadd.f32 %v961, %v1041
        %v1058 = vadd.f32 %v962, %v1042
        %v1059 = vadd.f32 %v963, %v1043
        %v1060 = vadd.f32 %v964, %v1044
        %v1061 = vadd.f32 %v965, %v1045
        %v1062 = vadd.f32 %v966, %v1046
        %v1063 = vadd.f32 %v967, %v1047
        %v1064 = vadd.f32 %v968, %v1048
        %v1065 = vmax.f32 %v1049, 0.0
        %v1066 = vmax.f32 %v1050, 0.0
        %v1067 = vmax.f32 %v1051, 0.0
        %v1068 = vmax.f32 %v1052, 0.0
        %v1069 = vmax.f32 %v1053, 0.0
        %v1070 = vmax.f32 %v1054, 0.0
        %v1071 = vmax.f32 %v1055, 0.0
        %v1072 = vmax.f32 %v1056, 0.0
        %v1073 = vmax.f32 %v1057, 0.0
        %v1074 = vmax.f32 %v1058, 0.0
        %v1075 = vmax.f32 %v1059, 0.0
        %v1076 = vmax.f32 %v1060, 0.0
        %v1077 = vmax.f32 %v1061, 0.0
        %v1078 = vmax.f32 %v1062, 0.0
        %v1079 = vmax.f32 %v1063, 0.0
        %v1080 = vmax.f32 %v1064, 0.0
        %v1081 = vmul.f32 %v795, %v474
        %v1082 = vmul.f32 %v799, %v474
        %v1083 = vmul.f32 %v803, %v474
        %v1084 = vmul.f32 %v807, %v474
        %v1085 = vmul.f32 %v811, %v474
        %v1086 = vmul.f32 %v815, %v474
        %v1087 = vmul.f32 %v819, %v474
        %v1088 = vmul.f32 %v823, %v474
        %v1089 = vmul.f32 %v827, %v474
        %v1090 = vmul.f32 %v831, %v474
        %v1091 = vmul.f32 %v835, %v474
        %v1092 = vmul.f32 %v839, %v474
        %v1093 = vmul.f32 %v843, %v474
        %v1094 = vmul.f32 %v847, %v474
        %v1095 = vmul.f32 %v851, %v474
        %v1096 = vmul.f32 %v855, %v474
        %v1097 = vadd.f32 %v1081, %v495
        %v1098 = vadd.f32 %v1082, %v495
        %v1099 = vadd.f32 %v1083, %v495
        %v1100 = vadd.f32 %v1084, %v495
        %v1101 = vadd.f32 %v1085, %v495
        %v1102 = vadd.f32 %v1086, %v495
        %v1103 = vadd.f32 %v1087, %v495
        %v1104 = vadd.f32 %v1088, %v495
        %v1105 = vadd.f32 %v1089, %v495
        %v1106 = vadd.f32 %v1090, %v495
        %v1107 = vadd.f32 %v1091, %v495
        %v1108 = vadd.f32 %v1092, %v495
        %v1109 = vadd.f32 %v1093, %v495
        %v1110 = vadd.f32 %v1094, %v495
        %v1111 = vadd.f32 %v1095, %v495
        %v1112 = vadd.f32 %v1096, %v495
        %v1113 = vmul.f32 %v971, %v580
        %v1114 = vmul.f32 %v975, %v580
        %v1115 = vmul.f32 %v979, %v580
        %v1116 = vmul.f32 %v983, %v580
        %v1117 = vmul.f32 %v987, %v580
        %v1118 = vmul.f32 %v991, %v580
        %v1119 = vmul.f32 %v995, %v580
        %v1120 = vmul.f32 %v999, %v580
        %v1121 = vmul.f32 %v1003, %v580
        %v1122 = vmul.f32 %v1007, %v580
        %v1123 = vmul.f32 %v1011, %v580
        %v1124 = vmul.f32 %v1015, %v580
        %v1125 = vmul.f32 %v1019, %v580
        %v1126 = vmul.f32 %v1023, %v580
        %v1127 = vmul.f32 %v1027, %v580
        %v1128 = vmul.f32 %v1031, %v580
        %v1129 = vadd.f32 %v1097, %v1113
        %v1130 = vadd.f32 %v1098, %v1114
        %v1131 = vadd.f32 %v1099, %v1115
        %v1132 = vadd.f32 %v1100, %v1116
        %v1133 = vadd.f32 %v1101, %v1117
        %v1134 = vadd.f32 %v1102, %v1118
        %v1135 = vadd.f32 %v1103, %v1119
        %v1136 = vadd.f32 %v1104, %v1120
        %v1137 = vadd.f32 %v1105, %v1121
        %v1138 = vadd.f32 %v1106, %v1122
        %v1139 = vadd.f32 %v1107, %v1123
        %v1140 = vadd.f32 %v1108, %v1124
        %v1141 = vadd.f32 %v1109, %v1125
        %v1142 = vadd.f32 %v1110, %v1126
        %v1143 = vadd.f32 %v1111, %v1127
        %v1144 = vadd.f32 %v1112, %v1128
        %1145 = vset.pattern.permute.xlu0 5
        %1146 = vperm.xlu0 %1145, %v334
        %v1147 = vpop.permute.xlu0 %1146
        %1149 = vset.pattern.permute.xlu0 5
        %1150 = vperm.xlu0 %1149, %v335
        %v1151 = vpop.permute.xlu0 %1150
        %1153 = vset.pattern.permute.xlu0 5
        %1154 = vperm.xlu0 %1153, %v336
        %v1155 = vpop.permute.xlu0 %1154
        %1157 = vset.pattern.permute.xlu0 5
        %1158 = vperm.xlu0 %1157, %v337
        %v1159 = vpop.permute.xlu0 %1158
        %1161 = vset.pattern.permute.xlu0 5
        %1162 = vperm.xlu0 %1161, %v338
        %v1163 = vpop.permute.xlu0 %1162
        %1165 = vset.pattern.permute.xlu0 5
        %1166 = vperm.xlu0 %1165, %v339
        %v1167 = vpop.permute.xlu0 %1166
        %1169 = vset.pattern.permute.xlu0 5
        %1170 = vperm.xlu0 %1169, %v340
        %v1171 = vpop.permute.xlu0 %1170
        %1173 = vset.pattern.permute.xlu0 5
        %1174 = vperm.xlu0 %1173, %v341
        %v1175 = vpop.permute.xlu0 %1174
        %1177 = vset.pattern.permute.xlu0 5
        %1178 = vperm.xlu0 %1177, %v342
        %v1179 = vpop.permute.xlu0 %1178
        %1181 = vset.pattern.permute.xlu0 5
        %1182 = vperm.xlu0 %1181, %v343
        %v1183 = vpop.permute.xlu0 %1182
        %1185 = vset.pattern.permute.xlu0 5
        %1186 = vperm.xlu0 %1185, %v344
        %v1187 = vpop.permute.xlu0 %1186
        %1189 = vset.pattern.permute.xlu0 5
        %1190 = vperm.xlu0 %1189, %v345
        %v1191 = vpop.permute.xlu0 %1190
        %1193 = vset.pattern.permute.xlu0 5
        %1194 = vperm.xlu0 %1193, %v346
        %v1195 = vpop.permute.xlu0 %1194
        %1197 = vset.pattern.permute.xlu0 5
        %1198 = vperm.xlu0 %1197, %v347
        %v1199 = vpop.permute.xlu0 %1198
        %1201 = vset.pattern.permute.xlu0 5
        %1202 = vperm.xlu0 %1201, %v348
        %v1203 = vpop.permute.xlu0 %1202
        %1205 = vset.pattern.permute.xlu0 5
        %1206 = vperm.xlu0 %1205, %v349
        %v1207 = vpop.permute.xlu0 %1206
        %v1209 = vmul.f32 %v1147, %v680
        %v1210 = vmul.f32 %v1151, %v680
        %v1211 = vmul.f32 %v1155, %v680
        %v1212 = vmul.f32 %v1159, %v680
        %v1213 = vmul.f32 %v1163, %v680
        %v1214 = vmul.f32 %v1167, %v680
        %v1215 = vmul.f32 %v1171, %v680
        %v1216 = vmul.f32 %v1175, %v680
        %v1217 = vmul.f32 %v1179, %v680
        %v1218 = vmul.f32 %v1183, %v680
        %v1219 = vmul.f32 %v1187, %v680
        %v1220 = vmul.f32 %v1191, %v680
        %v1221 = vmul.f32 %v1195, %v680
        %v1222 = vmul.f32 %v1199, %v680
        %v1223 = vmul.f32 %v1203, %v680
        %v1224 = vmul.f32 %v1207, %v680
        %v1225 = vadd.f32 %v1129, %v1209
        %v1226 = vadd.f32 %v1130, %v1210
        %v1227 = vadd.f32 %v1131, %v1211
        %v1228 = vadd.f32 %v1132, %v1212
        %v1229 = vadd.f32 %v1133, %v1213
        %v1230 = vadd.f32 %v1134, %v1214
        %v1231 = vadd.f32 %v1135, %v1215
        %v1232 = vadd.f32 %v1136, %v1216
        %v1233 = vadd.f32 %v1137, %v1217
        %v1234 = vadd.f32 %v1138, %v1218
        %v1235 = vadd.f32 %v1139, %v1219
        %v1236 = vadd.f32 %v1140, %v1220
        %v1237 = vadd.f32 %v1141, %v1221
        %v1238 = vadd.f32 %v1142, %v1222
        %v1239 = vadd.f32 %v1143, %v1223
        %v1240 = vadd.f32 %v1144, %v1224
        %v1241 = vmax.f32 %v1225, 0.0
        %v1242 = vmax.f32 %v1226, 0.0
        %v1243 = vmax.f32 %v1227, 0.0
        %v1244 = vmax.f32 %v1228, 0.0
        %v1245 = vmax.f32 %v1229, 0.0
        %v1246 = vmax.f32 %v1230, 0.0
        %v1247 = vmax.f32 %v1231, 0.0
        %v1248 = vmax.f32 %v1232, 0.0
        %v1249 = vmax.f32 %v1233, 0.0
        %v1250 = vmax.f32 %v1234, 0.0
        %v1251 = vmax.f32 %v1235, 0.0
        %v1252 = vmax.f32 %v1236, 0.0
        %v1253 = vmax.f32 %v1237, 0.0
        %v1254 = vmax.f32 %v1238, 0.0
        %v1255 = vmax.f32 %v1239, 0.0
        %v1256 = vmax.f32 %v1240, 0.0
        %v1257 = vmul.f32 %v971, %v474
        %v1258 = vmul.f32 %v975, %v474
        %v1259 = vmul.f32 %v979, %v474
        %v1260 = vmul.f32 %v983, %v474
        %v1261 = vmul.f32 %v987, %v474
        %v1262 = vmul.f32 %v991, %v474
        %v1263 = vmul.f32 %v995, %v474
        %v1264 = vmul.f32 %v999, %v474
        %v1265 = vmul.f32 %v1003, %v474
        %v1266 = vmul.f32 %v1007, %v474
        %v1267 = vmul.f32 %v1011, %v474
        %v1268 = vmul.f32 %v1015, %v474
        %v1269 = vmul.f32 %v1019, %v474
        %v1270 = vmul.f32 %v1023, %v474
        %v1271 = vmul.f32 %v1027, %v474
        %v1272 = vmul.f32 %v1031, %v474
        %v1273 = vadd.f32 %v1257, %v495
        %v1274 = vadd.f32 %v1258, %v495
        %v1275 = vadd.f32 %v1259, %v495
        %v1276 = vadd.f32 %v1260, %v495
        %v1277 = vadd.f32 %v1261, %v495
        %v1278 = vadd.f32 %v1262, %v495
        %v1279 = vadd.f32 %v1263, %v495
        %v1280 = vadd.f32 %v1264, %v495
        %v1281 = vadd.f32 %v1265, %v495
        %v1282 = vadd.f32 %v1266, %v495
        %v1283 = vadd.f32 %v1267, %v495
        %v1284 = vadd.f32 %v1268, %v495
        %v1285 = vadd.f32 %v1269, %v495
        %v1286 = vadd.f32 %v1270, %v495
        %v1287 = vadd.f32 %v1271, %v495
        %v1288 = vadd.f32 %v1272, %v495
        %v1289 = vmul.f32 %v1147, %v580
        %v1290 = vmul.f32 %v1151, %v580
        %v1291 = vmul.f32 %v1155, %v580
        %v1292 = vmul.f32 %v1159, %v580
        %v1293 = vmul.f32 %v1163, %v580
        %v1294 = vmul.f32 %v1167, %v580
        %v1295 = vmul.f32 %v1171, %v580
        %v1296 = vmul.f32 %v1175, %v580
        %v1297 = vmul.f32 %v1179, %v580
        %v1298 = vmul.f32 %v1183, %v580
        %v1299 = vmul.f32 %v1187, %v580
        %v1300 = vmul.f32 %v1191, %v580
        %v1301 = vmul.f32 %v1195, %v580
        %v1302 = vmul.f32 %v1199, %v580
        %v1303 = vmul.f32 %v1203, %v580
        %v1304 = vmul.f32 %v1207, %v580
        %v1305 = vadd.f32 %v1273, %v1289
        %v1306 = vadd.f32 %v1274, %v1290
        %v1307 = vadd.f32 %v1275, %v1291
        %v1308 = vadd.f32 %v1276, %v1292
        %v1309 = vadd.f32 %v1277, %v1293
        %v1310 = vadd.f32 %v1278, %v1294
        %v1311 = vadd.f32 %v1279, %v1295
        %v1312 = vadd.f32 %v1280, %v1296
        %v1313 = vadd.f32 %v1281, %v1297
        %v1314 = vadd.f32 %v1282, %v1298
        %v1315 = vadd.f32 %v1283, %v1299
        %v1316 = vadd.f32 %v1284, %v1300
        %v1317 = vadd.f32 %v1285, %v1301
        %v1318 = vadd.f32 %v1286, %v1302
        %v1319 = vadd.f32 %v1287, %v1303
        %v1320 = vadd.f32 %v1288, %v1304
        %1321 = vset.pattern.permute.xlu0 6
        %1322 = vperm.xlu0 %1321, %v334
        %v1323 = vpop.permute.xlu0 %1322
        %1325 = vset.pattern.permute.xlu0 6
        %1326 = vperm.xlu0 %1325, %v335
        %v1327 = vpop.permute.xlu0 %1326
        %1329 = vset.pattern.permute.xlu0 6
        %1330 = vperm.xlu0 %1329, %v336
        %v1331 = vpop.permute.xlu0 %1330
        %1333 = vset.pattern.permute.xlu0 6
        %1334 = vperm.xlu0 %1333, %v337
        %v1335 = vpop.permute.xlu0 %1334
        %1337 = vset.pattern.permute.xlu0 6
        %1338 = vperm.xlu0 %1337, %v338
        %v1339 = vpop.permute.xlu0 %1338
        %1341 = vset.pattern.permute.xlu0 6
        %1342 = vperm.xlu0 %1341, %v339
        %v1343 = vpop.permute.xlu0 %1342
        %1345 = vset.pattern.permute.xlu0 6
        %1346 = vperm.xlu0 %1345, %v340
        %v1347 = vpop.permute.xlu0 %1346
        %1349 = vset.pattern.permute.xlu0 6
        %1350 = vperm.xlu0 %1349, %v341
        %v1351 = vpop.permute.xlu0 %1350
        %1353 = vset.pattern.permute.xlu0 6
        %1354 = vperm.xlu0 %1353, %v342
        %v1355 = vpop.permute.xlu0 %1354
        %1357 = vset.pattern.permute.xlu0 6
        %1358 = vperm.xlu0 %1357, %v343
        %v1359 = vpop.permute.xlu0 %1358
        %1361 = vset.pattern.permute.xlu0 6
        %1362 = vperm.xlu0 %1361, %v344
        %v1363 = vpop.permute.xlu0 %1362
        %1365 = vset.pattern.permute.xlu0 6
        %1366 = vperm.xlu0 %1365, %v345
        %v1367 = vpop.permute.xlu0 %1366
        %1369 = vset.pattern.permute.xlu0 6
        %1370 = vperm.xlu0 %1369, %v346
        %v1371 = vpop.permute.xlu0 %1370
        %1373 = vset.pattern.permute.xlu0 6
        %1374 = vperm.xlu0 %1373, %v347
        %v1375 = vpop.permute.xlu0 %1374
        %1377 = vset.pattern.permute.xlu0 6
        %1378 = vperm.xlu0 %1377, %v348
        %v1379 = vpop.permute.xlu0 %1378
        %1381 = vset.pattern.permute.xlu0 6
        %1382 = vperm.xlu0 %1381, %v349
        %v1383 = vpop.permute.xlu0 %1382
        %v1385 = vmul.f32 %v1323, %v680
        %v1386 = vmul.f32 %v1327, %v680
        %v1387 = vmul.f32 %v1331, %v680
        %v1388 = vmul.f32 %v1335, %v680
        %v1389 = vmul.f32 %v1339, %v680
        %v1390 = vmul.f32 %v1343, %v680
        %v1391 = vmul.f32 %v1347, %v680
        %v1392 = vmul.f32 %v1351, %v680
        %v1393 = vmul.f32 %v1355, %v680
        %v1394 = vmul.f32 %v1359, %v680
        %v1395 = vmul.f32 %v1363, %v680
        %v1396 = vmul.f32 %v1367, %v680
        %v1397 = vmul.f32 %v1371, %v680
        %v1398 = vmul.f32 %v1375, %v680
        %v1399 = vmul.f32 %v1379, %v680
        %v1400 = vmul.f32 %v1383, %v680
        %v1401 = vadd.f32 %v1305, %v1385
        %v1402 = vadd.f32 %v1306, %v1386
        %v1403 = vadd.f32 %v1307, %v1387
        %v1404 = vadd.f32 %v1308, %v1388
        %v1405 = vadd.f32 %v1309, %v1389
        %v1406 = vadd.f32 %v1310, %v1390
        %v1407 = vadd.f32 %v1311, %v1391
        %v1408 = vadd.f32 %v1312, %v1392
        %v1409 = vadd.f32 %v1313, %v1393
        %v1410 = vadd.f32 %v1314, %v1394
        %v1411 = vadd.f32 %v1315, %v1395
        %v1412 = vadd.f32 %v1316, %v1396
        %v1413 = vadd.f32 %v1317, %v1397
        %v1414 = vadd.f32 %v1318, %v1398
        %v1415 = vadd.f32 %v1319, %v1399
        %v1416 = vadd.f32 %v1320, %v1400
        %v1417 = vmax.f32 %v1401, 0.0
        %v1418 = vmax.f32 %v1402, 0.0
        %v1419 = vmax.f32 %v1403, 0.0
        %v1420 = vmax.f32 %v1404, 0.0
        %v1421 = vmax.f32 %v1405, 0.0
        %v1422 = vmax.f32 %v1406, 0.0
        %v1423 = vmax.f32 %v1407, 0.0
        %v1424 = vmax.f32 %v1408, 0.0
        %v1425 = vmax.f32 %v1409, 0.0
        %v1426 = vmax.f32 %v1410, 0.0
        %v1427 = vmax.f32 %v1411, 0.0
        %v1428 = vmax.f32 %v1412, 0.0
        %v1429 = vmax.f32 %v1413, 0.0
        %v1430 = vmax.f32 %v1414, 0.0
        %v1431 = vmax.f32 %v1415, 0.0
        %v1432 = vmax.f32 %v1416, 0.0
        %v1433 = vmul.f32 %v1147, %v474
        %v1434 = vmul.f32 %v1151, %v474
        %v1435 = vmul.f32 %v1155, %v474
        %v1436 = vmul.f32 %v1159, %v474
        %v1437 = vmul.f32 %v1163, %v474
        %v1438 = vmul.f32 %v1167, %v474
        %v1439 = vmul.f32 %v1171, %v474
        %v1440 = vmul.f32 %v1175, %v474
        %v1441 = vmul.f32 %v1179, %v474
        %v1442 = vmul.f32 %v1183, %v474
        %v1443 = vmul.f32 %v1187, %v474
        %v1444 = vmul.f32 %v1191, %v474
        %v1445 = vmul.f32 %v1195, %v474
        %v1446 = vmul.f32 %v1199, %v474
        %v1447 = vmul.f32 %v1203, %v474
        %v1448 = vmul.f32 %v1207, %v474
        %v1449 = vadd.f32 %v1433, %v495
        %v1450 = vadd.f32 %v1434, %v495
        %v1451 = vadd.f32 %v1435, %v495
        %v1452 = vadd.f32 %v1436, %v495
        %v1453 = vadd.f32 %v1437, %v495
        %v1454 = vadd.f32 %v1438, %v495
        %v1455 = vadd.f32 %v1439, %v495
        %v1456 = vadd.f32 %v1440, %v495
        %v1457 = vadd.f32 %v1441, %v495
        %v1458 = vadd.f32 %v1442, %v495
        %v1459 = vadd.f32 %v1443, %v495
        %v1460 = vadd.f32 %v1444, %v495
        %v1461 = vadd.f32 %v1445, %v495
        %v1462 = vadd.f32 %v1446, %v495
        %v1463 = vadd.f32 %v1447, %v495
        %v1464 = vadd.f32 %v1448, %v495
        %v1465 = vmul.f32 %v1323, %v580
        %v1466 = vmul.f32 %v1327, %v580
        %v1467 = vmul.f32 %v1331, %v580
        %v1468 = vmul.f32 %v1335, %v580
        %v1469 = vmul.f32 %v1339, %v580
        %v1470 = vmul.f32 %v1343, %v580
        %v1471 = vmul.f32 %v1347, %v580
        %v1472 = vmul.f32 %v1351, %v580
        %v1473 = vmul.f32 %v1355, %v580
        %v1474 = vmul.f32 %v1359, %v580
        %v1475 = vmul.f32 %v1363, %v580
        %v1476 = vmul.f32 %v1367, %v580
        %v1477 = vmul.f32 %v1371, %v580
        %v1478 = vmul.f32 %v1375, %v580
        %v1479 = vmul.f32 %v1379, %v580
        %v1480 = vmul.f32 %v1383, %v580
        %v1481 = vadd.f32 %v1449, %v1465
        %v1482 = vadd.f32 %v1450, %v1466
        %v1483 = vadd.f32 %v1451, %v1467
        %v1484 = vadd.f32 %v1452, %v1468
        %v1485 = vadd.f32 %v1453, %v1469
        %v1486 = vadd.f32 %v1454, %v1470
        %v1487 = vadd.f32 %v1455, %v1471
        %v1488 = vadd.f32 %v1456, %v1472
        %v1489 = vadd.f32 %v1457, %v1473
        %v1490 = vadd.f32 %v1458, %v1474
        %v1491 = vadd.f32 %v1459, %v1475
        %v1492 = vadd.f32 %v1460, %v1476
        %v1493 = vadd.f32 %v1461, %v1477
        %v1494 = vadd.f32 %v1462, %v1478
        %v1495 = vadd.f32 %v1463, %v1479
        %v1496 = vadd.f32 %v1464, %v1480
        %1497 = vset.pattern.permute.xlu0 7
        %1498 = vperm.xlu0 %1497, %v334
        %v1499 = vpop.permute.xlu0 %1498
        %1501 = vset.pattern.permute.xlu0 7
        %1502 = vperm.xlu0 %1501, %v335
        %v1503 = vpop.permute.xlu0 %1502
        %1505 = vset.pattern.permute.xlu0 7
        %1506 = vperm.xlu0 %1505, %v336
        %v1507 = vpop.permute.xlu0 %1506
        %1509 = vset.pattern.permute.xlu0 7
        %1510 = vperm.xlu0 %1509, %v337
        %v1511 = vpop.permute.xlu0 %1510
        %1513 = vset.pattern.permute.xlu0 7
        %1514 = vperm.xlu0 %1513, %v338
        %v1515 = vpop.permute.xlu0 %1514
        %1517 = vset.pattern.permute.xlu0 7
        %1518 = vperm.xlu0 %1517, %v339
        %v1519 = vpop.permute.xlu0 %1518
        %1521 = vset.pattern.permute.xlu0 7
        %1522 = vperm.xlu0 %1521, %v340
        %v1523 = vpop.permute.xlu0 %1522
        %1525 = vset.pattern.permute.xlu0 7
        %1526 = vperm.xlu0 %1525, %v341
        %v1527 = vpop.permute.xlu0 %1526
        %1529 = vset.pattern.permute.xlu0 7
        %1530 = vperm.xlu0 %1529, %v342
        %v1531 = vpop.permute.xlu0 %1530
        %1533 = vset.pattern.permute.xlu0 7
        %1534 = vperm.xlu0 %1533, %v343
        %v1535 = vpop.permute.xlu0 %1534
        %1537 = vset.pattern.permute.xlu0 7
        %1538 = vperm.xlu0 %1537, %v344
        %v1539 = vpop.permute.xlu0 %1538
        %1541 = vset.pattern.permute.xlu0 7
        %1542 = vperm.xlu0 %1541, %v345
        %v1543 = vpop.permute.xlu0 %1542
        %1545 = vset.pattern.permute.xlu0 7
        %1546 = vperm.xlu0 %1545, %v346
        %v1547 = vpop.permute.xlu0 %1546
        %1549 = vset.pattern.permute.xlu0 7
        %1550 = vperm.xlu0 %1549, %v347
        %v1551 = vpop.permute.xlu0 %1550
        %1553 = vset.pattern.permute.xlu0 7
        %1554 = vperm.xlu0 %1553, %v348
        %v1555 = vpop.permute.xlu0 %1554
        %1557 = vset.pattern.permute.xlu0 7
        %1558 = vperm.xlu0 %1557, %v349
        %v1559 = vpop.permute.xlu0 %1558
        %v1561 = vmul.f32 %v1499, %v680
        %v1562 = vmul.f32 %v1503, %v680
        %v1563 = vmul.f32 %v1507, %v680
        %v1564 = vmul.f32 %v1511, %v680
        %v1565 = vmul.f32 %v1515, %v680
        %v1566 = vmul.f32 %v1519, %v680
        %v1567 = vmul.f32 %v1523, %v680
        %v1568 = vmul.f32 %v1527, %v680
        %v1569 = vmul.f32 %v1531, %v680
        %v1570 = vmul.f32 %v1535, %v680
        %v1571 = vmul.f32 %v1539, %v680
        %v1572 = vmul.f32 %v1543, %v680
        %v1573 = vmul.f32 %v1547, %v680
        %v1574 = vmul.f32 %v1551, %v680
        %v1575 = vmul.f32 %v1555, %v680
        %v1576 = vmul.f32 %v1559, %v680
        %v1577 = vadd.f32 %v1481, %v1561
        %v1578 = vadd.f32 %v1482, %v1562
        %v1579 = vadd.f32 %v1483, %v1563
        %v1580 = vadd.f32 %v1484, %v1564
        %v1581 = vadd.f32 %v1485, %v1565
        %v1582 = vadd.f32 %v1486, %v1566
        %v1583 = vadd.f32 %v1487, %v1567
        %v1584 = vadd.f32 %v1488, %v1568
        %v1585 = vadd.f32 %v1489, %v1569
        %v1586 = vadd.f32 %v1490, %v1570
        %v1587 = vadd.f32 %v1491, %v1571
        %v1588 = vadd.f32 %v1492, %v1572
        %v1589 = vadd.f32 %v1493, %v1573
        %v1590 = vadd.f32 %v1494, %v1574
        %v1591 = vadd.f32 %v1495, %v1575
        %v1592 = vadd.f32 %v1496, %v1576
        %v1593 = vmax.f32 %v1577, 0.0
        %v1594 = vmax.f32 %v1578, 0.0
        %v1595 = vmax.f32 %v1579, 0.0
        %v1596 = vmax.f32 %v1580, 0.0
        %v1597 = vmax.f32 %v1581, 0.0
        %v1598 = vmax.f32 %v1582, 0.0
        %v1599 = vmax.f32 %v1583, 0.0
        %v1600 = vmax.f32 %v1584, 0.0
        %v1601 = vmax.f32 %v1585, 0.0
        %v1602 = vmax.f32 %v1586, 0.0
        %v1603 = vmax.f32 %v1587, 0.0
        %v1604 = vmax.f32 %v1588, 0.0
        %v1605 = vmax.f32 %v1589, 0.0
        %v1606 = vmax.f32 %v1590, 0.0
        %v1607 = vmax.f32 %v1591, 0.0
        %v1608 = vmax.f32 %v1592, 0.0
        %v1609 = vmul.f32 %v1323, %v474
        %v1610 = vmul.f32 %v1327, %v474
        %v1611 = vmul.f32 %v1331, %v474
        %v1612 = vmul.f32 %v1335, %v474
        %v1613 = vmul.f32 %v1339, %v474
        %v1614 = vmul.f32 %v1343, %v474
        %v1615 = vmul.f32 %v1347, %v474
        %v1616 = vmul.f32 %v1351, %v474
        %v1617 = vmul.f32 %v1355, %v474
        %v1618 = vmul.f32 %v1359, %v474
        %v1619 = vmul.f32 %v1363, %v474
        %v1620 = vmul.f32 %v1367, %v474
        %v1621 = vmul.f32 %v1371, %v474
        %v1622 = vmul.f32 %v1375, %v474
        %v1623 = vmul.f32 %v1379, %v474
        %v1624 = vmul.f32 %v1383, %v474
        %v1625 = vadd.f32 %v1609, %v495
        %v1626 = vadd.f32 %v1610, %v495
        %v1627 = vadd.f32 %v1611, %v495
        %v1628 = vadd.f32 %v1612, %v495
        %v1629 = vadd.f32 %v1613, %v495
        %v1630 = vadd.f32 %v1614, %v495
        %v1631 = vadd.f32 %v1615, %v495
        %v1632 = vadd.f32 %v1616, %v495
        %v1633 = vadd.f32 %v1617, %v495
        %v1634 = vadd.f32 %v1618, %v495
        %v1635 = vadd.f32 %v1619, %v495
        %v1636 = vadd.f32 %v1620, %v495
        %v1637 = vadd.f32 %v1621, %v495
        %v1638 = vadd.f32 %v1622, %v495
        %v1639 = vadd.f32 %v1623, %v495
        %v1640 = vadd.f32 %v1624, %v495
        %v1641 = vmul.f32 %v1499, %v580
        %v1642 = vmul.f32 %v1503, %v580
        %v1643 = vmul.f32 %v1507, %v580
        %v1644 = vmul.f32 %v1511, %v580
        %v1645 = vmul.f32 %v1515, %v580
        %v1646 = vmul.f32 %v1519, %v580
        %v1647 = vmul.f32 %v1523, %v580
        %v1648 = vmul.f32 %v1527, %v580
        %v1649 = vmul.f32 %v1531, %v580
        %v1650 = vmul.f32 %v1535, %v580
        %v1651 = vmul.f32 %v1539, %v580
        %v1652 = vmul.f32 %v1543, %v580
        %v1653 = vmul.f32 %v1547, %v580
        %v1654 = vmul.f32 %v1551, %v580
        %v1655 = vmul.f32 %v1555, %v580
        %v1656 = vmul.f32 %v1559, %v580
        %v1657 = vadd.f32 %v1625, %v1641
        %v1658 = vadd.f32 %v1626, %v1642
        %v1659 = vadd.f32 %v1627, %v1643
        %v1660 = vadd.f32 %v1628, %v1644
        %v1661 = vadd.f32 %v1629, %v1645
        %v1662 = vadd.f32 %v1630, %v1646
        %v1663 = vadd.f32 %v1631, %v1647
        %v1664 = vadd.f32 %v1632, %v1648
        %v1665 = vadd.f32 %v1633, %v1649
        %v1666 = vadd.f32 %v1634, %v1650
        %v1667 = vadd.f32 %v1635, %v1651
        %v1668 = vadd.f32 %v1636, %v1652
        %v1669 = vadd.f32 %v1637, %v1653
        %v1670 = vadd.f32 %v1638, %v1654
        %v1671 = vadd.f32 %v1639, %v1655
        %v1672 = vadd.f32 %v1640, %v1656
        %1673 = vset.pattern.permute.xlu0 8
        %1674 = vperm.xlu0 %1673, %v334
        %v1675 = vpop.permute.xlu0 %1674
        %1677 = vset.pattern.permute.xlu0 8
        %1678 = vperm.xlu0 %1677, %v335
        %v1679 = vpop.permute.xlu0 %1678
        %1681 = vset.pattern.permute.xlu0 8
        %1682 = vperm.xlu0 %1681, %v336
        %v1683 = vpop.permute.xlu0 %1682
        %1685 = vset.pattern.permute.xlu0 8
        %1686 = vperm.xlu0 %1685, %v337
        %v1687 = vpop.permute.xlu0 %1686
        %1689 = vset.pattern.permute.xlu0 8
        %1690 = vperm.xlu0 %1689, %v338
        %v1691 = vpop.permute.xlu0 %1690
        %1693 = vset.pattern.permute.xlu0 8
        %1694 = vperm.xlu0 %1693, %v339
        %v1695 = vpop.permute.xlu0 %1694
        %1697 = vset.pattern.permute.xlu0 8
        %1698 = vperm.xlu0 %1697, %v340
        %v1699 = vpop.permute.xlu0 %1698
        %1701 = vset.pattern.permute.xlu0 8
        %1702 = vperm.xlu0 %1701, %v341
        %v1703 = vpop.permute.xlu0 %1702
        %1705 = vset.pattern.permute.xlu0 8
        %1706 = vperm.xlu0 %1705, %v342
        %v1707 = vpop.permute.xlu0 %1706
        %1709 = vset.pattern.permute.xlu0 8
        %1710 = vperm.xlu0 %1709, %v343
        %v1711 = vpop.permute.xlu0 %1710
        %1713 = vset.pattern.permute.xlu0 8
        %1714 = vperm.xlu0 %1713, %v344
        %v1715 = vpop.permute.xlu0 %1714
        %1717 = vset.pattern.permute.xlu0 8
        %1718 = vperm.xlu0 %1717, %v345
        %v1719 = vpop.permute.xlu0 %1718
        %1721 = vset.pattern.permute.xlu0 8
        %1722 = vperm.xlu0 %1721, %v346
        %v1723 = vpop.permute.xlu0 %1722
        %1725 = vset.pattern.permute.xlu0 8
        %1726 = vperm.xlu0 %1725, %v347
        %v1727 = vpop.permute.xlu0 %1726
        %1729 = vset.pattern.permute.xlu0 8
        %1730 = vperm.xlu0 %1729, %v348
        %v1731 = vpop.permute.xlu0 %1730
        %1733 = vset.pattern.permute.xlu0 8
        %1734 = vperm.xlu0 %1733, %v349
        %v1735 = vpop.permute.xlu0 %1734
        %v1737 = vmul.f32 %v1675, %v680
        %v1738 = vmul.f32 %v1679, %v680
        %v1739 = vmul.f32 %v1683, %v680
        %v1740 = vmul.f32 %v1687, %v680
        %v1741 = vmul.f32 %v1691, %v680
        %v1742 = vmul.f32 %v1695, %v680
        %v1743 = vmul.f32 %v1699, %v680
        %v1744 = vmul.f32 %v1703, %v680
        %v1745 = vmul.f32 %v1707, %v680
        %v1746 = vmul.f32 %v1711, %v680
        %v1747 = vmul.f32 %v1715, %v680
        %v1748 = vmul.f32 %v1719, %v680
        %v1749 = vmul.f32 %v1723, %v680
        %v1750 = vmul.f32 %v1727, %v680
        %v1751 = vmul.f32 %v1731, %v680
        %v1752 = vmul.f32 %v1735, %v680
        %v1753 = vadd.f32 %v1657, %v1737
        %v1754 = vadd.f32 %v1658, %v1738
        %v1755 = vadd.f32 %v1659, %v1739
        %v1756 = vadd.f32 %v1660, %v1740
        %v1757 = vadd.f32 %v1661, %v1741
        %v1758 = vadd.f32 %v1662, %v1742
        %v1759 = vadd.f32 %v1663, %v1743
        %v1760 = vadd.f32 %v1664, %v1744
        %v1761 = vadd.f32 %v1665, %v1745
        %v1762 = vadd.f32 %v1666, %v1746
        %v1763 = vadd.f32 %v1667, %v1747
        %v1764 = vadd.f32 %v1668, %v1748
        %v1765 = vadd.f32 %v1669, %v1749
        %v1766 = vadd.f32 %v1670, %v1750
        %v1767 = vadd.f32 %v1671, %v1751
        %v1768 = vadd.f32 %v1672, %v1752
        %v1769 = vmax.f32 %v1753, 0.0
        %v1770 = vmax.f32 %v1754, 0.0
        %v1771 = vmax.f32 %v1755, 0.0
        %v1772 = vmax.f32 %v1756, 0.0
        %v1773 = vmax.f32 %v1757, 0.0
        %v1774 = vmax.f32 %v1758, 0.0
        %v1775 = vmax.f32 %v1759, 0.0
        %v1776 = vmax.f32 %v1760, 0.0
        %v1777 = vmax.f32 %v1761, 0.0
        %v1778 = vmax.f32 %v1762, 0.0
        %v1779 = vmax.f32 %v1763, 0.0
        %v1780 = vmax.f32 %v1764, 0.0
        %v1781 = vmax.f32 %v1765, 0.0
        %v1782 = vmax.f32 %v1766, 0.0
        %v1783 = vmax.f32 %v1767, 0.0
        %v1784 = vmax.f32 %v1768, 0.0
        %v1785 = vmul.f32 %v1499, %v474
        %v1786 = vmul.f32 %v1503, %v474
        %v1787 = vmul.f32 %v1507, %v474
        %v1788 = vmul.f32 %v1511, %v474
        %v1789 = vmul.f32 %v1515, %v474
        %v1790 = vmul.f32 %v1519, %v474
        %v1791 = vmul.f32 %v1523, %v474
        %v1792 = vmul.f32 %v1527, %v474
        %v1793 = vmul.f32 %v1531, %v474
        %v1794 = vmul.f32 %v1535, %v474
        %v1795 = vmul.f32 %v1539, %v474
        %v1796 = vmul.f32 %v1543, %v474
        %v1797 = vmul.f32 %v1547, %v474
        %v1798 = vmul.f32 %v1551, %v474
        %v1799 = vmul.f32 %v1555, %v474
        %v1800 = vmul.f32 %v1559, %v474
        %v1801 = vadd.f32 %v1785, %v495
        %v1802 = vadd.f32 %v1786, %v495
        %v1803 = vadd.f32 %v1787, %v495
        %v1804 = vadd.f32 %v1788, %v495
        %v1805 = vadd.f32 %v1789, %v495
        %v1806 = vadd.f32 %v1790, %v495
        %v1807 = vadd.f32 %v1791, %v495
        %v1808 = vadd.f32 %v1792, %v495
        %v1809 = vadd.f32 %v1793, %v495
        %v1810 = vadd.f32 %v1794, %v495
        %v1811 = vadd.f32 %v1795, %v495
        %v1812 = vadd.f32 %v1796, %v495
        %v1813 = vadd.f32 %v1797, %v495
        %v1814 = vadd.f32 %v1798, %v495
        %v1815 = vadd.f32 %v1799, %v495
        %v1816 = vadd.f32 %v1800, %v495
        %v1817 = vmul.f32 %v1675, %v580
        %v1818 = vmul.f32 %v1679, %v580
        %v1819 = vmul.f32 %v1683, %v580
        %v1820 = vmul.f32 %v1687, %v580
        %v1821 = vmul.f32 %v1691, %v580
        %v1822 = vmul.f32 %v1695, %v580
        %v1823 = vmul.f32 %v1699, %v580
        %v1824 = vmul.f32 %v1703, %v580
        %v1825 = vmul.f32 %v1707, %v580
        %v1826 = vmul.f32 %v1711, %v580
        %v1827 = vmul.f32 %v1715, %v580
        %v1828 = vmul.f32 %v1719, %v580
        %v1829 = vmul.f32 %v1723, %v580
        %v1830 = vmul.f32 %v1727, %v580
        %v1831 = vmul.f32 %v1731, %v580
        %v1832 = vmul.f32 %v1735, %v580
        %v1833 = vadd.f32 %v1801, %v1817
        %v1834 = vadd.f32 %v1802, %v1818
        %v1835 = vadd.f32 %v1803, %v1819
        %v1836 = vadd.f32 %v1804, %v1820
        %v1837 = vadd.f32 %v1805, %v1821
        %v1838 = vadd.f32 %v1806, %v1822
        %v1839 = vadd.f32 %v1807, %v1823
        %v1840 = vadd.f32 %v1808, %v1824
        %v1841 = vadd.f32 %v1809, %v1825
        %v1842 = vadd.f32 %v1810, %v1826
        %v1843 = vadd.f32 %v1811, %v1827
        %v1844 = vadd.f32 %v1812, %v1828
        %v1845 = vadd.f32 %v1813, %v1829
        %v1846 = vadd.f32 %v1814, %v1830
        %v1847 = vadd.f32 %v1815, %v1831
        %v1848 = vadd.f32 %v1816, %v1832
        %1849 = vset.pattern.permute.xlu0 9
        %1850 = vperm.xlu0 %1849, %v334
        %v1851 = vpop.permute.xlu0 %1850
        %1853 = vset.pattern.permute.xlu0 9
        %1854 = vperm.xlu0 %1853, %v335
        %v1855 = vpop.permute.xlu0 %1854
        %1857 = vset.pattern.permute.xlu0 9
        %1858 = vperm.xlu0 %1857, %v336
        %v1859 = vpop.permute.xlu0 %1858
        %1861 = vset.pattern.permute.xlu0 9
        %1862 = vperm.xlu0 %1861, %v337
        %v1863 = vpop.permute.xlu0 %1862
        %1865 = vset.pattern.permute.xlu0 9
        %1866 = vperm.xlu0 %1865, %v338
        %v1867 = vpop.permute.xlu0 %1866
        %1869 = vset.pattern.permute.xlu0 9
        %1870 = vperm.xlu0 %1869, %v339
        %v1871 = vpop.permute.xlu0 %1870
        %1873 = vset.pattern.permute.xlu0 9
        %1874 = vperm.xlu0 %1873, %v340
        %v1875 = vpop.permute.xlu0 %1874
        %1877 = vset.pattern.permute.xlu0 9
        %1878 = vperm.xlu0 %1877, %v341
        %v1879 = vpop.permute.xlu0 %1878
        %1881 = vset.pattern.permute.xlu0 9
        %1882 = vperm.xlu0 %1881, %v342
        %v1883 = vpop.permute.xlu0 %1882
        %1885 = vset.pattern.permute.xlu0 9
        %1886 = vperm.xlu0 %1885, %v343
        %v1887 = vpop.permute.xlu0 %1886
        %1889 = vset.pattern.permute.xlu0 9
        %1890 = vperm.xlu0 %1889, %v344
        %v1891 = vpop.permute.xlu0 %1890
        %1893 = vset.pattern.permute.xlu0 9
        %1894 = vperm.xlu0 %1893, %v345
        %v1895 = vpop.permute.xlu0 %1894
        %1897 = vset.pattern.permute.xlu0 9
        %1898 = vperm.xlu0 %1897, %v346
        %v1899 = vpop.permute.xlu0 %1898
        %1901 = vset.pattern.permute.xlu0 9
        %1902 = vperm.xlu0 %1901, %v347
        %v1903 = vpop.permute.xlu0 %1902
        %1905 = vset.pattern.permute.xlu0 9
        %1906 = vperm.xlu0 %1905, %v348
        %v1907 = vpop.permute.xlu0 %1906
        %1909 = vset.pattern.permute.xlu0 9
        %1910 = vperm.xlu0 %1909, %v349
        %v1911 = vpop.permute.xlu0 %1910
        %v1913 = vmul.f32 %v1851, %v680
        %v1914 = vmul.f32 %v1855, %v680
        %v1915 = vmul.f32 %v1859, %v680
        %v1916 = vmul.f32 %v1863, %v680
        %v1917 = vmul.f32 %v1867, %v680
        %v1918 = vmul.f32 %v1871, %v680
        %v1919 = vmul.f32 %v1875, %v680
        %v1920 = vmul.f32 %v1879, %v680
        %v1921 = vmul.f32 %v1883, %v680
        %v1922 = vmul.f32 %v1887, %v680
        %v1923 = vmul.f32 %v1891, %v680
        %v1924 = vmul.f32 %v1895, %v680
        %v1925 = vmul.f32 %v1899, %v680
        %v1926 = vmul.f32 %v1903, %v680
        %v1927 = vmul.f32 %v1907, %v680
        %v1928 = vmul.f32 %v1911, %v680
        %v1929 = vadd.f32 %v1833, %v1913
        %v1930 = vadd.f32 %v1834, %v1914
        %v1931 = vadd.f32 %v1835, %v1915
        %v1932 = vadd.f32 %v1836, %v1916
        %v1933 = vadd.f32 %v1837, %v1917
        %v1934 = vadd.f32 %v1838, %v1918
        %v1935 = vadd.f32 %v1839, %v1919
        %v1936 = vadd.f32 %v1840, %v1920
        %v1937 = vadd.f32 %v1841, %v1921
        %v1938 = vadd.f32 %v1842, %v1922
        %v1939 = vadd.f32 %v1843, %v1923
        %v1940 = vadd.f32 %v1844, %v1924
        %v1941 = vadd.f32 %v1845, %v1925
        %v1942 = vadd.f32 %v1846, %v1926
        %v1943 = vadd.f32 %v1847, %v1927
        %v1944 = vadd.f32 %v1848, %v1928
        %v1945 = vmax.f32 %v1929, 0.0
        %v1946 = vmax.f32 %v1930, 0.0
        %v1947 = vmax.f32 %v1931, 0.0
        %v1948 = vmax.f32 %v1932, 0.0
        %v1949 = vmax.f32 %v1933, 0.0
        %v1950 = vmax.f32 %v1934, 0.0
        %v1951 = vmax.f32 %v1935, 0.0
        %v1952 = vmax.f32 %v1936, 0.0
        %v1953 = vmax.f32 %v1937, 0.0
        %v1954 = vmax.f32 %v1938, 0.0
        %v1955 = vmax.f32 %v1939, 0.0
        %v1956 = vmax.f32 %v1940, 0.0
        %v1957 = vmax.f32 %v1941, 0.0
        %v1958 = vmax.f32 %v1942, 0.0
        %v1959 = vmax.f32 %v1943, 0.0
        %v1960 = vmax.f32 %v1944, 0.0
        %v1961 = vmax.f32 %v713, %v889
        %v1962 = vmax.f32 %v714, %v890
        %v1963 = vmax.f32 %v715, %v891
        %v1964 = vmax.f32 %v716, %v892
        %v1965 = vmax.f32 %v717, %v893
        %v1966 = vmax.f32 %v718, %v894
        %v1967 = vmax.f32 %v719, %v895
        %v1968 = vmax.f32 %v720, %v896
        %v1969 = vmax.f32 %v721, %v897
        %v1970 = vmax.f32 %v722, %v898
        %v1971 = vmax.f32 %v723, %v899
        %v1972 = vmax.f32 %v724, %v900
        %v1973 = vmax.f32 %v725, %v901
        %v1974 = vmax.f32 %v726, %v902
        %v1975 = vmax.f32 %v727, %v903
        %v1976 = vmax.f32 %v728, %v904
        %v1977 = vmax.f32 %v1065, %v1241
        %v1978 = vmax.f32 %v1066, %v1242
        %v1979 = vmax.f32 %v1067, %v1243
        %v1980 = vmax.f32 %v1068, %v1244
        %v1981 = vmax.f32 %v1069, %v1245
        %v1982 = vmax.f32 %v1070, %v1246
        %v1983 = vmax.f32 %v1071, %v1247
        %v1984 = vmax.f32 %v1072, %v1248
        %v1985 = vmax.f32 %v1073, %v1249
        %v1986 = vmax.f32 %v1074, %v1250
        %v1987 = vmax.f32 %v1075, %v1251
        %v1988 = vmax.f32 %v1076, %v1252
        %v1989 = vmax.f32 %v1077, %v1253
        %v1990 = vmax.f32 %v1078, %v1254
        %v1991 = vmax.f32 %v1079, %v1255
        %v1992 = vmax.f32 %v1080, %v1256
        %v1993 = vmax.f32 %v1417, %v1593
        %v1994 = vmax.f32 %v1418, %v1594
        %v1995 = vmax.f32 %v1419, %v1595
        %v1996 = vmax.f32 %v1420, %v1596
        %v1997 = vmax.f32 %v1421, %v1597
        %v1998 = vmax.f32 %v1422, %v1598
        %v1999 = vmax.f32 %v1423, %v1599
        %v2000 = vmax.f32 %v1424, %v1600
        %v2001 = vmax.f32 %v1425, %v1601
        %v2002 = vmax.f32 %v1426, %v1602
        %v2003 = vmax.f32 %v1427, %v1603
        %v2004 = vmax.f32 %v1428, %v1604
        %v2005 = vmax.f32 %v1429, %v1605
        %v2006 = vmax.f32 %v1430, %v1606
        %v2007 = vmax.f32 %v1431, %v1607
        %v2008 = vmax.f32 %v1432, %v1608
        %v2009 = vmax.f32 %v1769, %v1945
        %v2010 = vmax.f32 %v1770, %v1946
        %v2011 = vmax.f32 %v1771, %v1947
        %v2012 = vmax.f32 %v1772, %v1948
        %v2013 = vmax.f32 %v1773, %v1949
        %v2014 = vmax.f32 %v1774, %v1950
        %v2015 = vmax.f32 %v1775, %v1951
        %v2016 = vmax.f32 %v1776, %v1952
        %v2017 = vmax.f32 %v1777, %v1953
        %v2018 = vmax.f32 %v1778, %v1954
        %v2019 = vmax.f32 %v1779, %v1955
        %v2020 = vmax.f32 %v1780, %v1956
        %v2021 = vmax.f32 %v1781, %v1957
        %v2022 = vmax.f32 %v1782, %v1958
        %v2023 = vmax.f32 %v1783, %v1959
        %v2024 = vmax.f32 %v1784, %v1960
        %2041 = vrot.lane.b32.xlu0 %v1977, 32
        %v2042 = vpop.permute.xlu0 %2041
        %2043 = vrot.lane.b32.xlu0 %v1978, 32
        %v2044 = vpop.permute.xlu0 %2043
        %2045 = vrot.lane.b32.xlu0 %v1979, 32
        %v2046 = vpop.permute.xlu0 %2045
        %2047 = vrot.lane.b32.xlu0 %v1980, 32
        %v2048 = vpop.permute.xlu0 %2047
        %2049 = vrot.lane.b32.xlu0 %v1981, 32
        %v2050 = vpop.permute.xlu0 %2049
        %2051 = vrot.lane.b32.xlu0 %v1982, 32
        %v2052 = vpop.permute.xlu0 %2051
        %2053 = vrot.lane.b32.xlu0 %v1983, 32
        %v2054 = vpop.permute.xlu0 %2053
        %2055 = vrot.lane.b32.xlu0 %v1984, 32
        %v2056 = vpop.permute.xlu0 %2055
        %2057 = vrot.lane.b32.xlu0 %v1985, 32
        %v2058 = vpop.permute.xlu0 %2057
        %2059 = vrot.lane.b32.xlu0 %v1986, 32
        %v2060 = vpop.permute.xlu0 %2059
        %2061 = vrot.lane.b32.xlu0 %v1987, 32
        %v2062 = vpop.permute.xlu0 %2061
        %2063 = vrot.lane.b32.xlu0 %v1988, 32
        %v2064 = vpop.permute.xlu0 %2063
        %2065 = vrot.lane.b32.xlu0 %v1989, 32
        %v2066 = vpop.permute.xlu0 %2065
        %2067 = vrot.lane.b32.xlu0 %v1990, 32
        %v2068 = vpop.permute.xlu0 %2067
        %2069 = vrot.lane.b32.xlu0 %v1991, 32
        %v2070 = vpop.permute.xlu0 %2069
        %2071 = vrot.lane.b32.xlu0 %v1992, 32
        %v2072 = vpop.permute.xlu0 %2071
        %2105 = vrot.lane.b32.xlu0 %v1993, 64
        %v2106 = vpop.permute.xlu0 %2105
        %2107 = vrot.lane.b32.xlu0 %v1994, 64
        %v2108 = vpop.permute.xlu0 %2107
        %2109 = vrot.lane.b32.xlu0 %v1995, 64
        %v2110 = vpop.permute.xlu0 %2109
        %2111 = vrot.lane.b32.xlu0 %v1996, 64
        %v2112 = vpop.permute.xlu0 %2111
        %2113 = vrot.lane.b32.xlu0 %v1997, 64
        %v2114 = vpop.permute.xlu0 %2113
        %2115 = vrot.lane.b32.xlu0 %v1998, 64
        %v2116 = vpop.permute.xlu0 %2115
        %2117 = vrot.lane.b32.xlu0 %v1999, 64
        %v2118 = vpop.permute.xlu0 %2117
        %2119 = vrot.lane.b32.xlu0 %v2000, 64
        %v2120 = vpop.permute.xlu0 %2119
        %2121 = vrot.lane.b32.xlu0 %v2001, 64
        %v2122 = vpop.permute.xlu0 %2121
        %2123 = vrot.lane.b32.xlu0 %v2002, 64
        %v2124 = vpop.permute.xlu0 %2123
        %2125 = vrot.lane.b32.xlu0 %v2003, 64
        %v2126 = vpop.permute.xlu0 %2125
        %2127 = vrot.lane.b32.xlu0 %v2004, 64
        %v2128 = vpop.permute.xlu0 %2127
        %2129 = vrot.lane.b32.xlu0 %v2005, 64
        %v2130 = vpop.permute.xlu0 %2129
        %2131 = vrot.lane.b32.xlu0 %v2006, 64
        %v2132 = vpop.permute.xlu0 %2131
        %2133 = vrot.lane.b32.xlu0 %v2007, 64
        %v2134 = vpop.permute.xlu0 %2133
        %2135 = vrot.lane.b32.xlu0 %v2008, 64
        %v2136 = vpop.permute.xlu0 %2135
        %vm2153 = vcmask 261120
        %v2154 = vsel %vm2153, %v1961, %v2042
        %v2155 = vsel %vm2153, %v1962, %v2044
        %v2156 = vsel %vm2153, %v1963, %v2046
        %v2157 = vsel %vm2153, %v1964, %v2048
        %v2158 = vsel %vm2153, %v1965, %v2050
        %v2159 = vsel %vm2153, %v1966, %v2052
        %v2160 = vsel %vm2153, %v1967, %v2054
        %v2161 = vsel %vm2153, %v1968, %v2056
        %v2162 = vsel %vm2153, %v1969, %v2058
        %v2163 = vsel %vm2153, %v1970, %v2060
        %v2164 = vsel %vm2153, %v1971, %v2062
        %v2165 = vsel %vm2153, %v1972, %v2064
        %v2166 = vsel %vm2153, %v1973, %v2066
        %v2167 = vsel %vm2153, %v1974, %v2068
        %v2168 = vsel %vm2153, %v1975, %v2070
        %v2169 = vsel %vm2153, %v1976, %v2072
        %vm2170 = vcmask 523264
        %v2171 = vsel %vm2170, %v2154, %v2106
        %v2172 = vsel %vm2170, %v2155, %v2108
        %v2173 = vsel %vm2170, %v2156, %v2110
        %v2174 = vsel %vm2170, %v2157, %v2112
        %v2175 = vsel %vm2170, %v2158, %v2114
        %v2176 = vsel %vm2170, %v2159, %v2116
        %v2177 = vsel %vm2170, %v2160, %v2118
        %v2178 = vsel %vm2170, %v2161, %v2120
        %v2179 = vsel %vm2170, %v2162, %v2122
        %v2180 = vsel %vm2170, %v2163, %v2124
        %v2181 = vsel %vm2170, %v2164, %v2126
        %v2182 = vsel %vm2170, %v2165, %v2128
        %v2183 = vsel %vm2170, %v2166, %v2130
        %v2184 = vsel %vm2170, %v2167, %v2132
        %v2185 = vsel %vm2170, %v2168, %v2134
        %v2186 = vsel %vm2170, %v2169, %v2136
        %2187 = vrot.lane.b32.xlu0 %v1993, 32
        %v2188 = vpop.permute.xlu0 %2187
        %2189 = vrot.lane.b32.xlu0 %v1994, 32
        %v2190 = vpop.permute.xlu0 %2189
        %2191 = vrot.lane.b32.xlu0 %v1995, 32
        %v2192 = vpop.permute.xlu0 %2191
        %2193 = vrot.lane.b32.xlu0 %v1996, 32
        %v2194 = vpop.permute.xlu0 %2193
        %2195 = vrot.lane.b32.xlu0 %v1997, 32
        %v2196 = vpop.permute.xlu0 %2195
        %2197 = vrot.lane.b32.xlu0 %v1998, 32
        %v2198 = vpop.permute.xlu0 %2197
        %2199 = vrot.lane.b32.xlu0 %v1999, 32
        %v2200 = vpop.permute.xlu0 %2199
        %2201 = vrot.lane.b32.xlu0 %v2000, 32
        %v2202 = vpop.permute.xlu0 %2201
        %2203 = vrot.lane.b32.xlu0 %v2001, 32
        %v2204 = vpop.permute.xlu0 %2203
        %2205 = vrot.lane.b32.xlu0 %v2002, 32
        %v2206 = vpop.permute.xlu0 %2205
        %2207 = vrot.lane.b32.xlu0 %v2003, 32
        %v2208 = vpop.permute.xlu0 %2207
        %2209 = vrot.lane.b32.xlu0 %v2004, 32
        %v2210 = vpop.permute.xlu0 %2209
        %2211 = vrot.lane.b32.xlu0 %v2005, 32
        %v2212 = vpop.permute.xlu0 %2211
        %2213 = vrot.lane.b32.xlu0 %v2006, 32
        %v2214 = vpop.permute.xlu0 %2213
        %2215 = vrot.lane.b32.xlu0 %v2007, 32
        %v2216 = vpop.permute.xlu0 %2215
        %2217 = vrot.lane.b32.xlu0 %v2008, 32
        %v2218 = vpop.permute.xlu0 %2217
        %2251 = vrot.lane.b32.xlu0 %v2009, 64
        %v2252 = vpop.permute.xlu0 %2251
        %2253 = vrot.lane.b32.xlu0 %v2010, 64
        %v2254 = vpop.permute.xlu0 %2253
        %2255 = vrot.lane.b32.xlu0 %v2011, 64
        %v2256 = vpop.permute.xlu0 %2255
        %2257 = vrot.lane.b32.xlu0 %v2012, 64
        %v2258 = vpop.permute.xlu0 %2257
        %2259 = vrot.lane.b32.xlu0 %v2013, 64
        %v2260 = vpop.permute.xlu0 %2259
        %2261 = vrot.lane.b32.xlu0 %v2014, 64
        %v2262 = vpop.permute.xlu0 %2261
        %2263 = vrot.lane.b32.xlu0 %v2015, 64
        %v2264 = vpop.permute.xlu0 %2263
        %2265 = vrot.lane.b32.xlu0 %v2016, 64
        %v2266 = vpop.permute.xlu0 %2265
        %2267 = vrot.lane.b32.xlu0 %v2017, 64
        %v2268 = vpop.permute.xlu0 %2267
        %2269 = vrot.lane.b32.xlu0 %v2018, 64
        %v2270 = vpop.permute.xlu0 %2269
        %2271 = vrot.lane.b32.xlu0 %v2019, 64
        %v2272 = vpop.permute.xlu0 %2271
        %2273 = vrot.lane.b32.xlu0 %v2020, 64
        %v2274 = vpop.permute.xlu0 %2273
        %2275 = vrot.lane.b32.xlu0 %v2021, 64
        %v2276 = vpop.permute.xlu0 %2275
        %2277 = vrot.lane.b32.xlu0 %v2022, 64
        %v2278 = vpop.permute.xlu0 %2277
        %2279 = vrot.lane.b32.xlu0 %v2023, 64
        %v2280 = vpop.permute.xlu0 %2279
        %2281 = vrot.lane.b32.xlu0 %v2024, 64
        %v2282 = vpop.permute.xlu0 %2281
        %v2299 = vsel %vm2153, %v1977, %v2188
        %v2300 = vsel %vm2153, %v1978, %v2190
        %v2301 = vsel %vm2153, %v1979, %v2192
        %v2302 = vsel %vm2153, %v1980, %v2194
        %v2303 = vsel %vm2153, %v1981, %v2196
        %v2304 = vsel %vm2153, %v1982, %v2198
        %v2305 = vsel %vm2153, %v1983, %v2200
        %v2306 = vsel %vm2153, %v1984, %v2202
        %v2307 = vsel %vm2153, %v1985, %v2204
        %v2308 = vsel %vm2153, %v1986, %v2206
        %v2309 = vsel %vm2153, %v1987, %v2208
        %v2310 = vsel %vm2153, %v1988, %v2210
        %v2311 = vsel %vm2153, %v1989, %v2212
        %v2312 = vsel %vm2153, %v1990, %v2214
        %v2313 = vsel %vm2153, %v1991, %v2216
        %v2314 = vsel %vm2153, %v1992, %v2218
        %v2315 = vsel %vm2170, %v2299, %v2252
        %v2316 = vsel %vm2170, %v2300, %v2254
        %v2317 = vsel %vm2170, %v2301, %v2256
        %v2318 = vsel %vm2170, %v2302, %v2258
        %v2319 = vsel %vm2170, %v2303, %v2260
        %v2320 = vsel %vm2170, %v2304, %v2262
        %v2321 = vsel %vm2170, %v2305, %v2264
        %v2322 = vsel %vm2170, %v2306, %v2266
        %v2323 = vsel %vm2170, %v2307, %v2268
        %v2324 = vsel %vm2170, %v2308, %v2270
        %v2325 = vsel %vm2170, %v2309, %v2272
        %v2326 = vsel %vm2170, %v2310, %v2274
        %v2327 = vsel %vm2170, %v2311, %v2276
        %v2328 = vsel %vm2170, %v2312, %v2278
        %v2329 = vsel %vm2170, %v2313, %v2280
        %v2330 = vsel %vm2170, %v2314, %v2282
        %vm2331 = vcmask 785408
        %v2333 = vsel %vm2331, %v2171, 0
        %v2336 = vsel %vm2331, %v2172, 0
        %v2339 = vsel %vm2331, %v2173, 0
        %v2342 = vsel %vm2331, %v2174, 0
        %v2345 = vsel %vm2331, %v2175, 0
        %v2348 = vsel %vm2331, %v2176, 0
        %v2351 = vsel %vm2331, %v2177, 0
        %v2354 = vsel %vm2331, %v2178, 0
        %v2357 = vsel %vm2331, %v2179, 0
        %v2360 = vsel %vm2331, %v2180, 0
        %v2363 = vsel %vm2331, %v2181, 0
        %v2366 = vsel %vm2331, %v2182, 0
        %v2369 = vsel %vm2331, %v2183, 0
        %v2372 = vsel %vm2331, %v2184, 0
        %v2375 = vsel %vm2331, %v2185, 0
        %v2378 = vsel %vm2331, %v2186, 0
        %v2381 = vsel %vm2331, %v2315, 0
        %v2384 = vsel %vm2331, %v2316, 0
        %v2387 = vsel %vm2331, %v2317, 0
        %v2390 = vsel %vm2331, %v2318, 0
        %v2393 = vsel %vm2331, %v2319, 0
        %v2396 = vsel %vm2331, %v2320, 0
        %v2399 = vsel %vm2331, %v2321, 0
        %v2402 = vsel %vm2331, %v2322, 0
        %v2405 = vsel %vm2331, %v2323, 0
        %v2408 = vsel %vm2331, %v2324, 0
        %v2411 = vsel %vm2331, %v2325, 0
        %v2414 = vsel %vm2331, %v2326, 0
        %v2417 = vsel %vm2331, %v2327, 0
        %v2420 = vsel %vm2331, %v2328, 0
        %v2423 = vsel %vm2331, %v2329, 0
        %v2426 = vsel %vm2331, %v2330, 0
        %2428 = vmatprep.subr.mxu0 0.0
        %2429 = vmatpush1.msra.mxu0 0.0
        %2430 = vmatprep.subr.mxu0 0.0
        %2431 = vmatpush1.msra.mxu0 0.0
        %2432 = vmatprep.subr.mxu0 0.0
        %2433 = vmatpush1.msra.mxu0 0.0
        %2434 = vmatprep.subr.mxu0 0.0
        %2435 = vmatpush1.msra.mxu0 0.0
        %2436 = vmatprep.subr.mxu0 0.0
        %2437 = vmatpush1.msra.mxu0 %v363
        %2438 = vmatprep.subr.mxu0 0.0
        %2439 = vmatpush1.msra.mxu0 %v362
        %2440 = vmatprep.subr.mxu0 0.0
        %2441 = vmatpush1.msra.mxu0 %v361
        %2442 = vmatprep.subr.mxu0 0.0
        %2443 = vmatpush1.msra.mxu0 %v360
        %2444 = vmatprep.subr.mxu0 0.0
        %2445 = vmatpush1.msra.mxu0 %v359
        %2446 = vmatprep.subr.mxu0 0.0
        %2447 = vmatpush1.msra.mxu0 %v358
        %2448 = vmatprep.subr.mxu0 0.0
        %2449 = vmatpush1.msra.mxu0 %v357
        %2450 = vmatprep.subr.mxu0 0.0
        %2451 = vmatpush1.msra.mxu0 %v356
        %2452 = vmatprep.subr.mxu0 0.0
        %2453 = vmatpush1.msra.mxu0 %v355
        %2454 = vmatprep.subr.mxu0 0.0
        %2455 = vmatpush1.msra.mxu0 %v354
        %2456 = vmatprep.subr.mxu0 0.0
        %2457 = vmatpush1.msra.mxu0 %v353
        %2458 = vmatprep.subr.mxu0 0.0
        %2459 = vmatpush1.msra.mxu0 %v352
        %2460 = vmatprep.subr.mxu0 0.0
        %2461 = vmatpush2.msra.mxu0 0.0
        %2462 = vmatprep.subr.mxu0 0.0
        %2463 = vmatpush2.msra.mxu0 0.0
        %2464 = vmatprep.subr.mxu0 0.0
        %2465 = vmatpush2.msra.mxu0 0.0
        %2466 = vmatprep.subr.mxu0 0.0
        %2467 = vmatpush2.msra.mxu0 0.0
        %2468 = vmatprep.subr.mxu0 0.0
        %2469 = vmatpush2.msra.mxu0 0.0
        %2470 = vmatprep.subr.mxu0 0.0
        %2471 = vmatpush2.msra.mxu0 0.0
        %2472 = vmatprep.subr.mxu0 0.0
        %2473 = vmatpush2.msra.mxu0 0.0
        %2474 = vmatprep.subr.mxu0 0.0
        %2475 = vmatpush2.msra.mxu0 0.0
        %2476 = vmatprep.subr.mxu0 0.0
        %2477 = vmatpush2.msra.mxu0 0.0
        %2478 = vmatprep.subr.mxu0 0.0
        %2479 = vmatpush2.msra.mxu0 0.0
        %2480 = vmatprep.subr.mxu0 0.0
        %2481 = vmatpush2.msra.mxu0 0.0
        %2482 = vmatprep.subr.mxu0 0.0
        %2483 = vmatpush2.msra.mxu0 0.0
        %2484 = vmatprep.subr.mxu0 0.0
        %2485 = vmatpush2.msra.mxu0 0.0
        %2486 = vmatprep.subr.mxu0 0.0
        %2487 = vmatpush2.msra.mxu0 0.0
        %2488 = vmatprep.subr.mxu0 0.0
        %2489 = vmatpush2.msra.mxu0 0.0
        %2490 = vmatprep.subr.mxu0 0.0
        %2491 = vmatpush2.msra.mxu0 0.0
        %2492 = vmatprep.mubr.f32.mxu0 0.0
        %2493 = vmatmul.mubr.f32.gmra.mxu0 %v2333
        %v2494 = vpop.f32.mrf.mxu0
        %v2495 = vadd.f32 0.0, %v2494
        %v2496 = vpop.f32.mrf.mxu0
        %2497 = vmatprep.mubr.f32.mxu0 0.0
        %2498 = vmatmul.mubr.f32.gmra.mxu0 %v2336
        %v2499 = vpop.f32.mrf.mxu0
        %v2500 = vadd.f32 0.0, %v2499
        %v2501 = vpop.f32.mrf.mxu0
        %2502 = vmatprep.mubr.f32.mxu0 0.0
        %2503 = vmatmul.mubr.f32.gmra.mxu0 %v2339
        %v2504 = vpop.f32.mrf.mxu0
        %v2505 = vadd.f32 0.0, %v2504
        %v2506 = vpop.f32.mrf.mxu0
        %2507 = vmatprep.mubr.f32.mxu0 0.0
        %2508 = vmatmul.mubr.f32.gmra.mxu0 %v2342
        %v2509 = vpop.f32.mrf.mxu0
        %v2510 = vadd.f32 0.0, %v2509
        %v2511 = vpop.f32.mrf.mxu0
        %2512 = vmatprep.mubr.f32.mxu0 0.0
        %2513 = vmatmul.mubr.f32.gmra.mxu0 %v2345
        %v2514 = vpop.f32.mrf.mxu0
        %v2515 = vadd.f32 0.0, %v2514
        %v2516 = vpop.f32.mrf.mxu0
        %2517 = vmatprep.mubr.f32.mxu0 0.0
        %2518 = vmatmul.mubr.f32.gmra.mxu0 %v2348
        %v2519 = vpop.f32.mrf.mxu0
        %v2520 = vadd.f32 0.0, %v2519
        %v2521 = vpop.f32.mrf.mxu0
        %2522 = vmatprep.mubr.f32.mxu0 0.0
        %2523 = vmatmul.mubr.f32.gmra.mxu0 %v2351
        %v2524 = vpop.f32.mrf.mxu0
        %v2525 = vadd.f32 0.0, %v2524
        %v2526 = vpop.f32.mrf.mxu0
        %2527 = vmatprep.mubr.f32.mxu0 0.0
        %2528 = vmatmul.mubr.f32.gmra.mxu0 %v2354
        %v2529 = vpop.f32.mrf.mxu0
        %v2530 = vadd.f32 0.0, %v2529
        %v2531 = vpop.f32.mrf.mxu0
        %2532 = vmatprep.mubr.f32.mxu0 0.0
        %2533 = vmatmul.mubr.f32.gmra.mxu0 %v2357
        %v2534 = vpop.f32.mrf.mxu0
        %v2535 = vadd.f32 0.0, %v2534
        %v2536 = vpop.f32.mrf.mxu0
        %2537 = vmatprep.mubr.f32.mxu0 0.0
        %2538 = vmatmul.mubr.f32.gmra.mxu0 %v2360
        %v2539 = vpop.f32.mrf.mxu0
        %v2540 = vadd.f32 0.0, %v2539
        %v2541 = vpop.f32.mrf.mxu0
        %2542 = vmatprep.mubr.f32.mxu0 0.0
        %2543 = vmatmul.mubr.f32.gmra.mxu0 %v2363
        %v2544 = vpop.f32.mrf.mxu0
        %v2545 = vadd.f32 0.0, %v2544
        %v2546 = vpop.f32.mrf.mxu0
        %2547 = vmatprep.mubr.f32.mxu0 0.0
        %2548 = vmatmul.mubr.f32.gmra.mxu0 %v2366
        %v2549 = vpop.f32.mrf.mxu0
        %v2550 = vadd.f32 0.0, %v2549
        %v2551 = vpop.f32.mrf.mxu0
        %2552 = vmatprep.mubr.f32.mxu0 0.0
        %2553 = vmatmul.mubr.f32.gmra.mxu0 %v2369
        %v2554 = vpop.f32.mrf.mxu0
        %v2555 = vadd.f32 0.0, %v2554
        %v2556 = vpop.f32.mrf.mxu0
        %2557 = vmatprep.mubr.f32.mxu0 0.0
        %2558 = vmatmul.mubr.f32.gmra.mxu0 %v2372
        %v2559 = vpop.f32.mrf.mxu0
        %v2560 = vadd.f32 0.0, %v2559
        %v2561 = vpop.f32.mrf.mxu0
        %2562 = vmatprep.mubr.f32.mxu0 0.0
        %2563 = vmatmul.mubr.f32.gmra.mxu0 %v2375
        %v2564 = vpop.f32.mrf.mxu0
        %v2565 = vadd.f32 0.0, %v2564
        %v2566 = vpop.f32.mrf.mxu0
        %2567 = vmatprep.mubr.f32.mxu0 0.0
        %2568 = vmatmul.mubr.f32.gmra.mxu0 %v2378
        %v2569 = vpop.f32.mrf.mxu0
        %v2570 = vadd.f32 0.0, %v2569
        %v2571 = vpop.f32.mrf.mxu0
        %2572 = vmatprep.mubr.f32.mxu0 0.0
        %2573 = vmatmul.mubr.f32.gmra.mxu0 %v2381
        %v2574 = vpop.f32.mrf.mxu0
        %v2575 = vadd.f32 0.0, %v2574
        %v2576 = vpop.f32.mrf.mxu0
        %2577 = vmatprep.mubr.f32.mxu0 0.0
        %2578 = vmatmul.mubr.f32.gmra.mxu0 %v2384
        %v2579 = vpop.f32.mrf.mxu0
        %v2580 = vadd.f32 0.0, %v2579
        %v2581 = vpop.f32.mrf.mxu0
        %2582 = vmatprep.mubr.f32.mxu0 0.0
        %2583 = vmatmul.mubr.f32.gmra.mxu0 %v2387
        %v2584 = vpop.f32.mrf.mxu0
        %v2585 = vadd.f32 0.0, %v2584
        %v2586 = vpop.f32.mrf.mxu0
        %2587 = vmatprep.mubr.f32.mxu0 0.0
        %2588 = vmatmul.mubr.f32.gmra.mxu0 %v2390
        %v2589 = vpop.f32.mrf.mxu0
        %v2590 = vadd.f32 0.0, %v2589
        %v2591 = vpop.f32.mrf.mxu0
        %2592 = vmatprep.mubr.f32.mxu0 0.0
        %2593 = vmatmul.mubr.f32.gmra.mxu0 %v2393
        %v2594 = vpop.f32.mrf.mxu0
        %v2595 = vadd.f32 0.0, %v2594
        %v2596 = vpop.f32.mrf.mxu0
        %2597 = vmatprep.mubr.f32.mxu0 0.0
        %2598 = vmatmul.mubr.f32.gmra.mxu0 %v2396
        %v2599 = vpop.f32.mrf.mxu0
        %v2600 = vadd.f32 0.0, %v2599
        %v2601 = vpop.f32.mrf.mxu0
        %2602 = vmatprep.mubr.f32.mxu0 0.0
        %2603 = vmatmul.mubr.f32.gmra.mxu0 %v2399
        %v2604 = vpop.f32.mrf.mxu0
        %v2605 = vadd.f32 0.0, %v2604
        %v2606 = vpop.f32.mrf.mxu0
        %2607 = vmatprep.mubr.f32.mxu0 0.0
        %2608 = vmatmul.mubr.f32.gmra.mxu0 %v2402
        %v2609 = vpop.f32.mrf.mxu0
        %v2610 = vadd.f32 0.0, %v2609
        %v2611 = vpop.f32.mrf.mxu0
        %2612 = vmatprep.mubr.f32.mxu0 0.0
        %2613 = vmatmul.mubr.f32.gmra.mxu0 %v2405
        %v2614 = vpop.f32.mrf.mxu0
        %v2615 = vadd.f32 0.0, %v2614
        %v2616 = vpop.f32.mrf.mxu0
        %2617 = vmatprep.mubr.f32.mxu0 0.0
        %2618 = vmatmul.mubr.f32.gmra.mxu0 %v2408
        %v2619 = vpop.f32.mrf.mxu0
        %v2620 = vadd.f32 0.0, %v2619
        %v2621 = vpop.f32.mrf.mxu0
        %2622 = vmatprep.mubr.f32.mxu0 0.0
        %2623 = vmatmul.mubr.f32.gmra.mxu0 %v2411
        %v2624 = vpop.f32.mrf.mxu0
        %v2625 = vadd.f32 0.0, %v2624
        %v2626 = vpop.f32.mrf.mxu0
        %2627 = vmatprep.mubr.f32.mxu0 0.0
        %2628 = vmatmul.mubr.f32.gmra.mxu0 %v2414
        %v2629 = vpop.f32.mrf.mxu0
        %v2630 = vadd.f32 0.0, %v2629
        %v2631 = vpop.f32.mrf.mxu0
        %2632 = vmatprep.mubr.f32.mxu0 0.0
        %2633 = vmatmul.mubr.f32.gmra.mxu0 %v2417
        %v2634 = vpop.f32.mrf.mxu0
        %v2635 = vadd.f32 0.0, %v2634
        %v2636 = vpop.f32.mrf.mxu0
        %2637 = vmatprep.mubr.f32.mxu0 0.0
        %2638 = vmatmul.mubr.f32.gmra.mxu0 %v2420
        %v2639 = vpop.f32.mrf.mxu0
        %v2640 = vadd.f32 0.0, %v2639
        %v2641 = vpop.f32.mrf.mxu0
        %2642 = vmatprep.mubr.f32.mxu0 0.0
        %2643 = vmatmul.mubr.f32.gmra.mxu0 %v2423
        %v2644 = vpop.f32.mrf.mxu0
        %v2645 = vadd.f32 0.0, %v2644
        %v2646 = vpop.f32.mrf.mxu0
        %2647 = vmatprep.mubr.f32.mxu0 0.0
        %2648 = vmatmul.mubr.f32.gmra.mxu0 %v2426
        %v2649 = vpop.f32.mrf.mxu0
        %v2650 = vadd.f32 0.0, %v2649
        %v2651 = vpop.f32.mrf.mxu0
        %2652 = vdwg.mxu0
        %v2654 = vlaneseq
        %v2655 = vshrl.u32 %v2654, 7
        %v2656 = vsub.s32 0, %v2655
        %v2657 = vrot.slane %v364, %v2656
        %v2659 = vadd.f32 %v2495, %v2657
        %v2660 = vadd.f32 %v2500, %v2657
        %v2661 = vadd.f32 %v2505, %v2657
        %v2662 = vadd.f32 %v2510, %v2657
        %v2663 = vadd.f32 %v2515, %v2657
        %v2664 = vadd.f32 %v2520, %v2657
        %v2665 = vadd.f32 %v2525, %v2657
        %v2666 = vadd.f32 %v2530, %v2657
        %v2667 = vadd.f32 %v2535, %v2657
        %v2668 = vadd.f32 %v2540, %v2657
        %v2669 = vadd.f32 %v2545, %v2657
        %v2670 = vadd.f32 %v2550, %v2657
        %v2671 = vadd.f32 %v2555, %v2657
        %v2672 = vadd.f32 %v2560, %v2657
        %v2673 = vadd.f32 %v2565, %v2657
        %v2674 = vadd.f32 %v2570, %v2657
        %v2675 = vmax.f32 %v2659, 0.0
        %v2676 = vmax.f32 %v2660, 0.0
        %v2677 = vmax.f32 %v2661, 0.0
        %v2678 = vmax.f32 %v2662, 0.0
        %v2679 = vmax.f32 %v2663, 0.0
        %v2680 = vmax.f32 %v2664, 0.0
        %v2681 = vmax.f32 %v2665, 0.0
        %v2682 = vmax.f32 %v2666, 0.0
        %v2683 = vmax.f32 %v2667, 0.0
        %v2684 = vmax.f32 %v2668, 0.0
        %v2685 = vmax.f32 %v2669, 0.0
        %v2686 = vmax.f32 %v2670, 0.0
        %v2687 = vmax.f32 %v2671, 0.0
        %v2688 = vmax.f32 %v2672, 0.0
        %v2689 = vmax.f32 %v2673, 0.0
        %v2690 = vmax.f32 %v2674, 0.0
        %v2691 = vadd.f32 %v2575, %v2657
        %v2692 = vadd.f32 %v2580, %v2657
        %v2693 = vadd.f32 %v2585, %v2657
        %v2694 = vadd.f32 %v2590, %v2657
        %v2695 = vadd.f32 %v2595, %v2657
        %v2696 = vadd.f32 %v2600, %v2657
        %v2697 = vadd.f32 %v2605, %v2657
        %v2698 = vadd.f32 %v2610, %v2657
        %v2699 = vadd.f32 %v2615, %v2657
        %v2700 = vadd.f32 %v2620, %v2657
        %v2701 = vadd.f32 %v2625, %v2657
        %v2702 = vadd.f32 %v2630, %v2657
        %v2703 = vadd.f32 %v2635, %v2657
        %v2704 = vadd.f32 %v2640, %v2657
        %v2705 = vadd.f32 %v2645, %v2657
        %v2706 = vadd.f32 %v2650, %v2657
        %v2707 = vmax.f32 %v2691, 0.0
        %v2708 = vmax.f32 %v2692, 0.0
        %v2709 = vmax.f32 %v2693, 0.0
        %v2710 = vmax.f32 %v2694, 0.0
        %v2711 = vmax.f32 %v2695, 0.0
        %v2712 = vmax.f32 %v2696, 0.0
        %v2713 = vmax.f32 %v2697, 0.0
        %v2714 = vmax.f32 %v2698, 0.0
        %v2715 = vmax.f32 %v2699, 0.0
        %v2716 = vmax.f32 %v2700, 0.0
        %v2717 = vmax.f32 %v2701, 0.0
        %v2718 = vmax.f32 %v2702, 0.0
        %v2719 = vmax.f32 %v2703, 0.0
        %v2720 = vmax.f32 %v2704, 0.0
        %v2721 = vmax.f32 %v2705, 0.0
        %v2722 = vmax.f32 %v2706, 0.0
        %v2723 = vmax.f32 %v2675, %v2707
        %v2724 = vmax.f32 %v2676, %v2708
        %v2725 = vmax.f32 %v2677, %v2709
        %v2726 = vmax.f32 %v2678, %v2710
        %v2727 = vmax.f32 %v2679, %v2711
        %v2728 = vmax.f32 %v2680, %v2712
        %v2729 = vmax.f32 %v2681, %v2713
        %v2730 = vmax.f32 %v2682, %v2714
        %v2731 = vmax.f32 %v2683, %v2715
        %v2732 = vmax.f32 %v2684, %v2716
        %v2733 = vmax.f32 %v2685, %v2717
        %v2734 = vmax.f32 %v2686, %v2718
        %v2735 = vmax.f32 %v2687, %v2719
        %v2736 = vmax.f32 %v2688, %v2720
        %v2737 = vmax.f32 %v2689, %v2721
        %v2738 = vmax.f32 %v2690, %v2722
        %v2740 = vlaneseq
        %v2741 = vshrl.u32 %v2740, 7
        %v2742 = vsub.s32 0, %v2741
        %v2743 = vrot.slane %v373, %v2742
        %v2746 = vsel %vm2170, %v2723, 0
        %v2749 = vsel %vm2170, %v2724, 0
        %v2752 = vsel %vm2170, %v2725, 0
        %v2755 = vsel %vm2170, %v2726, 0
        %v2758 = vsel %vm2170, %v2727, 0
        %v2761 = vsel %vm2170, %v2728, 0
        %v2764 = vsel %vm2170, %v2729, 0
        %v2767 = vsel %vm2170, %v2730, 0
        %v2770 = vsel %vm2170, %v2731, 0
        %v2773 = vsel %vm2170, %v2732, 0
        %v2776 = vsel %vm2170, %v2733, 0
        %v2779 = vsel %vm2170, %v2734, 0
        %v2782 = vsel %vm2170, %v2735, 0
        %v2785 = vsel %vm2170, %v2736, 0
        %v2788 = vsel %vm2170, %v2737, 0
        %v2791 = vsel %vm2170, %v2738, 0
        %2793 = vmatprep.subr.mxu0 0.0
        %2794 = vmatpush1.msra.mxu0 0.0
        %2795 = vmatprep.subr.mxu0 0.0
        %2796 = vmatpush1.msra.mxu0 0.0
        %2797 = vmatprep.subr.mxu0 0.0
        %2798 = vmatpush1.msra.mxu0 0.0
        %2799 = vmatprep.subr.mxu0 0.0
        %2800 = vmatpush1.msra.mxu0 0.0
        %2801 = vmatprep.subr.mxu0 0.0
        %2802 = vmatpush1.msra.mxu0 0.0
        %2803 = vmatprep.subr.mxu0 0.0
        %2804 = vmatpush1.msra.mxu0 0.0
        %2805 = vmatprep.subr.mxu0 0.0
        %2806 = vmatpush1.msra.mxu0 0.0
        %2807 = vmatprep.subr.mxu0 0.0
        %2808 = vmatpush1.msra.mxu0 0.0
        %2809 = vmatprep.subr.mxu0 0.0
        %2810 = vmatpush1.msra.mxu0 %v372
        %2811 = vmatprep.subr.mxu0 0.0
        %2812 = vmatpush1.msra.mxu0 %v371
        %2813 = vmatprep.subr.mxu0 0.0
        %2814 = vmatpush1.msra.mxu0 %v370
        %2815 = vmatprep.subr.mxu0 0.0
        %2816 = vmatpush1.msra.mxu0 %v369
        %2817 = vmatprep.subr.mxu0 0.0
        %2818 = vmatpush1.msra.mxu0 %v368
        %2819 = vmatprep.subr.mxu0 0.0
        %2820 = vmatpush1.msra.mxu0 %v367
        %2821 = vmatprep.subr.mxu0 0.0
        %2822 = vmatpush1.msra.mxu0 %v366
        %2823 = vmatprep.subr.mxu0 0.0
        %2824 = vmatpush1.msra.mxu0 %v365
        %2825 = vmatprep.subr.mxu0 0.0
        %2826 = vmatpush2.msra.mxu0 0.0
        %2827 = vmatprep.subr.mxu0 0.0
        %2828 = vmatpush2.msra.mxu0 0.0
        %2829 = vmatprep.subr.mxu0 0.0
        %2830 = vmatpush2.msra.mxu0 0.0
        %2831 = vmatprep.subr.mxu0 0.0
        %2832 = vmatpush2.msra.mxu0 0.0
        %2833 = vmatprep.subr.mxu0 0.0
        %2834 = vmatpush2.msra.mxu0 0.0
        %2835 = vmatprep.subr.mxu0 0.0
        %2836 = vmatpush2.msra.mxu0 0.0
        %2837 = vmatprep.subr.mxu0 0.0
        %2838 = vmatpush2.msra.mxu0 0.0
        %2839 = vmatprep.subr.mxu0 0.0
        %2840 = vmatpush2.msra.mxu0 0.0
        %2841 = vmatprep.subr.mxu0 0.0
        %2842 = vmatpush2.msra.mxu0 0.0
        %2843 = vmatprep.subr.mxu0 0.0
        %2844 = vmatpush2.msra.mxu0 0.0
        %2845 = vmatprep.subr.mxu0 0.0
        %2846 = vmatpush2.msra.mxu0 0.0
        %2847 = vmatprep.subr.mxu0 0.0
        %2848 = vmatpush2.msra.mxu0 0.0
        %2849 = vmatprep.subr.mxu0 0.0
        %2850 = vmatpush2.msra.mxu0 0.0
        %2851 = vmatprep.subr.mxu0 0.0
        %2852 = vmatpush2.msra.mxu0 0.0
        %2853 = vmatprep.subr.mxu0 0.0
        %2854 = vmatpush2.msra.mxu0 0.0
        %2855 = vmatprep.subr.mxu0 0.0
        %2856 = vmatpush2.msra.mxu0 0.0
        %2857 = vmatprep.mubr.f32.mxu0 0.0
        %2858 = vmatmul.mubr.f32.gmra.mxu0 %v2746
        %v2859 = vpop.f32.mrf.mxu0
        %v2860 = vadd.f32 %v2743, %v2859
        %v2861 = vpop.f32.mrf.mxu0
        %2862 = vmatprep.mubr.f32.mxu0 0.0
        %2863 = vmatmul.mubr.f32.gmra.mxu0 %v2749
        %v2864 = vpop.f32.mrf.mxu0
        %v2865 = vadd.f32 %v2743, %v2864
        %v2866 = vpop.f32.mrf.mxu0
        %2867 = vmatprep.mubr.f32.mxu0 0.0
        %2868 = vmatmul.mubr.f32.gmra.mxu0 %v2752
        %v2869 = vpop.f32.mrf.mxu0
        %v2870 = vadd.f32 %v2743, %v2869
        %v2871 = vpop.f32.mrf.mxu0
        %2872 = vmatprep.mubr.f32.mxu0 0.0
        %2873 = vmatmul.mubr.f32.gmra.mxu0 %v2755
        %v2874 = vpop.f32.mrf.mxu0
        %v2875 = vadd.f32 %v2743, %v2874
        %v2876 = vpop.f32.mrf.mxu0
        %2877 = vmatprep.mubr.f32.mxu0 0.0
        %2878 = vmatmul.mubr.f32.gmra.mxu0 %v2758
        %v2879 = vpop.f32.mrf.mxu0
        %v2880 = vadd.f32 %v2743, %v2879
        %v2881 = vpop.f32.mrf.mxu0
        %2882 = vmatprep.mubr.f32.mxu0 0.0
        %2883 = vmatmul.mubr.f32.gmra.mxu0 %v2761
        %v2884 = vpop.f32.mrf.mxu0
        %v2885 = vadd.f32 %v2743, %v2884
        %v2886 = vpop.f32.mrf.mxu0
        %2887 = vmatprep.mubr.f32.mxu0 0.0
        %2888 = vmatmul.mubr.f32.gmra.mxu0 %v2764
        %v2889 = vpop.f32.mrf.mxu0
        %v2890 = vadd.f32 %v2743, %v2889
        %v2891 = vpop.f32.mrf.mxu0
        %2892 = vmatprep.mubr.f32.mxu0 0.0
        %2893 = vmatmul.mubr.f32.gmra.mxu0 %v2767
        %v2894 = vpop.f32.mrf.mxu0
        %v2895 = vadd.f32 %v2743, %v2894
        %v2896 = vpop.f32.mrf.mxu0
        %2897 = vmatprep.mubr.f32.mxu0 0.0
        %2898 = vmatmul.mubr.f32.gmra.mxu0 %v2770
        %v2899 = vpop.f32.mrf.mxu0
        %v2900 = vadd.f32 %v2743, %v2899
        %v2901 = vpop.f32.mrf.mxu0
        %2902 = vmatprep.mubr.f32.mxu0 0.0
        %2903 = vmatmul.mubr.f32.gmra.mxu0 %v2773
        %v2904 = vpop.f32.mrf.mxu0
        %v2905 = vadd.f32 %v2743, %v2904
        %v2906 = vpop.f32.mrf.mxu0
        %2907 = vmatprep.mubr.f32.mxu0 0.0
        %2908 = vmatmul.mubr.f32.gmra.mxu0 %v2776
        %v2909 = vpop.f32.mrf.mxu0
        %v2910 = vadd.f32 %v2743, %v2909
        %v2911 = vpop.f32.mrf.mxu0
        %2912 = vmatprep.mubr.f32.mxu0 0.0
        %2913 = vmatmul.mubr.f32.gmra.mxu0 %v2779
        %v2914 = vpop.f32.mrf.mxu0
        %v2915 = vadd.f32 %v2743, %v2914
        %v2916 = vpop.f32.mrf.mxu0
        %2917 = vmatprep.mubr.f32.mxu0 0.0
        %2918 = vmatmul.mubr.f32.gmra.mxu0 %v2782
        %v2919 = vpop.f32.mrf.mxu0
        %v2920 = vadd.f32 %v2743, %v2919
        %v2921 = vpop.f32.mrf.mxu0
        %2922 = vmatprep.mubr.f32.mxu0 0.0
        %2923 = vmatmul.mubr.f32.gmra.mxu0 %v2785
        %v2924 = vpop.f32.mrf.mxu0
        %v2925 = vadd.f32 %v2743, %v2924
        %v2926 = vpop.f32.mrf.mxu0
        %2927 = vmatprep.mubr.f32.mxu0 0.0
        %2928 = vmatmul.mubr.f32.gmra.mxu0 %v2788
        %v2929 = vpop.f32.mrf.mxu0
        %v2930 = vadd.f32 %v2743, %v2929
        %v2931 = vpop.f32.mrf.mxu0
        %2932 = vmatprep.mubr.f32.mxu0 0.0
        %2933 = vmatmul.mubr.f32.gmra.mxu0 %v2791
        %v2934 = vpop.f32.mrf.mxu0
        %v2935 = vadd.f32 %v2743, %v2934
        %v2936 = vpop.f32.mrf.mxu0
        %2937 = vdwg.mxu0
        %v2938 = vmax.f32 %v2860, 0.0
        %v2939 = vmax.f32 %v2865, 0.0
        %v2940 = vmax.f32 %v2870, 0.0
        %v2941 = vmax.f32 %v2875, 0.0
        %v2942 = vmax.f32 %v2880, 0.0
        %v2943 = vmax.f32 %v2885, 0.0
        %v2944 = vmax.f32 %v2890, 0.0
        %v2945 = vmax.f32 %v2895, 0.0
        %v2946 = vmax.f32 %v2900, 0.0
        %v2947 = vmax.f32 %v2905, 0.0
        %v2948 = vmax.f32 %v2910, 0.0
        %v2949 = vmax.f32 %v2915, 0.0
        %v2950 = vmax.f32 %v2920, 0.0
        %v2951 = vmax.f32 %v2925, 0.0
        %v2952 = vmax.f32 %v2930, 0.0
        %v2953 = vmax.f32 %v2935, 0.0
        %v2955 = vlaneseq
        %v2956 = vshrl.u32 %v2955, 7
        %v2957 = vsub.s32 0, %v2956
        %v2958 = vrot.slane %v390, %v2957
        %2960 = vmatprep.subr.mxu0 0.0
        %2961 = vmatpush1.msra.mxu0 %v389
        %2962 = vmatprep.subr.mxu0 0.0
        %2963 = vmatpush1.msra.mxu0 %v388
        %2964 = vmatprep.subr.mxu0 0.0
        %2965 = vmatpush1.msra.mxu0 %v387
        %2966 = vmatprep.subr.mxu0 0.0
        %2967 = vmatpush1.msra.mxu0 %v386
        %2968 = vmatprep.subr.mxu0 0.0
        %2969 = vmatpush1.msra.mxu0 %v385
        %2970 = vmatprep.subr.mxu0 0.0
        %2971 = vmatpush1.msra.mxu0 %v384
        %2972 = vmatprep.subr.mxu0 0.0
        %2973 = vmatpush1.msra.mxu0 %v383
        %2974 = vmatprep.subr.mxu0 0.0
        %2975 = vmatpush1.msra.mxu0 %v382
        %2976 = vmatprep.subr.mxu0 0.0
        %2977 = vmatpush1.msra.mxu0 %v381
        %2978 = vmatprep.subr.mxu0 0.0
        %2979 = vmatpush1.msra.mxu0 %v380
        %2980 = vmatprep.subr.mxu0 0.0
        %2981 = vmatpush1.msra.mxu0 %v379
        %2982 = vmatprep.subr.mxu0 0.0
        %2983 = vmatpush1.msra.mxu0 %v378
        %2984 = vmatprep.subr.mxu0 0.0
        %2985 = vmatpush1.msra.mxu0 %v377
        %2986 = vmatprep.subr.mxu0 0.0
        %2987 = vmatpush1.msra.mxu0 %v376
        %2988 = vmatprep.subr.mxu0 0.0
        %2989 = vmatpush1.msra.mxu0 %v375
        %2990 = vmatprep.subr.mxu0 0.0
        %2991 = vmatpush1.msra.mxu0 %v374
        %2992 = vmatprep.subr.mxu0 0.0
        %2993 = vmatpush2.msra.mxu0 0.0
        %2994 = vmatprep.subr.mxu0 0.0
        %2995 = vmatpush2.msra.mxu0 0.0
        %2996 = vmatprep.subr.mxu0 0.0
        %2997 = vmatpush2.msra.mxu0 0.0
        %2998 = vmatprep.subr.mxu0 0.0
        %2999 = vmatpush2.msra.mxu0 0.0
        %3000 = vmatprep.subr.mxu0 0.0
        %3001 = vmatpush2.msra.mxu0 0.0
        %3002 = vmatprep.subr.mxu0 0.0
        %3003 = vmatpush2.msra.mxu0 0.0
        %3004 = vmatprep.subr.mxu0 0.0
        %3005 = vmatpush2.msra.mxu0 0.0
        %3006 = vmatprep.subr.mxu0 0.0
        %3007 = vmatpush2.msra.mxu0 0.0
        %3008 = vmatprep.subr.mxu0 0.0
        %3009 = vmatpush2.msra.mxu0 0.0
        %3010 = vmatprep.subr.mxu0 0.0
        %3011 = vmatpush2.msra.mxu0 0.0
        %3012 = vmatprep.subr.mxu0 0.0
        %3013 = vmatpush2.msra.mxu0 0.0
        %3014 = vmatprep.subr.mxu0 0.0
        %3015 = vmatpush2.msra.mxu0 0.0
        %3016 = vmatprep.subr.mxu0 0.0
        %3017 = vmatpush2.msra.mxu0 0.0
        %3018 = vmatprep.subr.mxu0 0.0
        %3019 = vmatpush2.msra.mxu0 0.0
        %3020 = vmatprep.subr.mxu0 0.0
        %3021 = vmatpush2.msra.mxu0 0.0
        %3022 = vmatprep.subr.mxu0 0.0
        %3023 = vmatpush2.msra.mxu0 0.0
        %3024 = vmatprep.mubr.f32.mxu0 0.0
        %3025 = vmatmul.mubr.f32.gmra.mxu0 %v2938
        %v3026 = vpop.f32.mrf.mxu0
        %v3027 = vadd.f32 %v2958, %v3026
        %v3028 = vpop.f32.mrf.mxu0
        %3029 = vmatprep.mubr.f32.mxu0 0.0
        %3030 = vmatmul.mubr.f32.gmra.mxu0 %v2939
        %v3031 = vpop.f32.mrf.mxu0
        %v3032 = vadd.f32 %v2958, %v3031
        %v3033 = vpop.f32.mrf.mxu0
        %3034 = vmatprep.mubr.f32.mxu0 0.0
        %3035 = vmatmul.mubr.f32.gmra.mxu0 %v2940
        %v3036 = vpop.f32.mrf.mxu0
        %v3037 = vadd.f32 %v2958, %v3036
        %v3038 = vpop.f32.mrf.mxu0
        %3039 = vmatprep.mubr.f32.mxu0 0.0
        %3040 = vmatmul.mubr.f32.gmra.mxu0 %v2941
        %v3041 = vpop.f32.mrf.mxu0
        %v3042 = vadd.f32 %v2958, %v3041
        %v3043 = vpop.f32.mrf.mxu0
        %3044 = vmatprep.mubr.f32.mxu0 0.0
        %3045 = vmatmul.mubr.f32.gmra.mxu0 %v2942
        %v3046 = vpop.f32.mrf.mxu0
        %v3047 = vadd.f32 %v2958, %v3046
        %v3048 = vpop.f32.mrf.mxu0
        %3049 = vmatprep.mubr.f32.mxu0 0.0
        %3050 = vmatmul.mubr.f32.gmra.mxu0 %v2943
        %v3051 = vpop.f32.mrf.mxu0
        %v3052 = vadd.f32 %v2958, %v3051
        %v3053 = vpop.f32.mrf.mxu0
        %3054 = vmatprep.mubr.f32.mxu0 0.0
        %3055 = vmatmul.mubr.f32.gmra.mxu0 %v2944
        %v3056 = vpop.f32.mrf.mxu0
        %v3057 = vadd.f32 %v2958, %v3056
        %v3058 = vpop.f32.mrf.mxu0
        %3059 = vmatprep.mubr.f32.mxu0 0.0
        %3060 = vmatmul.mubr.f32.gmra.mxu0 %v2945
        %v3061 = vpop.f32.mrf.mxu0
        %v3062 = vadd.f32 %v2958, %v3061
        %v3063 = vpop.f32.mrf.mxu0
        %3064 = vmatprep.mubr.f32.mxu0 0.0
        %3065 = vmatmul.mubr.f32.gmra.mxu0 %v2946
        %v3066 = vpop.f32.mrf.mxu0
        %v3067 = vadd.f32 %v2958, %v3066
        %v3068 = vpop.f32.mrf.mxu0
        %3069 = vmatprep.mubr.f32.mxu0 0.0
        %3070 = vmatmul.mubr.f32.gmra.mxu0 %v2947
        %v3071 = vpop.f32.mrf.mxu0
        %v3072 = vadd.f32 %v2958, %v3071
        %v3073 = vpop.f32.mrf.mxu0
        %3074 = vmatprep.mubr.f32.mxu0 0.0
        %3075 = vmatmul.mubr.f32.gmra.mxu0 %v2948
        %v3076 = vpop.f32.mrf.mxu0
        %v3077 = vadd.f32 %v2958, %v3076
        %v3078 = vpop.f32.mrf.mxu0
        %3079 = vmatprep.mubr.f32.mxu0 0.0
        %3080 = vmatmul.mubr.f32.gmra.mxu0 %v2949
        %v3081 = vpop.f32.mrf.mxu0
        %v3082 = vadd.f32 %v2958, %v3081
        %v3083 = vpop.f32.mrf.mxu0
        %3084 = vmatprep.mubr.f32.mxu0 0.0
        %3085 = vmatmul.mubr.f32.gmra.mxu0 %v2950
        %v3086 = vpop.f32.mrf.mxu0
        %v3087 = vadd.f32 %v2958, %v3086
        %v3088 = vpop.f32.mrf.mxu0
        %3089 = vmatprep.mubr.f32.mxu0 0.0
        %3090 = vmatmul.mubr.f32.gmra.mxu0 %v2951
        %v3091 = vpop.f32.mrf.mxu0
        %v3092 = vadd.f32 %v2958, %v3091
        %v3093 = vpop.f32.mrf.mxu0
        %3094 = vmatprep.mubr.f32.mxu0 0.0
        %3095 = vmatmul.mubr.f32.gmra.mxu0 %v2952
        %v3096 = vpop.f32.mrf.mxu0
        %v3097 = vadd.f32 %v2958, %v3096
        %v3098 = vpop.f32.mrf.mxu0
        %3099 = vmatprep.mubr.f32.mxu0 0.0
        %3100 = vmatmul.mubr.f32.gmra.mxu0 %v2953
        %v3101 = vpop.f32.mrf.mxu0
        %v3102 = vadd.f32 %v2958, %v3101
        %v3103 = vpop.f32.mrf.mxu0
        %3104 = vdwg.mxu0
        %3105 = vmax.xlane.f32.xlu0 %v3027
        %v3106 = vpop.xlane.xlu0 %3105
        %3107 = vmax.xlane.f32.xlu0 %v3032
        %v3108 = vpop.xlane.xlu0 %3107
        %3109 = vmax.xlane.f32.xlu0 %v3037
        %v3110 = vpop.xlane.xlu0 %3109
        %3111 = vmax.xlane.f32.xlu0 %v3042
        %v3112 = vpop.xlane.xlu0 %3111
        %3113 = vmax.xlane.f32.xlu0 %v3047
        %v3114 = vpop.xlane.xlu0 %3113
        %3115 = vmax.xlane.f32.xlu0 %v3052
        %v3116 = vpop.xlane.xlu0 %3115
        %3117 = vmax.xlane.f32.xlu0 %v3057
        %v3118 = vpop.xlane.xlu0 %3117
        %3119 = vmax.xlane.f32.xlu0 %v3062
        %v3120 = vpop.xlane.xlu0 %3119
        %3121 = vmax.xlane.f32.xlu0 %v3067
        %v3122 = vpop.xlane.xlu0 %3121
        %3123 = vmax.xlane.f32.xlu0 %v3072
        %v3124 = vpop.xlane.xlu0 %3123
        %3125 = vmax.xlane.f32.xlu0 %v3077
        %v3126 = vpop.xlane.xlu0 %3125
        %3127 = vmax.xlane.f32.xlu0 %v3082
        %v3128 = vpop.xlane.xlu0 %3127
        %3129 = vmax.xlane.f32.xlu0 %v3087
        %v3130 = vpop.xlane.xlu0 %3129
        %3131 = vmax.xlane.f32.xlu0 %v3092
        %v3132 = vpop.xlane.xlu0 %3131
        %3133 = vmax.xlane.f32.xlu0 %v3097
        %v3134 = vpop.xlane.xlu0 %3133
        %3135 = vmax.xlane.f32.xlu0 %v3102
        %v3136 = vpop.xlane.xlu0 %3135
        %v3137 = vsub.f32 %v3027, %v3106
        %v3138 = vsub.f32 %v3032, %v3108
        %v3139 = vsub.f32 %v3037, %v3110
        %v3140 = vsub.f32 %v3042, %v3112
        %v3141 = vsub.f32 %v3047, %v3114
        %v3142 = vsub.f32 %v3052, %v3116
        %v3143 = vsub.f32 %v3057, %v3118
        %v3144 = vsub.f32 %v3062, %v3120
        %v3145 = vsub.f32 %v3067, %v3122
        %v3146 = vsub.f32 %v3072, %v3124
        %v3147 = vsub.f32 %v3077, %v3126
        %v3148 = vsub.f32 %v3082, %v3128
        %v3149 = vsub.f32 %v3087, %v3130
        %v3150 = vsub.f32 %v3092, %v3132
        %v3151 = vsub.f32 %v3097, %v3134
        %v3152 = vsub.f32 %v3102, %v3136
        %v3153 = vmul.f32 %v3137, 1.442695
        %v3154 = vpow.pop %v3153
        %v3155 = vmul.f32 %v3138, 1.442695
        %v3156 = vpow.pop %v3155
        %v3157 = vmul.f32 %v3139, 1.442695
        %v3158 = vpow.pop %v3157
        %v3159 = vmul.f32 %v3140, 1.442695
        %v3160 = vpow.pop %v3159
        %v3161 = vmul.f32 %v3141, 1.442695
        %v3162 = vpow.pop %v3161
        %v3163 = vmul.f32 %v3142, 1.442695
        %v3164 = vpow.pop %v3163
        %v3165 = vmul.f32 %v3143, 1.442695
        %v3166 = vpow.pop %v3165
        %v3167 = vmul.f32 %v3144, 1.442695
        %v3168 = vpow.pop %v3167
        %v3169 = vmul.f32 %v3145, 1.442695
        %v3170 = vpow.pop %v3169
        %v3171 = vmul.f32 %v3146, 1.442695
        %v3172 = vpow.pop %v3171
        %v3173 = vmul.f32 %v3147, 1.442695
        %v3174 = vpow.pop %v3173
        %v3175 = vmul.f32 %v3148, 1.442695
        %v3176 = vpow.pop %v3175
        %v3177 = vmul.f32 %v3149, 1.442695
        %v3178 = vpow.pop %v3177
        %v3179 = vmul.f32 %v3150, 1.442695
        %v3180 = vpow.pop %v3179
        %v3181 = vmul.f32 %v3151, 1.442695
        %v3182 = vpow.pop %v3181
        %v3183 = vmul.f32 %v3152, 1.442695
        %v3184 = vpow.pop %v3183
        %3185 = vadd.xlane.f32.xlu0 %v3154
        %v3186 = vpop.xlane.xlu0 %3185
        %3187 = vadd.xlane.f32.xlu0 %v3156
        %v3188 = vpop.xlane.xlu0 %3187
        %3189 = vadd.xlane.f32.xlu0 %v3158
        %v3190 = vpop.xlane.xlu0 %3189
        %3191 = vadd.xlane.f32.xlu0 %v3160
        %v3192 = vpop.xlane.xlu0 %3191
        %3193 = vadd.xlane.f32.xlu0 %v3162
        %v3194 = vpop.xlane.xlu0 %3193
        %3195 = vadd.xlane.f32.xlu0 %v3164
        %v3196 = vpop.xlane.xlu0 %3195
        %3197 = vadd.xlane.f32.xlu0 %v3166
        %v3198 = vpop.xlane.xlu0 %3197
        %3199 = vadd.xlane.f32.xlu0 %v3168
        %v3200 = vpop.xlane.xlu0 %3199
        %3201 = vadd.xlane.f32.xlu0 %v3170
        %v3202 = vpop.xlane.xlu0 %3201
        %3203 = vadd.xlane.f32.xlu0 %v3172
        %v3204 = vpop.xlane.xlu0 %3203
        %3205 = vadd.xlane.f32.xlu0 %v3174
        %v3206 = vpop.xlane.xlu0 %3205
        %3207 = vadd.xlane.f32.xlu0 %v3176
        %v3208 = vpop.xlane.xlu0 %3207
        %3209 = vadd.xlane.f32.xlu0 %v3178
        %v3210 = vpop.xlane.xlu0 %3209
        %3211 = vadd.xlane.f32.xlu0 %v3180
        %v3212 = vpop.xlane.xlu0 %3211
        %3213 = vadd.xlane.f32.xlu0 %v3182
        %v3214 = vpop.xlane.xlu0 %3213
        %3215 = vadd.xlane.f32.xlu0 %v3184
        %v3216 = vpop.xlane.xlu0 %3215
        %v3217 = vlog2.pop %v3186
        %v3218 = vmul.f32 %v3217, 0.6931472
        %v3219 = vlog2.pop %v3188
        %v3220 = vmul.f32 %v3219, 0.6931472
        %v3221 = vlog2.pop %v3190
        %v3222 = vmul.f32 %v3221, 0.6931472
        %v3223 = vlog2.pop %v3192
        %v3224 = vmul.f32 %v3223, 0.6931472
        %v3225 = vlog2.pop %v3194
        %v3226 = vmul.f32 %v3225, 0.6931472
        %v3227 = vlog2.pop %v3196
        %v3228 = vmul.f32 %v3227, 0.6931472
        %v3229 = vlog2.pop %v3198
        %v3230 = vmul.f32 %v3229, 0.6931472
        %v3231 = vlog2.pop %v3200
        %v3232 = vmul.f32 %v3231, 0.6931472
        %v3233 = vlog2.pop %v3202
        %v3234 = vmul.f32 %v3233, 0.6931472
        %v3235 = vlog2.pop %v3204
        %v3236 = vmul.f32 %v3235, 0.6931472
        %v3237 = vlog2.pop %v3206
        %v3238 = vmul.f32 %v3237, 0.6931472
        %v3239 = vlog2.pop %v3208
        %v3240 = vmul.f32 %v3239, 0.6931472
        %v3241 = vlog2.pop %v3210
        %v3242 = vmul.f32 %v3241, 0.6931472
        %v3243 = vlog2.pop %v3212
        %v3244 = vmul.f32 %v3243, 0.6931472
        %v3245 = vlog2.pop %v3214
        %v3246 = vmul.f32 %v3245, 0.6931472
        %v3247 = vlog2.pop %v3216
        %v3248 = vmul.f32 %v3247, 0.6931472
        %v3249 = vsub.f32 %v3137, %v3218
        %v3250 = vsub.f32 %v3138, %v3220
        %v3251 = vsub.f32 %v3139, %v3222
        %v3252 = vsub.f32 %v3140, %v3224
        %v3253 = vsub.f32 %v3141, %v3226
        %v3254 = vsub.f32 %v3142, %v3228
        %v3255 = vsub.f32 %v3143, %v3230
        %v3256 = vsub.f32 %v3144, %v3232
        %v3257 = vsub.f32 %v3145, %v3234
        %v3258 = vsub.f32 %v3146, %v3236
        %v3259 = vsub.f32 %v3147, %v3238
        %v3260 = vsub.f32 %v3148, %v3240
        %v3261 = vsub.f32 %v3149, %v3242
        %v3262 = vsub.f32 %v3150, %v3244
        %v3263 = vsub.f32 %v3151, %v3246
        %v3264 = vsub.f32 %v3152, %v3248
        %3265 = vst [vmem:[%s326] sm:$0xff] %v3249
        %3266 = vst [vmem:[%s326 + $0x8] sm:$0xff] %v3250
        %3267 = vst [vmem:[%s326 + $0x10] sm:$0xff] %v3251
        %3268 = vst [vmem:[%s326 + $0x18] sm:$0xff] %v3252
        %3269 = vst [vmem:[%s326 + $0x20] sm:$0xff] %v3253
        %3270 = vst [vmem:[%s326 + $0x28] sm:$0xff] %v3254
        %3271 = vst [vmem:[%s326 + $0x30] sm:$0xff] %v3255
        %3272 = vst [vmem:[%s326 + $0x38] sm:$0xff] %v3256
        %3273 = vst [vmem:[%s326 + $0x40] sm:$0xff] %v3257
        %3274 = vst [vmem:[%s326 + $0x48] sm:$0xff] %v3258
        %3275 = vst [vmem:[%s326 + $0x50] sm:$0xff] %v3259
        %3276 = vst [vmem:[%s326 + $0x58] sm:$0xff] %v3260
        %3277 = vst [vmem:[%s326 + $0x60] sm:$0xff] %v3261
        %3278 = vst [vmem:[%s326 + $0x68] sm:$0xff] %v3262
        %3279 = vst [vmem:[%s326 + $0x70] sm:$0xff] %v3263
        %3280 = vst [vmem:[%s326 + $0x78] sm:$0xff] %v3264
        %s3281 = sand.u32 %s225, 1
        %s3282 = scalar_lea.sflag [#allocation3], %s3281
        %s3283 = sand.u32 %s225, 1
        %s3284 = smul.addr %s3283, 128
        %s3285 = scalar_lea.vmem [#allocation2], %s3284
        // Predicated region
        $region57: #{tpu_custom_call.1} parent=55 // pred_check
          %p3286 = pneg %p235
        $region58: #{tpu_custom_call.1} parent=55 // pred_check_branch
          %3288 = sbr.rel (%p3286) target = $region60
        $region59: #{tpu_custom_call.1} parent=55 // pred_region
          %s3289 = smul.u32 16, %s23
          %s3291 = ssub.s32 2048, 2048
          %3292 = vsyncadd %s3282, %s3291
          %s3293 = smul.addr %s3289, 128
          %s3294 = scalar_lea.hbm %s9, %s3293
          %s3295 = sshll.u32 %s3285, 4
          %s3296 = int_to_ptr.vmem [resolvable:$true] %s3295
          %3301 = dma.vmem_to_hbm [thread:$0]  %s3296, 2048, %s3294, %s3282, 128, 128, 8
        $region60: #{tpu_custom_call.1} parent=55 // pred_fallthru
          _
      $region56: #{tpu_custom_call.1} parent=5 // pred_fallthru
        _
      %p3302 = scmp.le.s32.totalorder 2, %s18
      // Predicated region
      $region61: #{tpu_custom_call.1} parent=5 // pred_check
        %p3303 = pneg %p3302
      $region62: #{tpu_custom_call.1} parent=5 // pred_check_branch
        %3305 = sbr.rel (%p3303) target = $region64
      $region63: #{tpu_custom_call.1} parent=5 // pred_region
        %s3306 = ssub.s32 %s18, 2
        // Predicated region
        $region65: #{tpu_custom_call.1} parent=63 // pred_check
          %p3307 = pneg %p241
        $region66: #{tpu_custom_call.1} parent=63 // pred_check_branch
          %3309 = sbr.rel (%p3307) target = $region68
        $region67: #{tpu_custom_call.1} parent=63 // pred_region
          %s3310 = sand.u32 %s226, 1
          %s3311 = scalar_lea.sflag [#allocation3], %s3310
          %s3312 = sand.u32 %s226, 1
          %s3313 = smul.addr %s3312, 128
          %s3314 = scalar_lea.vmem [#allocation2], %s3313
          %3315 = dma.done %s3311, 2048
        $region68: #{tpu_custom_call.1} parent=63 // pred_fallthru
          _
      $region64: #{tpu_custom_call.1} parent=5 // pred_fallthru
        _
    $region6: #{tpu_custom_call.1} parent=1 // loop_footer
      %s22 = sadd.s32 1, %s18
    $region7: #{tpu_custom_call.1} parent=1 // loop_footer_branch
      %17 = sbr.rel target = $region3
    $region8: #{tpu_custom_call.1} parent=1 // loop_exit
      _
    %3316 = vsyncpa [#allocation3], 1
    %s3317 = scalar_lea.sflag [#allocation3], 1
    %3318 = vsyncpa %s3317, 1

</llo_original>
